<compile_context>
chip_gen: v6e
topology: v6e:2x2x1
jax: 0.10.0
libtpu: 0.0.40
codegen_flags: <defaults>
</compile_context>

<pallas_src>
import functools

import jax
import jax.numpy as jnp
from jax.experimental import pallas as pl
from jax.experimental.pallas import tpu as pltpu

LN_EPS = 1e-6
_MAX_ROW_TILE = 512        # rows per tile for the row-parallel LN+proj kernels
_ATTN_MAX_Q_TILE = 256     # cap attention query tile (v7x VMEM budget)
_VMEM_LIMIT = 32 * 1024 * 1024   # safe on v5e/v6e (128 MiB) and v7x (64 MiB)


def _round_up(x, m):
    return ((x + m - 1) // m) * m


def _row_tile(m, *, max_tile=_MAX_ROW_TILE, target_steps=4):
    """8-aligned row tile aiming for >= `target_steps` grid steps.

    Avoids single-step grids (no megacore sharding / no DMA-compute overlap on
    v7x) while capping the tile size for VMEM.
    """
    if m <= 8:
        return m                      # tiny M (e.g. Nq == 1 pooling): full extent
    t = _round_up(pl.cdiv(m, target_steps), 8)
    return max(8, min(max_tile, t))


def _exp_bf16_default():
    # bf16 EUP exists on v6e/v7x but not on v5e or older; f32 exp is the safe default.
    try:
        kind = jax.devices()[0].device_kind.lower()
    except Exception:
        return False
    return not any(v in kind for v in ("v2", "v3", "v4", "v5"))


# ------------- fused (x + pos_q) -> LayerNorm -> (x @ Wq) * scale [+ b*scale] -------------

def _ln_q_proj_kernel(x_ref, pos_ref, g_ref, b_ref, w_ref, *rest, eps, scale, has_bias):
    if has_bias:
        bias_ref, o_ref = rest
    else:
        (o_ref,) = rest
    x = x_ref[...].astype(jnp.float32) + pos_ref[...].astype(jnp.float32)
    mu = jnp.mean(x, axis=-1, keepdims=True)
    xc = x - mu
    var = jnp.mean(xc * xc, axis=-1, keepdims=True)
    y = xc * jax.lax.rsqrt(var + eps)
    y = (y * g_ref[...] + b_ref[...]) * scale            # qk scale folded pre-matmul
    acc = jnp.dot(y.astype(jnp.bfloat16), w_ref[...],    # bf16 MXU, f32 accumulate
                  preferred_element_type=jnp.float32)
    if has_bias:
        acc = acc + bias_ref[...]                        # bias is pre-scaled by caller
    o_ref[...] = acc.astype(o_ref.dtype)


def ln_q_proj_pallas(x, pos, gamma, beta, w_bf16, bias=None, *, scale=1.0,
                     eps=LN_EPS, out_dtype=jnp.bfloat16):
    M, C = x.shape
    D = w_bf16.shape[1]
    TM = _row_tile(M)
    row_spec = pl.BlockSpec((TM, C), lambda i: (i, 0))
    bcast_c = pl.BlockSpec((1, C), lambda i: (0, 0))

    ops = [x, pos,
           gamma.reshape(1, C).astype(jnp.float32),
           beta.reshape(1, C).astype(jnp.float32),
           w_bf16]
    specs = [row_spec, row_spec, bcast_c, bcast_c,
             pl.BlockSpec((C, D), lambda i: (0, 0))]
    if bias is not None:
        ops.append(bias.reshape(1, D).astype(jnp.float32))
        specs.append(pl.BlockSpec((1, D), lambda i: (0, 0)))

    kernel = functools.partial(_ln_q_proj_kernel, eps=eps, scale=scale,
                               has_bias=bias is not None)
    cost = pl.CostEstimate(
        flops=2 * M * C * D + 10 * M * C,
        transcendentals=M,
        bytes_accessed=2 * M * C * 4 + C * D * 2 + M * D * 2,
    )
    return pl.pallas_call(
        kernel,
        out_shape=jax.ShapeDtypeStruct((M, D), out_dtype),
        grid=(pl.cdiv(M, TM),),
        in_specs=specs,
        out_specs=pl.BlockSpec((TM, D), lambda i: (i, 0)),
        compiler_params=pltpu.CompilerParams(
            dimension_semantics=("parallel",), vmem_limit_bytes=_VMEM_LIMIT),
        cost_estimate=cost,
    )(*ops)


# --------- fused kv path: one read of x_kv -> two LayerNorms -> two MXU projections ---------

def _ln_kv_proj_kernel(*refs, eps, has_bias):
    it = iter(refs)
    x_ref, pos_ref = next(it), next(it)
    gk_ref, bk_ref = next(it), next(it)
    gv_ref, bv_ref = next(it), next(it)
    wk_ref, wv_ref = next(it), next(it)
    kb_ref = next(it) if has_bias else None
    vb_ref = next(it) if has_bias else None
    k_out_ref, v_out_ref = next(it), next(it)

    x = x_ref[...].astype(jnp.float32)

    def _ln(z, g_ref, b_ref):
        mu = jnp.mean(z, axis=-1, keepdims=True)
        zc = z - mu
        var = jnp.mean(zc * zc, axis=-1, keepdims=True)
        return zc * jax.lax.rsqrt(var + eps) * g_ref[...] + b_ref[...]

    yv = _ln(x, gv_ref, bv_ref)                                   # LN_v(x_kv)
    yk = _ln(x + pos_ref[...].astype(jnp.float32), gk_ref, bk_ref)  # LN_k(x_kv + pos_k)

    k_acc = jnp.dot(yk.astype(jnp.bfloat16), wk_ref[...],
                    preferred_element_type=jnp.float32)
    v_acc = jnp.dot(yv.astype(jnp.bfloat16), wv_ref[...],
                    preferred_element_type=jnp.float32)
    if has_bias:
        k_acc = k_acc + kb_ref[...]
        v_acc = v_acc + vb_ref[...]
    k_out_ref[...] = k_acc.astype(k_out_ref.dtype)
    v_out_ref[...] = v_acc.astype(v_out_ref.dtype)


def ln_kv_proj_pallas(x_kv, pos_k, gk, bk, gv, bv, wk_bf16, wv_bf16,
                      k_bias=None, v_bias=None, *, eps=LN_EPS, out_dtype=jnp.bfloat16):
    M, C = x_kv.shape
    D = wk_bf16.shape[1]
    TM = _row_tile(M)
    row_spec = pl.BlockSpec((TM, C), lambda i: (i, 0))
    bcast_c = pl.BlockSpec((1, C), lambda i: (0, 0))
    w_spec = pl.BlockSpec((C, D), lambda i: (0, 0))
    has_bias = k_bias is not None

    ops = [x_kv, pos_k,
           gk.reshape(1, C).astype(jnp.float32), bk.reshape(1, C).astype(jnp.float32),
           gv.reshape(1, C).astype(jnp.float32), bv.reshape(1, C).astype(jnp.float32),
           wk_bf16, wv_bf16]
    specs = [row_spec, row_spec, bcast_c, bcast_c, bcast_c, bcast_c, w_spec, w_spec]
    if has_bias:
        ops += [k_bias.reshape(1, D).astype(jnp.float32),
                v_bias.reshape(1, D).astype(jnp.float32)]
        specs += [pl.BlockSpec((1, D), lambda i: (0, 0))] * 2

    kernel = functools.partial(_ln_kv_proj_kernel, eps=eps, has_bias=has_bias)
    cost = pl.CostEstimate(
        flops=4 * M * C * D + 20 * M * C,
        transcendentals=2 * M,
        bytes_accessed=2 * M * C * 4 + 2 * C * D * 2 + 2 * M * D * 2,
    )
    # TODO(synk): on v7x, single-buffer the constant-index weight/affine blocks
    # (pipeline_mode=pl.Buffered(1)) once that API is pinned; skipped here for
    # portability across jax versions.
    return pl.pallas_call(
        kernel,
        out_shape=(jax.ShapeDtypeStruct((M, D), out_dtype),
                   jax.ShapeDtypeStruct((M, D), out_dtype)),
        grid=(pl.cdiv(M, TM),),
        in_specs=specs,
        out_specs=(pl.BlockSpec((TM, D), lambda i: (i, 0)),
                   pl.BlockSpec((TM, D), lambda i: (i, 0))),
        compiler_params=pltpu.CompilerParams(
            dimension_semantics=("parallel",), vmem_limit_bytes=_VMEM_LIMIT),
        cost_estimate=cost,
    )(*ops)


# ------------------- cross attention with fused output projection -------------------

def _cross_attn_proj_kernel(q_ref, k_ref, v_ref, pw_ref, pb_ref, o_ref, acc_ref, *,
                            num_heads, head_dim, exp_bf16):
    q = q_ref[...]      # (TQ, C) bf16, qk scale already applied
    k = k_ref[...]      # (Nk, C) bf16
    v = v_ref[...]      # (Nk, C) bf16
    for h in range(num_heads):                      # static unrolled head loop
        sl = slice(h * head_dim, (h + 1) * head_dim)
        # s = q_h @ k_h^T on the MXU (contraction over head_dim), f32 accumulate
        s = jax.lax.dot_general(q[:, sl], k[:, sl], (((1,), (1,)), ((), ())),
                                preferred_element_type=jnp.float32)      # (TQ, Nk)
        s = s - jnp.max(s, axis=-1, keepdims=True)
        if exp_bf16:
            p = jnp.exp(s.astype(jnp.bfloat16))     # bf16 EUP (v6e/v7x)
        else:
            p = jnp.exp(s).astype(jnp.bfloat16)     # f32 EUP (v5e has no bf16 EUP)
        l = jnp.sum(p.astype(jnp.float32), axis=-1, keepdims=True)
        oh = jnp.dot(p, v[:, sl], preferred_element_type=jnp.float32)    # (TQ, hd)
        # per-head write into the (TQ, C) VMEM scratch at its static lane offset
        acc_ref[:, sl] = oh * pl.reciprocal(l, approx=True)
    # fused output projection: bf16 MXU matmul + f32 bias, single lane-dense store
    out = jnp.dot(acc_ref[...].astype(jnp.bfloat16), pw_ref[...],
                  preferred_element_type=jnp.float32) + pb_ref[...]
    o_ref[...] = out.astype(o_ref.dtype)


def cross_attention_proj_pallas(q, k, v, proj_w_bf16, proj_b, *, num_heads,
                                out_dtype=jnp.float32, exp_bf16=None):
    # TODO(synk): for very long key/value sequences add a kv-tile grid axis with an
    # online (flash-style) softmax; here each batch's (Nk, C) k/v fits one VMEM tile.
    B, Nq, C = q.shape
    Nk = k.shape[1]
    Dout = proj_w_bf16.shape[1]
    head_dim = C // num_heads
    if exp_bf16 is None:
        exp_bf16 = _exp_bf16_default()
    TQ = _row_tile(Nq, max_tile=_ATTN_MAX_Q_TILE)

    kernel = functools.partial(_cross_attn_proj_kernel, num_heads=num_heads,
                               head_dim=head_dim, exp_bf16=exp_bf16)
    kv_spec = pl.BlockSpec((None, Nk, C), lambda b, qi: (b, 0, 0))
    cost = pl.CostEstimate(
        flops=B * (4 * Nq * Nk * C + 2 * Nq * C * Dout),
        transcendentals=B * Nq * (Nk + 1),
        bytes_accessed=B * (Nq * C * 2 + 2 * Nk * C * 2 + Nq * Dout * 4) + C * Dout * 2,
    )
    return pl.pallas_call(
        kernel,
        out_shape=jax.ShapeDtypeStruct((B, Nq, Dout), out_dtype),
        grid=(B, pl.cdiv(Nq, TQ)),
        in_specs=[pl.BlockSpec((None, TQ, C), lambda b, qi: (b, qi, 0)),
                  kv_spec, kv_spec,
                  pl.BlockSpec((C, Dout), lambda b, qi: (0, 0)),
                  pl.BlockSpec((1, Dout), lambda b, qi: (0, 0))],
        out_specs=pl.BlockSpec((None, TQ, Dout), lambda b, qi: (b, qi, 0)),
        scratch_shapes=[pltpu.VMEM((TQ, C), jnp.float32)],
        compiler_params=pltpu.CompilerParams(
            dimension_semantics=("parallel", "parallel"),
            vmem_limit_bytes=_VMEM_LIMIT),
        cost_estimate=cost,
    )(q, k, v, proj_w_bf16, proj_b.reshape(1, Dout).astype(jnp.float32))


# ------------------------------ AttentiveBlock forward ------------------------------

def attentive_block_forward(params, x_q, x_kv, pos_q, pos_k,
                            bool_masked_pos=None, rel_pos_bias=None,
                            *, num_heads, qk_scale=None):
    # bool_masked_pos / rel_pos_bias are accepted but unused, exactly like the
    # reference AttentiveBlock.forward.  Dropout / DropPath: eval-mode identities.
    del bool_masked_pos, rel_pos_bias
    B, Nq, C = x_q.shape
    Nk = x_kv.shape[1]
    head_dim = C // num_heads
    scale = qk_scale if qk_scale is not None else head_dim ** (-0.5)

    # reference computes q = (x_q @ Wq + q_b) * scale -> pre-scale the bias.
    q_bias = params.get("q_b")
    if q_bias is not None:
        q_bias = q_bias * scale

    q = ln_q_proj_pallas(x_q.reshape(B * Nq, C), pos_q.reshape(B * Nq, C),
                         params["norm_q_g"], params["norm_q_b"], params["q_w"],
                         bias=q_bias, scale=scale)
    k, v = ln_kv_proj_pallas(x_kv.reshape(B * Nk, C), pos_k.reshape(B * Nk, C),
                             params["norm_k_g"], params["norm_k_b"],
                             params["norm_v_g"], params["norm_v_b"],
                             params["k_w"], params["v_w"],
                             k_bias=params.get("k_b"), v_bias=params.get("v_b"))
    out = cross_attention_proj_pallas(q.reshape(B, Nq, C), k.reshape(B, Nk, C),
                                      v.reshape(B, Nk, C),
                                      params["proj_w"], params["proj_b"],
                                      num_heads=num_heads)
    return out


# --------------------------- pure-JAX reference (f32) ---------------------------

def attentive_block_reference(params, x_q, x_kv, pos_q, pos_k, *,
                              num_heads, qk_scale=None):
    def ln(x, g, b):
        mu = jnp.mean(x, -1, keepdims=True)
        var = jnp.mean((x - mu) ** 2, -1, keepdims=True)
        return (x - mu) * jax.lax.rsqrt(var + LN_EPS) * g + b

    def bias(name):
        p = params.get(name)
        return 0.0 if p is None else p.astype(jnp.float32)

    B, Nq, C = x_q.shape
    Nk = x_kv.shape[1]
    hd = C // num_heads
    scale = qk_scale if qk_scale is not None else hd ** (-0.5)
    xq = ln(x_q + pos_q, params["norm_q_g"], params["norm_q_b"])
    xk = ln(x_kv + pos_k, params["norm_k_g"], params["norm_k_b"])
    xv = ln(x_kv, params["norm_v_g"], params["norm_v_b"])
    Wq = params["q_w"].astype(jnp.float32)
    Wk = params["k_w"].astype(jnp.float32)
    Wv = params["v_w"].astype(jnp.float32)
    Wp = params["proj_w"].astype(jnp.float32)
    q = (xq @ Wq + bias("q_b")) * scale
    k = xk @ Wk + bias("k_b")
    v = xv @ Wv + bias("v_b")
    q = q.reshape(B, Nq, num_heads, hd).transpose(0, 2, 1, 3)
    k = k.reshape(B, Nk, num_heads, hd).transpose(0, 2, 1, 3)
    v = v.reshape(B, Nk, num_heads, hd).transpose(0, 2, 1, 3)
    attn = jax.nn.softmax(jnp.einsum("bhqd,bhkd->bhqk", q, k), axis=-1)
    o = jnp.einsum("bhqk,bhkd->bhqd", attn, v).transpose(0, 2, 1, 3).reshape(B, Nq, C)
    return o @ Wp + params["proj_b"]


# --------------------------------- parameter init ---------------------------------

def init_attentive_block_params(key, dim, num_heads, out_dim=None,
                                qkv_bias=False, std=0.2):
    del num_heads  # head count is a runtime/static arg, not a parameter shape
    out_dim = dim if out_dim is None else out_dim
    ks = jax.random.split(key, 12)

    def w(k, shape):  # weights stored in bf16 in HBM (bf16 MXU path)
        return (std * jax.random.normal(k, shape, jnp.float32)).astype(jnp.bfloat16)

    def affine(kg, kb, c):
        return (1.0 + 0.1 * jax.random.normal(kg, (c,), jnp.float32),
                0.1 * jax.random.normal(kb, (c,), jnp.float32))

    ng, nb = affine(ks[0], ks[1], dim)
    kg, kb = affine(ks[2], ks[3], dim)
    vg, vb = affine(ks[4], ks[5], dim)
    p = dict(
        norm_q_g=ng, norm_q_b=nb,
        norm_k_g=kg, norm_k_b=kb,
        norm_v_g=vg, norm_v_b=vb,
        q_w=w(ks[6], (dim, dim)),
        k_w=w(ks[7], (dim, dim)),
        v_w=w(ks[8], (dim, dim)),
        proj_w=w(ks[9], (dim, out_dim)),
        proj_b=0.1 * jax.random.normal(ks[10], (out_dim,), jnp.float32),
    )
    if qkv_bias:
        p["q_b"] = jnp.zeros((dim,), jnp.float32)
        p["k_b"] = jnp.zeros((dim,), jnp.float32)
        p["v_b"] = jnp.zeros((dim,), jnp.float32)
    return p


# ---------------------------------------- main ----------------------------------------

if __name__ == "__main__":
    key = jax.random.PRNGKey(0)
    kp, kxq, kxkv, kpq, kpk = jax.random.split(key, 5)

    # small shapes consistent with the module defaults (num_heads=8)
    B, Nq, Nkv, dim, num_heads = 2, 16, 32, 64, 8

    params = init_attentive_block_params(kp, dim, num_heads)
    x_q = jax.random.normal(kxq, (B, Nq, dim), dtype=jnp.float32)
    x_kv = jax.random.normal(kxkv, (B, Nkv, dim), dtype=jnp.float32)
    pos_q = 0.1 * jax.random.normal(kpq, (B, Nq, dim), dtype=jnp.float32)
    pos_k = 0.1 * jax.random.normal(kpk, (B, Nkv, dim), dtype=jnp.float32)

    fwd = jax.jit(functools.partial(attentive_block_forward, num_heads=num_heads))
    y = fwd(params, x_q, x_kv, pos_q, pos_k)
    jax.block_until_ready(y)

    assert y.shape == (B, Nq, dim), y.shape
    assert bool(jnp.all(jnp.isfinite(y)))

    # numerical sanity vs. a pure-JAX f32 reference (same bf16-rounded weights);
    # tolerance covers the bf16 activation casts / bf16 exp inside the Pallas kernels.
    y_ref = attentive_block_reference(params, x_q, x_kv, pos_q, pos_k,
                                      num_heads=num_heads)
    rel_err = float(jnp.linalg.norm(y - y_ref) / jnp.linalg.norm(y_ref))
    assert rel_err < 0.06, f"relative error too large: {rel_err}"

    print("KERNEL_OK")
</pallas_src>

<mosaic_0001>
module attributes {stable_mosaic.version = 11 : i64} {
  func.func @_ln_q_proj_kernel(%arg0: i32, %arg1: memref<8x64xf32, #tpu.memory_space<vmem>>, %arg2: memref<8x64xf32, #tpu.memory_space<vmem>>, %arg3: memref<1x64xf32, #tpu.memory_space<vmem>>, %arg4: memref<1x64xf32, #tpu.memory_space<vmem>>, %arg5: memref<64x64xbf16, #tpu.memory_space<vmem>>, %arg6: memref<8x64xbf16, #tpu.memory_space<vmem>>) attributes {dimension_semantics = [#tpu.dimension_semantics<parallel>], iteration_bounds = array<i64: 4>, scalar_prefetch = 0 : i64, scratch_operands = 0 : i64, tpu.core_type = #tpu.core_type<tc>, window_params = [{transform_indices = @transform_0, window_bounds = array<i64: 8, 64>}, {transform_indices = @transform_1, window_bounds = array<i64: 8, 64>}, {pipeline_mode = #tpu.pipeline_mode<synchronous>, transform_indices = @transform_2, window_bounds = array<i64: 1, 64>}, {pipeline_mode = #tpu.pipeline_mode<synchronous>, transform_indices = @transform_3, window_bounds = array<i64: 1, 64>}, {pipeline_mode = #tpu.pipeline_mode<synchronous>, transform_indices = @transform_4, window_bounds = array<i64: 64, 64>}, {transform_indices = @transform_5, window_bounds = array<i64: 8, 64>}]} {
    %c0 = arith.constant 0 : index
    %c0_0 = arith.constant 0 : index
    %0 = vector.load %arg1[%c0, %c0_0] : memref<8x64xf32, #tpu.memory_space<vmem>>, vector<8x64xf32>
    %c0_1 = arith.constant 0 : index
    %c0_2 = arith.constant 0 : index
    %1 = vector.load %arg2[%c0_1, %c0_2] : memref<8x64xf32, #tpu.memory_space<vmem>>, vector<8x64xf32>
    %2 = arith.addf %0, %1 : vector<8x64xf32>
    %cst = arith.constant dense<0.000000e+00> : vector<8xf32>
    %3 = vector.multi_reduction <add>, %2, %cst [1] : vector<8x64xf32> to vector<8xf32>
    %4 = vector.shape_cast %3 : vector<8xf32> to vector<8x1xf32>
    %cst_3 = arith.constant 6.400000e+01 : f32
    %5 = vector.broadcast %cst_3 : f32 to vector<8x1xf32>
    %6 = arith.divf %4, %5 : vector<8x1xf32>
    %7 = vector.broadcast %6 : vector<8x1xf32> to vector<8x64xf32>
    %8 = arith.subf %2, %7 : vector<8x64xf32>
    %9 = arith.mulf %8, %8 : vector<8x64xf32>
    %cst_4 = arith.constant dense<0.000000e+00> : vector<8xf32>
    %10 = vector.multi_reduction <add>, %9, %cst_4 [1] : vector<8x64xf32> to vector<8xf32>
    %11 = vector.shape_cast %10 : vector<8xf32> to vector<8x1xf32>
    %cst_5 = arith.constant 6.400000e+01 : f32
    %12 = vector.broadcast %cst_5 : f32 to vector<8x1xf32>
    %13 = arith.divf %11, %12 : vector<8x1xf32>
    %cst_6 = arith.constant 9.99999997E-7 : f32
    %14 = vector.broadcast %cst_6 : f32 to vector<8x1xf32>
    %15 = arith.addf %13, %14 : vector<8x1xf32>
    %16 = math.rsqrt %15 : vector<8x1xf32>
    %17 = vector.broadcast %16 : vector<8x1xf32> to vector<8x64xf32>
    %18 = arith.mulf %8, %17 : vector<8x64xf32>
    %c0_7 = arith.constant 0 : index
    %c0_8 = arith.constant 0 : index
    %19 = vector.load %arg3[%c0_7, %c0_8] : memref<1x64xf32, #tpu.memory_space<vmem>>, vector<1x64xf32>
    %20 = vector.broadcast %19 : vector<1x64xf32> to vector<8x64xf32>
    %21 = arith.mulf %18, %20 : vector<8x64xf32>
    %c0_9 = arith.constant 0 : index
    %c0_10 = arith.constant 0 : index
    %22 = vector.load %arg4[%c0_9, %c0_10] : memref<1x64xf32, #tpu.memory_space<vmem>>, vector<1x64xf32>
    %23 = vector.broadcast %22 : vector<1x64xf32> to vector<8x64xf32>
    %24 = arith.addf %21, %23 : vector<8x64xf32>
    %cst_11 = arith.constant 0.353553385 : f32
    %25 = vector.broadcast %cst_11 : f32 to vector<8x64xf32>
    %26 = arith.mulf %24, %25 : vector<8x64xf32>
    %27 = arith.truncf %26 : vector<8x64xf32> to vector<8x64xbf16>
    %c0_12 = arith.constant 0 : index
    %c0_13 = arith.constant 0 : index
    %28 = vector.load %arg5[%c0_12, %c0_13] : memref<64x64xbf16, #tpu.memory_space<vmem>>, vector<64x64xbf16>
    %cst_14 = arith.constant dense<0.000000e+00> : vector<8x64xf32>
    %29 = tpu.matmul %27, %28, %cst_14 {dimension_numbers = #tpu.dot_dimension_numbers<[1], [0], [0], [1], [0, 0, 1, 1], [], []>} : vector<8x64xbf16>, vector<64x64xbf16>, vector<8x64xf32> -> vector<8x64xf32>
    %30 = arith.truncf %29 : vector<8x64xf32> to vector<8x64xbf16>
    %c0_15 = arith.constant 0 : index
    %c0_16 = arith.constant 0 : index
    %31 = vector.load %arg6[%c0_15, %c0_16] : memref<8x64xbf16, #tpu.memory_space<vmem>>, vector<8x64xbf16>
    tpu.vector_store %arg6[%c0_15, %c0_16], %30 {strides = array<i32>} : memref<8x64xbf16, #tpu.memory_space<vmem>>, vector<8x64xbf16>,
    return
  }
  func.func @transform_0(%arg0: i32) -> (i32, i32) {
    %c0_i32 = arith.constant 0 : i32
    %c0_i32_0 = arith.constant 0 : i32
    return %arg0, %c0_i32 : i32, i32
  }
  func.func @transform_1(%arg0: i32) -> (i32, i32) {
    %c0_i32 = arith.constant 0 : i32
    %c0_i32_0 = arith.constant 0 : i32
    return %arg0, %c0_i32 : i32, i32
  }
  func.func @transform_2(%arg0: i32) -> (i32, i32) {
    %c0_i32 = arith.constant 0 : i32
    %c0_i32_0 = arith.constant 0 : i32
    %c0_i32_1 = arith.constant 0 : i32
    return %c0_i32, %c0_i32_0 : i32, i32
  }
  func.func @transform_3(%arg0: i32) -> (i32, i32) {
    %c0_i32 = arith.constant 0 : i32
    %c0_i32_0 = arith.constant 0 : i32
    %c0_i32_1 = arith.constant 0 : i32
    return %c0_i32, %c0_i32_0 : i32, i32
  }
  func.func @transform_4(%arg0: i32) -> (i32, i32) {
    %c0_i32 = arith.constant 0 : i32
    %c0_i32_0 = arith.constant 0 : i32
    %c0_i32_1 = arith.constant 0 : i32
    return %c0_i32, %c0_i32_0 : i32, i32
  }
  func.func @transform_5(%arg0: i32) -> (i32, i32) {
    %c0_i32 = arith.constant 0 : i32
    %c0_i32_0 = arith.constant 0 : i32
    return %arg0, %c0_i32 : i32, i32
  }
}

module attributes {stable_mosaic.version = 11 : i64} {
  func.func @_ln_kv_proj_kernel(%arg0: i32, %arg1: memref<16x64xf32, #tpu.memory_space<vmem>>, %arg2: memref<16x64xf32, #tpu.memory_space<vmem>>, %arg3: memref<1x64xf32, #tpu.memory_space<vmem>>, %arg4: memref<1x64xf32, #tpu.memory_space<vmem>>, %arg5: memref<1x64xf32, #tpu.memory_space<vmem>>, %arg6: memref<1x64xf32, #tpu.memory_space<vmem>>, %arg7: memref<64x64xbf16, #tpu.memory_space<vmem>>, %arg8: memref<64x64xbf16, #tpu.memory_space<vmem>>, %arg9: memref<16x64xbf16, #tpu.memory_space<vmem>>, %arg10: memref<16x64xbf16, #tpu.memory_space<vmem>>) attributes {dimension_semantics = [#tpu.dimension_semantics<parallel>], iteration_bounds = array<i64: 4>, scalar_prefetch = 0 : i64, scratch_operands = 0 : i64, tpu.core_type = #tpu.core_type<tc>, window_params = [{transform_indices = @transform_0, window_bounds = array<i64: 16, 64>}, {transform_indices = @transform_1, window_bounds = array<i64: 16, 64>}, {pipeline_mode = #tpu.pipeline_mode<synchronous>, transform_indices = @transform_2, window_bounds = array<i64: 1, 64>}, {pipeline_mode = #tpu.pipeline_mode<synchronous>, transform_indices = @transform_3, window_bounds = array<i64: 1, 64>}, {pipeline_mode = #tpu.pipeline_mode<synchronous>, transform_indices = @transform_4, window_bounds = array<i64: 1, 64>}, {pipeline_mode = #tpu.pipeline_mode<synchronous>, transform_indices = @transform_5, window_bounds = array<i64: 1, 64>}, {pipeline_mode = #tpu.pipeline_mode<synchronous>, transform_indices = @transform_6, window_bounds = array<i64: 64, 64>}, {pipeline_mode = #tpu.pipeline_mode<synchronous>, transform_indices = @transform_7, window_bounds = array<i64: 64, 64>}, {transform_indices = @transform_8, window_bounds = array<i64: 16, 64>}, {transform_indices = @transform_9, window_bounds = array<i64: 16, 64>}]} {
    %c0 = arith.constant 0 : index
    %c0_0 = arith.constant 0 : index
    %0 = vector.load %arg1[%c0, %c0_0] : memref<16x64xf32, #tpu.memory_space<vmem>>, vector<16x64xf32>
    %cst = arith.constant dense<0.000000e+00> : vector<16xf32>
    %1 = vector.multi_reduction <add>, %0, %cst [1] : vector<16x64xf32> to vector<16xf32>
    %2 = vector.shape_cast %1 : vector<16xf32> to vector<16x1xf32>
    %cst_1 = arith.constant 6.400000e+01 : f32
    %3 = vector.broadcast %cst_1 : f32 to vector<16x1xf32>
    %4 = arith.divf %2, %3 : vector<16x1xf32>
    %5 = vector.broadcast %4 : vector<16x1xf32> to vector<16x64xf32>
    %6 = arith.subf %0, %5 : vector<16x64xf32>
    %7 = arith.mulf %6, %6 : vector<16x64xf32>
    %cst_2 = arith.constant dense<0.000000e+00> : vector<16xf32>
    %8 = vector.multi_reduction <add>, %7, %cst_2 [1] : vector<16x64xf32> to vector<16xf32>
    %9 = vector.shape_cast %8 : vector<16xf32> to vector<16x1xf32>
    %cst_3 = arith.constant 6.400000e+01 : f32
    %10 = vector.broadcast %cst_3 : f32 to vector<16x1xf32>
    %11 = arith.divf %9, %10 : vector<16x1xf32>
    %cst_4 = arith.constant 9.99999997E-7 : f32
    %12 = vector.broadcast %cst_4 : f32 to vector<16x1xf32>
    %13 = arith.addf %11, %12 : vector<16x1xf32>
    %14 = math.rsqrt %13 : vector<16x1xf32>
    %15 = vector.broadcast %14 : vector<16x1xf32> to vector<16x64xf32>
    %16 = arith.mulf %6, %15 : vector<16x64xf32>
    %c0_5 = arith.constant 0 : index
    %c0_6 = arith.constant 0 : index
    %17 = vector.load %arg5[%c0_5, %c0_6] : memref<1x64xf32, #tpu.memory_space<vmem>>, vector<1x64xf32>
    %18 = vector.broadcast %17 : vector<1x64xf32> to vector<16x64xf32>
    %19 = arith.mulf %16, %18 : vector<16x64xf32>
    %c0_7 = arith.constant 0 : index
    %c0_8 = arith.constant 0 : index
    %20 = vector.load %arg6[%c0_7, %c0_8] : memref<1x64xf32, #tpu.memory_space<vmem>>, vector<1x64xf32>
    %21 = vector.broadcast %20 : vector<1x64xf32> to vector<16x64xf32>
    %22 = arith.addf %19, %21 : vector<16x64xf32>
    %c0_9 = arith.constant 0 : index
    %c0_10 = arith.constant 0 : index
    %23 = vector.load %arg2[%c0_9, %c0_10] : memref<16x64xf32, #tpu.memory_space<vmem>>, vector<16x64xf32>
    %24 = arith.addf %0, %23 : vector<16x64xf32>
    %cst_11 = arith.constant dense<0.000000e+00> : vector<16xf32>
    %25 = vector.multi_reduction <add>, %24, %cst_11 [1] : vector<16x64xf32> to vector<16xf32>
    %26 = vector.shape_cast %25 : vector<16xf32> to vector<16x1xf32>
    %cst_12 = arith.constant 6.400000e+01 : f32
    %27 = vector.broadcast %cst_12 : f32 to vector<16x1xf32>
    %28 = arith.divf %26, %27 : vector<16x1xf32>
    %29 = vector.broadcast %28 : vector<16x1xf32> to vector<16x64xf32>
    %30 = arith.subf %24, %29 : vector<16x64xf32>
    %31 = arith.mulf %30, %30 : vector<16x64xf32>
    %cst_13 = arith.constant dense<0.000000e+00> : vector<16xf32>
    %32 = vector.multi_reduction <add>, %31, %cst_13 [1] : vector<16x64xf32> to vector<16xf32>
    %33 = vector.shape_cast %32 : vector<16xf32> to vector<16x1xf32>
    %cst_14 = arith.constant 6.400000e+01 : f32
    %34 = vector.broadcast %cst_14 : f32 to vector<16x1xf32>
    %35 = arith.divf %33, %34 : vector<16x1xf32>
    %cst_15 = arith.constant 9.99999997E-7 : f32
    %36 = vector.broadcast %cst_15 : f32 to vector<16x1xf32>
    %37 = arith.addf %35, %36 : vector<16x1xf32>
    %38 = math.rsqrt %37 : vector<16x1xf32>
    %39 = vector.broadcast %38 : vector<16x1xf32> to vector<16x64xf32>
    %40 = arith.mulf %30, %39 : vector<16x64xf32>
    %c0_16 = arith.constant 0 : index
    %c0_17 = arith.constant 0 : index
    %41 = vector.load %arg3[%c0_16, %c0_17] : memref<1x64xf32, #tpu.memory_space<vmem>>, vector<1x64xf32>
    %42 = vector.broadcast %41 : vector<1x64xf32> to vector<16x64xf32>
    %43 = arith.mulf %40, %42 : vector<16x64xf32>
    %c0_18 = arith.constant 0 : index
    %c0_19 = arith.constant 0 : index
    %44 = vector.load %arg4[%c0_18, %c0_19] : memref<1x64xf32, #tpu.memory_space<vmem>>, vector<1x64xf32>
    %45 = vector.broadcast %44 : vector<1x64xf32> to vector<16x64xf32>
    %46 = arith.addf %43, %45 : vector<16x64xf32>
    %47 = arith.truncf %46 : vector<16x64xf32> to vector<16x64xbf16>
    %c0_20 = arith.constant 0 : index
    %c0_21 = arith.constant 0 : index
    %48 = vector.load %arg7[%c0_20, %c0_21] : memref<64x64xbf16, #tpu.memory_space<vmem>>, vector<64x64xbf16>
    %cst_22 = arith.constant dense<0.000000e+00> : vector<16x64xf32>
    %49 = tpu.matmul %47, %48, %cst_22 {dimension_numbers = #tpu.dot_dimension_numbers<[1], [0], [0], [1], [0, 0, 1, 1], [], []>} : vector<16x64xbf16>, vector<64x64xbf16>, vector<16x64xf32> -> vector<16x64xf32>
    %50 = arith.truncf %22 : vector<16x64xf32> to vector<16x64xbf16>
    %c0_23 = arith.constant 0 : index
    %c0_24 = arith.constant 0 : index
    %51 = vector.load %arg8[%c0_23, %c0_24] : memref<64x64xbf16, #tpu.memory_space<vmem>>, vector<64x64xbf16>
    %cst_25 = arith.constant dense<0.000000e+00> : vector<16x64xf32>
    %52 = tpu.matmul %50, %51, %cst_25 {dimension_numbers = #tpu.dot_dimension_numbers<[1], [0], [0], [1], [0, 0, 1, 1], [], []>} : vector<16x64xbf16>, vector<64x64xbf16>, vector<16x64xf32> -> vector<16x64xf32>
    %53 = arith.truncf %49 : vector<16x64xf32> to vector<16x64xbf16>
    %c0_26 = arith.constant 0 : index
    %c0_27 = arith.constant 0 : index
    %54 = vector.load %arg9[%c0_26, %c0_27] : memref<16x64xbf16, #tpu.memory_space<vmem>>, vector<16x64xbf16>
    tpu.vector_store %arg9[%c0_26, %c0_27], %53 {strides = array<i32>} : memref<16x64xbf16, #tpu.memory_space<vmem>>, vector<16x64xbf16>,
    %55 = arith.truncf %52 : vector<16x64xf32> to vector<16x64xbf16>
    %c0_28 = arith.constant 0 : index
    %c0_29 = arith.constant 0 : index
    %56 = vector.load %arg10[%c0_28, %c0_29] : memref<16x64xbf16, #tpu.memory_space<vmem>>, vector<16x64xbf16>
    tpu.vector_store %arg10[%c0_28, %c0_29], %55 {strides = array<i32>} : memref<16x64xbf16, #tpu.memory_space<vmem>>, vector<16x64xbf16>,
    return
  }
  func.func @transform_0(%arg0: i32) -> (i32, i32) {
    %c0_i32 = arith.constant 0 : i32
    %c0_i32_0 = arith.constant 0 : i32
    return %arg0, %c0_i32 : i32, i32
  }
  func.func @transform_1(%arg0: i32) -> (i32, i32) {
    %c0_i32 = arith.constant 0 : i32
    %c0_i32_0 = arith.constant 0 : i32
    return %arg0, %c0_i32 : i32, i32
  }
  func.func @transform_2(%arg0: i32) -> (i32, i32) {
    %c0_i32 = arith.constant 0 : i32
    %c0_i32_0 = arith.constant 0 : i32
    %c0_i32_1 = arith.constant 0 : i32
    return %c0_i32, %c0_i32_0 : i32, i32
  }
  func.func @transform_3(%arg0: i32) -> (i32, i32) {
    %c0_i32 = arith.constant 0 : i32
    %c0_i32_0 = arith.constant 0 : i32
    %c0_i32_1 = arith.constant 0 : i32
    return %c0_i32, %c0_i32_0 : i32, i32
  }
  func.func @transform_4(%arg0: i32) -> (i32, i32) {
    %c0_i32 = arith.constant 0 : i32
    %c0_i32_0 = arith.constant 0 : i32
    %c0_i32_1 = arith.constant 0 : i32
    return %c0_i32, %c0_i32_0 : i32, i32
  }
  func.func @transform_5(%arg0: i32) -> (i32, i32) {
    %c0_i32 = arith.constant 0 : i32
    %c0_i32_0 = arith.constant 0 : i32
    %c0_i32_1 = arith.constant 0 : i32
    return %c0_i32, %c0_i32_0 : i32, i32
  }
  func.func @transform_6(%arg0: i32) -> (i32, i32) {
    %c0_i32 = arith.constant 0 : i32
    %c0_i32_0 = arith.constant 0 : i32
    %c0_i32_1 = arith.constant 0 : i32
    return %c0_i32, %c0_i32_0 : i32, i32
  }
  func.func @transform_7(%arg0: i32) -> (i32, i32) {
    %c0_i32 = arith.constant 0 : i32
    %c0_i32_0 = arith.constant 0 : i32
    %c0_i32_1 = arith.constant 0 : i32
    return %c0_i32, %c0_i32_0 : i32, i32
  }
  func.func @transform_8(%arg0: i32) -> (i32, i32) {
    %c0_i32 = arith.constant 0 : i32
    %c0_i32_0 = arith.constant 0 : i32
    return %arg0, %c0_i32 : i32, i32
  }
  func.func @transform_9(%arg0: i32) -> (i32, i32) {
    %c0_i32 = arith.constant 0 : i32
    %c0_i32_0 = arith.constant 0 : i32
    return %arg0, %c0_i32 : i32, i32
  }
}

module attributes {stable_mosaic.version = 11 : i64} {
  func.func @_cross_attn_proj_kernel(%arg0: i32, %arg1: i32, %arg2: memref<1x8x64xbf16, #tpu.memory_space<vmem>>, %arg3: memref<1x32x64xbf16, #tpu.memory_space<vmem>>, %arg4: memref<1x32x64xbf16, #tpu.memory_space<vmem>>, %arg5: memref<64x64xbf16, #tpu.memory_space<vmem>>, %arg6: memref<1x64xf32, #tpu.memory_space<vmem>>, %arg7: memref<1x8x64xf32, #tpu.memory_space<vmem>>, %arg8: memref<8x64xf32, #tpu.memory_space<vmem>>) attributes {dimension_semantics = [#tpu.dimension_semantics<parallel>, #tpu.dimension_semantics<parallel>], iteration_bounds = array<i64: 2, 2>, scalar_prefetch = 0 : i64, scratch_operands = 1 : i64, tpu.core_type = #tpu.core_type<tc>, window_params = [{transform_indices = @transform_0, window_bounds = array<i64: 1, 8, 64>}, {transform_indices = @transform_1, window_bounds = array<i64: 1, 32, 64>}, {transform_indices = @transform_2, window_bounds = array<i64: 1, 32, 64>}, {pipeline_mode = #tpu.pipeline_mode<synchronous>, transform_indices = @transform_3, window_bounds = array<i64: 64, 64>}, {pipeline_mode = #tpu.pipeline_mode<synchronous>, transform_indices = @transform_4, window_bounds = array<i64: 1, 64>}, {transform_indices = @transform_5, window_bounds = array<i64: 1, 8, 64>}]} {
    %c0 = arith.constant 0 : index
    %c0_0 = arith.constant 0 : index
    %c0_1 = arith.constant 0 : index
    %0 = vector.load %arg2[%c0, %c0_0, %c0_1] : memref<1x8x64xbf16, #tpu.memory_space<vmem>>, vector<1x8x64xbf16>
    %1 = vector.shape_cast %0 : vector<1x8x64xbf16> to vector<8x64xbf16>
    %c0_2 = arith.constant 0 : index
    %c0_3 = arith.constant 0 : index
    %c0_4 = arith.constant 0 : index
    %2 = vector.load %arg3[%c0_2, %c0_3, %c0_4] : memref<1x32x64xbf16, #tpu.memory_space<vmem>>, vector<1x32x64xbf16>
    %3 = vector.shape_cast %2 : vector<1x32x64xbf16> to vector<32x64xbf16>
    %c0_5 = arith.constant 0 : index
    %c0_6 = arith.constant 0 : index
    %c0_7 = arith.constant 0 : index
    %4 = vector.load %arg4[%c0_5, %c0_6, %c0_7] : memref<1x32x64xbf16, #tpu.memory_space<vmem>>, vector<1x32x64xbf16>
    %5 = vector.shape_cast %4 : vector<1x32x64xbf16> to vector<32x64xbf16>
    %6 = vector.extract_strided_slice %1 {offsets = [0, 0], sizes = [8, 8], strides = [1, 1]} : vector<8x64xbf16> to vector<8x8xbf16>
    %7 = vector.extract_strided_slice %3 {offsets = [0, 0], sizes = [32, 8], strides = [1, 1]} : vector<32x64xbf16> to vector<32x8xbf16>
    %cst = arith.constant dense<0.000000e+00> : vector<8x32xf32>
    %8 = tpu.matmul %6, %7, %cst {dimension_numbers = #tpu.dot_dimension_numbers<[1], [1], [0], [0], [0, 0, 1, 0], [], []>} : vector<8x8xbf16>, vector<32x8xbf16>, vector<8x32xf32> -> vector<8x32xf32>
    %cst_8 = arith.constant dense<0xFF800000> : vector<8xf32>
    %9 = vector.multi_reduction <maximumf>, %8, %cst_8 [1] : vector<8x32xf32> to vector<8xf32>
    %10 = vector.shape_cast %9 : vector<8xf32> to vector<8x1xf32>
    %11 = vector.broadcast %10 : vector<8x1xf32> to vector<8x32xf32>
    %12 = arith.subf %8, %11 : vector<8x32xf32>
    %13 = arith.truncf %12 : vector<8x32xf32> to vector<8x32xbf16>
    %14 = math.exp %13 : vector<8x32xbf16>
    %15 = arith.extf %14 : vector<8x32xbf16> to vector<8x32xf32>
    %cst_9 = arith.constant dense<0.000000e+00> : vector<8xf32>
    %16 = vector.multi_reduction <add>, %15, %cst_9 [1] : vector<8x32xf32> to vector<8xf32>
    %17 = vector.shape_cast %16 : vector<8xf32> to vector<8x1xf32>
    %18 = vector.extract_strided_slice %5 {offsets = [0, 0], sizes = [32, 8], strides = [1, 1]} : vector<32x64xbf16> to vector<32x8xbf16>
    %cst_10 = arith.constant dense<0.000000e+00> : vector<8x8xf32>
    %19 = tpu.matmul %14, %18, %cst_10 {dimension_numbers = #tpu.dot_dimension_numbers<[1], [0], [0], [1], [0, 0, 1, 1], [], []>} : vector<8x32xbf16>, vector<32x8xbf16>, vector<8x8xf32> -> vector<8x8xf32>
    %20 = tpu.reciprocal %17 {approx = true} : vector<8x1xf32> -> vector<8x1xf32>
    %21 = vector.broadcast %20 : vector<8x1xf32> to vector<8x8xf32>
    %22 = arith.mulf %19, %21 : vector<8x8xf32>
    %c0_11 = arith.constant 0 : index
    %c0_12 = arith.constant 0 : index
    %23 = vector.load %arg8[%c0_11, %c0_12] : memref<8x64xf32, #tpu.memory_space<vmem>>, vector<8x8xf32>
    tpu.vector_store %arg8[%c0_11, %c0_12], %22 {strides = array<i32>} : memref<8x64xf32, #tpu.memory_space<vmem>>, vector<8x8xf32>,
    %24 = vector.extract_strided_slice %1 {offsets = [0, 8], sizes = [8, 8], strides = [1, 1]} : vector<8x64xbf16> to vector<8x8xbf16>
    %25 = vector.extract_strided_slice %3 {offsets = [0, 8], sizes = [32, 8], strides = [1, 1]} : vector<32x64xbf16> to vector<32x8xbf16>
    %cst_13 = arith.constant dense<0.000000e+00> : vector<8x32xf32>
    %26 = tpu.matmul %24, %25, %cst_13 {dimension_numbers = #tpu.dot_dimension_numbers<[1], [1], [0], [0], [0, 0, 1, 0], [], []>} : vector<8x8xbf16>, vector<32x8xbf16>, vector<8x32xf32> -> vector<8x32xf32>
    %cst_14 = arith.constant dense<0xFF800000> : vector<8xf32>
    %27 = vector.multi_reduction <maximumf>, %26, %cst_14 [1] : vector<8x32xf32> to vector<8xf32>
    %28 = vector.shape_cast %27 : vector<8xf32> to vector<8x1xf32>
    %29 = vector.broadcast %28 : vector<8x1xf32> to vector<8x32xf32>
    %30 = arith.subf %26, %29 : vector<8x32xf32>
    %31 = arith.truncf %30 : vector<8x32xf32> to vector<8x32xbf16>
    %32 = math.exp %31 : vector<8x32xbf16>
    %33 = arith.extf %32 : vector<8x32xbf16> to vector<8x32xf32>
    %cst_15 = arith.constant dense<0.000000e+00> : vector<8xf32>
    %34 = vector.multi_reduction <add>, %33, %cst_15 [1] : vector<8x32xf32> to vector<8xf32>
    %35 = vector.shape_cast %34 : vector<8xf32> to vector<8x1xf32>
    %36 = vector.extract_strided_slice %5 {offsets = [0, 8], sizes = [32, 8], strides = [1, 1]} : vector<32x64xbf16> to vector<32x8xbf16>
    %cst_16 = arith.constant dense<0.000000e+00> : vector<8x8xf32>
    %37 = tpu.matmul %32, %36, %cst_16 {dimension_numbers = #tpu.dot_dimension_numbers<[1], [0], [0], [1], [0, 0, 1, 1], [], []>} : vector<8x32xbf16>, vector<32x8xbf16>, vector<8x8xf32> -> vector<8x8xf32>
    %38 = tpu.reciprocal %35 {approx = true} : vector<8x1xf32> -> vector<8x1xf32>
    %39 = vector.broadcast %38 : vector<8x1xf32> to vector<8x8xf32>
    %40 = arith.mulf %37, %39 : vector<8x8xf32>
    %c0_17 = arith.constant 0 : index
    %c8 = arith.constant 8 : index
    %41 = vector.load %arg8[%c0_17, %c8] : memref<8x64xf32, #tpu.memory_space<vmem>>, vector<8x8xf32>
    tpu.vector_store %arg8[%c0_17, %c8], %40 {strides = array<i32>} : memref<8x64xf32, #tpu.memory_space<vmem>>, vector<8x8xf32>,
    %42 = vector.extract_strided_slice %1 {offsets = [0, 16], sizes = [8, 8], strides = [1, 1]} : vector<8x64xbf16> to vector<8x8xbf16>
    %43 = vector.extract_strided_slice %3 {offsets = [0, 16], sizes = [32, 8], strides = [1, 1]} : vector<32x64xbf16> to vector<32x8xbf16>
    %cst_18 = arith.constant dense<0.000000e+00> : vector<8x32xf32>
    %44 = tpu.matmul %42, %43, %cst_18 {dimension_numbers = #tpu.dot_dimension_numbers<[1], [1], [0], [0], [0, 0, 1, 0], [], []>} : vector<8x8xbf16>, vector<32x8xbf16>, vector<8x32xf32> -> vector<8x32xf32>
    %cst_19 = arith.constant dense<0xFF800000> : vector<8xf32>
    %45 = vector.multi_reduction <maximumf>, %44, %cst_19 [1] : vector<8x32xf32> to vector<8xf32>
    %46 = vector.shape_cast %45 : vector<8xf32> to vector<8x1xf32>
    %47 = vector.broadcast %46 : vector<8x1xf32> to vector<8x32xf32>
    %48 = arith.subf %44, %47 : vector<8x32xf32>
    %49 = arith.truncf %48 : vector<8x32xf32> to vector<8x32xbf16>
    %50 = math.exp %49 : vector<8x32xbf16>
    %51 = arith.extf %50 : vector<8x32xbf16> to vector<8x32xf32>
    %cst_20 = arith.constant dense<0.000000e+00> : vector<8xf32>
    %52 = vector.multi_reduction <add>, %51, %cst_20 [1] : vector<8x32xf32> to vector<8xf32>
    %53 = vector.shape_cast %52 : vector<8xf32> to vector<8x1xf32>
    %54 = vector.extract_strided_slice %5 {offsets = [0, 16], sizes = [32, 8], strides = [1, 1]} : vector<32x64xbf16> to vector<32x8xbf16>
    %cst_21 = arith.constant dense<0.000000e+00> : vector<8x8xf32>
    %55 = tpu.matmul %50, %54, %cst_21 {dimension_numbers = #tpu.dot_dimension_numbers<[1], [0], [0], [1], [0, 0, 1, 1], [], []>} : vector<8x32xbf16>, vector<32x8xbf16>, vector<8x8xf32> -> vector<8x8xf32>
    %56 = tpu.reciprocal %53 {approx = true} : vector<8x1xf32> -> vector<8x1xf32>
    %57 = vector.broadcast %56 : vector<8x1xf32> to vector<8x8xf32>
    %58 = arith.mulf %55, %57 : vector<8x8xf32>
    %c0_22 = arith.constant 0 : index
    %c16 = arith.constant 16 : index
    %59 = vector.load %arg8[%c0_22, %c16] : memref<8x64xf32, #tpu.memory_space<vmem>>, vector<8x8xf32>
    tpu.vector_store %arg8[%c0_22, %c16], %58 {strides = array<i32>} : memref<8x64xf32, #tpu.memory_space<vmem>>, vector<8x8xf32>,
    %60 = vector.extract_strided_slice %1 {offsets = [0, 24], sizes = [8, 8], strides = [1, 1]} : vector<8x64xbf16> to vector<8x8xbf16>
    %61 = vector.extract_strided_slice %3 {offsets = [0, 24], sizes = [32, 8], strides = [1, 1]} : vector<32x64xbf16> to vector<32x8xbf16>
    %cst_23 = arith.constant dense<0.000000e+00> : vector<8x32xf32>
    %62 = tpu.matmul %60, %61, %cst_23 {dimension_numbers = #tpu.dot_dimension_numbers<[1], [1], [0], [0], [0, 0, 1, 0], [], []>} : vector<8x8xbf16>, vector<32x8xbf16>, vector<8x32xf32> -> vector<8x32xf32>
    %cst_24 = arith.constant dense<0xFF800000> : vector<8xf32>
    %63 = vector.multi_reduction <maximumf>, %62, %cst_24 [1] : vector<8x32xf32> to vector<8xf32>
    %64 = vector.shape_cast %63 : vector<8xf32> to vector<8x1xf32>
    %65 = vector.broadcast %64 : vector<8x1xf32> to vector<8x32xf32>
    %66 = arith.subf %62, %65 : vector<8x32xf32>
    %67 = arith.truncf %66 : vector<8x32xf32> to vector<8x32xbf16>
    %68 = math.exp %67 : vector<8x32xbf16>
    %69 = arith.extf %68 : vector<8x32xbf16> to vector<8x32xf32>
    %cst_25 = arith.constant dense<0.000000e+00> : vector<8xf32>
    %70 = vector.multi_reduction <add>, %69, %cst_25 [1] : vector<8x32xf32> to vector<8xf32>
    %71 = vector.shape_cast %70 : vector<8xf32> to vector<8x1xf32>
    %72 = vector.extract_strided_slice %5 {offsets = [0, 24], sizes = [32, 8], strides = [1, 1]} : vector<32x64xbf16> to vector<32x8xbf16>
    %cst_26 = arith.constant dense<0.000000e+00> : vector<8x8xf32>
    %73 = tpu.matmul %68, %72, %cst_26 {dimension_numbers = #tpu.dot_dimension_numbers<[1], [0], [0], [1], [0, 0, 1, 1], [], []>} : vector<8x32xbf16>, vector<32x8xbf16>, vector<8x8xf32> -> vector<8x8xf32>
    %74 = tpu.reciprocal %71 {approx = true} : vector<8x1xf32> -> vector<8x1xf32>
    %75 = vector.broadcast %74 : vector<8x1xf32> to vector<8x8xf32>
    %76 = arith.mulf %73, %75 : vector<8x8xf32>
    %c0_27 = arith.constant 0 : index
    %c24 = arith.constant 24 : index
    %77 = vector.load %arg8[%c0_27, %c24] : memref<8x64xf32, #tpu.memory_space<vmem>>, vector<8x8xf32>
    tpu.vector_store %arg8[%c0_27, %c24], %76 {strides = array<i32>} : memref<8x64xf32, #tpu.memory_space<vmem>>, vector<8x8xf32>,
    %78 = vector.extract_strided_slice %1 {offsets = [0, 32], sizes = [8, 8], strides = [1, 1]} : vector<8x64xbf16> to vector<8x8xbf16>
    %79 = vector.extract_strided_slice %3 {offsets = [0, 32], sizes = [32, 8], strides = [1, 1]} : vector<32x64xbf16> to vector<32x8xbf16>
    %cst_28 = arith.constant dense<0.000000e+00> : vector<8x32xf32>
    %80 = tpu.matmul %78, %79, %cst_28 {dimension_numbers = #tpu.dot_dimension_numbers<[1], [1], [0], [0], [0, 0, 1, 0], [], []>} : vector<8x8xbf16>, vector<32x8xbf16>, vector<8x32xf32> -> vector<8x32xf32>
    %cst_29 = arith.constant dense<0xFF800000> : vector<8xf32>
    %81 = vector.multi_reduction <maximumf>, %80, %cst_29 [1] : vector<8x32xf32> to vector<8xf32>
    %82 = vector.shape_cast %81 : vector<8xf32> to vector<8x1xf32>
    %83 = vector.broadcast %82 : vector<8x1xf32> to vector<8x32xf32>
    %84 = arith.subf %80, %83 : vector<8x32xf32>
    %85 = arith.truncf %84 : vector<8x32xf32> to vector<8x32xbf16>
    %86 = math.exp %85 : vector<8x32xbf16>
    %87 = arith.extf %86 : vector<8x32xbf16> to vector<8x32xf32>
    %cst_30 = arith.constant dense<0.000000e+00> : vector<8xf32>
    %88 = vector.multi_reduction <add>, %87, %cst_30 [1] : vector<8x32xf32> to vector<8xf32>
    %89 = vector.shape_cast %88 : vector<8xf32> to vector<8x1xf32>
    %90 = vector.extract_strided_slice %5 {offsets = [0, 32], sizes = [32, 8], strides = [1, 1]} : vector<32x64xbf16> to vector<32x8xbf16>
    %cst_31 = arith.constant dense<0.000000e+00> : vector<8x8xf32>
    %91 = tpu.matmul %86, %90, %cst_31 {dimension_numbers = #tpu.dot_dimension_numbers<[1], [0], [0], [1], [0, 0, 1, 1], [], []>} : vector<8x32xbf16>, vector<32x8xbf16>, vector<8x8xf32> -> vector<8x8xf32>
    %92 = tpu.reciprocal %89 {approx = true} : vector<8x1xf32> -> vector<8x1xf32>
    %93 = vector.broadcast %92 : vector<8x1xf32> to vector<8x8xf32>
    %94 = arith.mulf %91, %93 : vector<8x8xf32>
    %c0_32 = arith.constant 0 : index
    %c32 = arith.constant 32 : index
    %95 = vector.load %arg8[%c0_32, %c32] : memref<8x64xf32, #tpu.memory_space<vmem>>, vector<8x8xf32>
    tpu.vector_store %arg8[%c0_32, %c32], %94 {strides = array<i32>} : memref<8x64xf32, #tpu.memory_space<vmem>>, vector<8x8xf32>,
    %96 = vector.extract_strided_slice %1 {offsets = [0, 40], sizes = [8, 8], strides = [1, 1]} : vector<8x64xbf16> to vector<8x8xbf16>
    %97 = vector.extract_strided_slice %3 {offsets = [0, 40], sizes = [32, 8], strides = [1, 1]} : vector<32x64xbf16> to vector<32x8xbf16>
    %cst_33 = arith.constant dense<0.000000e+00> : vector<8x32xf32>
    %98 = tpu.matmul %96, %97, %cst_33 {dimension_numbers = #tpu.dot_dimension_numbers<[1], [1], [0], [0], [0, 0, 1, 0], [], []>} : vector<8x8xbf16>, vector<32x8xbf16>, vector<8x32xf32> -> vector<8x32xf32>
    %cst_34 = arith.constant dense<0xFF800000> : vector<8xf32>
    %99 = vector.multi_reduction <maximumf>, %98, %cst_34 [1] : vector<8x32xf32> to vector<8xf32>
    %100 = vector.shape_cast %99 : vector<8xf32> to vector<8x1xf32>
    %101 = vector.broadcast %100 : vector<8x1xf32> to vector<8x32xf32>
    %102 = arith.subf %98, %101 : vector<8x32xf32>
    %103 = arith.truncf %102 : vector<8x32xf32> to vector<8x32xbf16>
    %104 = math.exp %103 : vector<8x32xbf16>
    %105 = arith.extf %104 : vector<8x32xbf16> to vector<8x32xf32>
    %cst_35 = arith.constant dense<0.000000e+00> : vector<8xf32>
    %106 = vector.multi_reduction <add>, %105, %cst_35 [1] : vector<8x32xf32> to vector<8xf32>
    %107 = vector.shape_cast %106 : vector<8xf32> to vector<8x1xf32>
    %108 = vector.extract_strided_slice %5 {offsets = [0, 40], sizes = [32, 8], strides = [1, 1]} : vector<32x64xbf16> to vector<32x8xbf16>
    %cst_36 = arith.constant dense<0.000000e+00> : vector<8x8xf32>
    %109 = tpu.matmul %104, %108, %cst_36 {dimension_numbers = #tpu.dot_dimension_numbers<[1], [0], [0], [1], [0, 0, 1, 1], [], []>} : vector<8x32xbf16>, vector<32x8xbf16>, vector<8x8xf32> -> vector<8x8xf32>
    %110 = tpu.reciprocal %107 {approx = true} : vector<8x1xf32> -> vector<8x1xf32>
    %111 = vector.broadcast %110 : vector<8x1xf32> to vector<8x8xf32>
    %112 = arith.mulf %109, %111 : vector<8x8xf32>
    %c0_37 = arith.constant 0 : index
    %c40 = arith.constant 40 : index
    %113 = vector.load %arg8[%c0_37, %c40] : memref<8x64xf32, #tpu.memory_space<vmem>>, vector<8x8xf32>
    tpu.vector_store %arg8[%c0_37, %c40], %112 {strides = array<i32>} : memref<8x64xf32, #tpu.memory_space<vmem>>, vector<8x8xf32>,
    %114 = vector.extract_strided_slice %1 {offsets = [0, 48], sizes = [8, 8], strides = [1, 1]} : vector<8x64xbf16> to vector<8x8xbf16>
    %115 = vector.extract_strided_slice %3 {offsets = [0, 48], sizes = [32, 8], strides = [1, 1]} : vector<32x64xbf16> to vector<32x8xbf16>
    %cst_38 = arith.constant dense<0.000000e+00> : vector<8x32xf32>
    %116 = tpu.matmul %114, %115, %cst_38 {dimension_numbers = #tpu.dot_dimension_numbers<[1], [1], [0], [0], [0, 0, 1, 0], [], []>} : vector<8x8xbf16>, vector<32x8xbf16>, vector<8x32xf32> -> vector<8x32xf32>
    %cst_39 = arith.constant dense<0xFF800000> : vector<8xf32>
    %117 = vector.multi_reduction <maximumf>, %116, %cst_39 [1] : vector<8x32xf32> to vector<8xf32>
    %118 = vector.shape_cast %117 : vector<8xf32> to vector<8x1xf32>
    %119 = vector.broadcast %118 : vector<8x1xf32> to vector<8x32xf32>
    %120 = arith.subf %116, %119 : vector<8x32xf32>
    %121 = arith.truncf %120 : vector<8x32xf32> to vector<8x32xbf16>
    %122 = math.exp %121 : vector<8x32xbf16>
    %123 = arith.extf %122 : vector<8x32xbf16> to vector<8x32xf32>
    %cst_40 = arith.constant dense<0.000000e+00> : vector<8xf32>
    %124 = vector.multi_reduction <add>, %123, %cst_40 [1] : vector<8x32xf32> to vector<8xf32>
    %125 = vector.shape_cast %124 : vector<8xf32> to vector<8x1xf32>
    %126 = vector.extract_strided_slice %5 {offsets = [0, 48], sizes = [32, 8], strides = [1, 1]} : vector<32x64xbf16> to vector<32x8xbf16>
    %cst_41 = arith.constant dense<0.000000e+00> : vector<8x8xf32>
    %127 = tpu.matmul %122, %126, %cst_41 {dimension_numbers = #tpu.dot_dimension_numbers<[1], [0], [0], [1], [0, 0, 1, 1], [], []>} : vector<8x32xbf16>, vector<32x8xbf16>, vector<8x8xf32> -> vector<8x8xf32>
    %128 = tpu.reciprocal %125 {approx = true} : vector<8x1xf32> -> vector<8x1xf32>
    %129 = vector.broadcast %128 : vector<8x1xf32> to vector<8x8xf32>
    %130 = arith.mulf %127, %129 : vector<8x8xf32>
    %c0_42 = arith.constant 0 : index
    %c48 = arith.constant 48 : index
    %131 = vector.load %arg8[%c0_42, %c48] : memref<8x64xf32, #tpu.memory_space<vmem>>, vector<8x8xf32>
    tpu.vector_store %arg8[%c0_42, %c48], %130 {strides = array<i32>} : memref<8x64xf32, #tpu.memory_space<vmem>>, vector<8x8xf32>,
    %132 = vector.extract_strided_slice %1 {offsets = [0, 56], sizes = [8, 8], strides = [1, 1]} : vector<8x64xbf16> to vector<8x8xbf16>
    %133 = vector.extract_strided_slice %3 {offsets = [0, 56], sizes = [32, 8], strides = [1, 1]} : vector<32x64xbf16> to vector<32x8xbf16>
    %cst_43 = arith.constant dense<0.000000e+00> : vector<8x32xf32>
    %134 = tpu.matmul %132, %133, %cst_43 {dimension_numbers = #tpu.dot_dimension_numbers<[1], [1], [0], [0], [0, 0, 1, 0], [], []>} : vector<8x8xbf16>, vector<32x8xbf16>, vector<8x32xf32> -> vector<8x32xf32>
    %cst_44 = arith.constant dense<0xFF800000> : vector<8xf32>
    %135 = vector.multi_reduction <maximumf>, %134, %cst_44 [1] : vector<8x32xf32> to vector<8xf32>
    %136 = vector.shape_cast %135 : vector<8xf32> to vector<8x1xf32>
    %137 = vector.broadcast %136 : vector<8x1xf32> to vector<8x32xf32>
    %138 = arith.subf %134, %137 : vector<8x32xf32>
    %139 = arith.truncf %138 : vector<8x32xf32> to vector<8x32xbf16>
    %140 = math.exp %139 : vector<8x32xbf16>
    %141 = arith.extf %140 : vector<8x32xbf16> to vector<8x32xf32>
    %cst_45 = arith.constant dense<0.000000e+00> : vector<8xf32>
    %142 = vector.multi_reduction <add>, %141, %cst_45 [1] : vector<8x32xf32> to vector<8xf32>
    %143 = vector.shape_cast %142 : vector<8xf32> to vector<8x1xf32>
    %144 = vector.extract_strided_slice %5 {offsets = [0, 56], sizes = [32, 8], strides = [1, 1]} : vector<32x64xbf16> to vector<32x8xbf16>
    %cst_46 = arith.constant dense<0.000000e+00> : vector<8x8xf32>
    %145 = tpu.matmul %140, %144, %cst_46 {dimension_numbers = #tpu.dot_dimension_numbers<[1], [0], [0], [1], [0, 0, 1, 1], [], []>} : vector<8x32xbf16>, vector<32x8xbf16>, vector<8x8xf32> -> vector<8x8xf32>
    %146 = tpu.reciprocal %143 {approx = true} : vector<8x1xf32> -> vector<8x1xf32>
    %147 = vector.broadcast %146 : vector<8x1xf32> to vector<8x8xf32>
    %148 = arith.mulf %145, %147 : vector<8x8xf32>
    %c0_47 = arith.constant 0 : index
    %c56 = arith.constant 56 : index
    %149 = vector.load %arg8[%c0_47, %c56] : memref<8x64xf32, #tpu.memory_space<vmem>>, vector<8x8xf32>
    tpu.vector_store %arg8[%c0_47, %c56], %148 {strides = array<i32>} : memref<8x64xf32, #tpu.memory_space<vmem>>, vector<8x8xf32>,
    %c0_48 = arith.constant 0 : index
    %c0_49 = arith.constant 0 : index
    %150 = vector.load %arg8[%c0_48, %c0_49] : memref<8x64xf32, #tpu.memory_space<vmem>>, vector<8x64xf32>
    %151 = arith.truncf %150 : vector<8x64xf32> to vector<8x64xbf16>
    %c0_50 = arith.constant 0 : index
    %c0_51 = arith.constant 0 : index
    %152 = vector.load %arg5[%c0_50, %c0_51] : memref<64x64xbf16, #tpu.memory_space<vmem>>, vector<64x64xbf16>
    %cst_52 = arith.constant dense<0.000000e+00> : vector<8x64xf32>
    %153 = tpu.matmul %151, %152, %cst_52 {dimension_numbers = #tpu.dot_dimension_numbers<[1], [0], [0], [1], [0, 0, 1, 1], [], []>} : vector<8x64xbf16>, vector<64x64xbf16>, vector<8x64xf32> -> vector<8x64xf32>
    %c0_53 = arith.constant 0 : index
    %c0_54 = arith.constant 0 : index
    %154 = vector.load %arg6[%c0_53, %c0_54] : memref<1x64xf32, #tpu.memory_space<vmem>>, vector<1x64xf32>
    %155 = vector.broadcast %154 : vector<1x64xf32> to vector<8x64xf32>
    %156 = arith.addf %153, %155 : vector<8x64xf32>
    %c0_55 = arith.constant 0 : index
    %c0_56 = arith.constant 0 : index
    %c0_57 = arith.constant 0 : index
    %157 = vector.load %arg7[%c0_55, %c0_56, %c0_57] : memref<1x8x64xf32, #tpu.memory_space<vmem>>, vector<1x8x64xf32>
    %158 = vector.shape_cast %157 : vector<1x8x64xf32> to vector<8x64xf32>
    %159 = vector.shape_cast %156 : vector<8x64xf32> to vector<1x8x64xf32>
    tpu.vector_store %arg7[%c0_55, %c0_56, %c0_57], %159 {strides = array<i32>} : memref<1x8x64xf32, #tpu.memory_space<vmem>>, vector<1x8x64xf32>,
    return
  }
  func.func @transform_0(%arg0: i32, %arg1: i32) -> (i32, i32, i32) {
    %c0_i32 = arith.constant 0 : i32
    %c0_i32_0 = arith.constant 0 : i32
    return %arg0, %arg1, %c0_i32 : i32, i32, i32
  }
  func.func @transform_1(%arg0: i32, %arg1: i32) -> (i32, i32, i32) {
    %c0_i32 = arith.constant 0 : i32
    %c0_i32_0 = arith.constant 0 : i32
    %c0_i32_1 = arith.constant 0 : i32
    return %arg0, %c0_i32, %c0_i32_0 : i32, i32, i32
  }
  func.func @transform_2(%arg0: i32, %arg1: i32) -> (i32, i32, i32) {
    %c0_i32 = arith.constant 0 : i32
    %c0_i32_0 = arith.constant 0 : i32
    %c0_i32_1 = arith.constant 0 : i32
    return %arg0, %c0_i32, %c0_i32_0 : i32, i32, i32
  }
  func.func @transform_3(%arg0: i32, %arg1: i32) -> (i32, i32) {
    %c0_i32 = arith.constant 0 : i32
    %c0_i32_0 = arith.constant 0 : i32
    %c0_i32_1 = arith.constant 0 : i32
    return %c0_i32, %c0_i32_0 : i32, i32
  }
  func.func @transform_4(%arg0: i32, %arg1: i32) -> (i32, i32) {
    %c0_i32 = arith.constant 0 : i32
    %c0_i32_0 = arith.constant 0 : i32
    %c0_i32_1 = arith.constant 0 : i32
    return %c0_i32, %c0_i32_0 : i32, i32
  }
  func.func @transform_5(%arg0: i32, %arg1: i32) -> (i32, i32, i32) {
    %c0_i32 = arith.constant 0 : i32
    %c0_i32_0 = arith.constant 0 : i32
    return %arg0, %arg1, %c0_i32 : i32, i32, i32
  }
}

</mosaic_0001>

<llo_original>
// kernel: attentive_block_forward.3
$region0: #{attentive_block_forward.3}
  #allocation0 [shape = 'u32[]', space=smem, size = 0x4, offset = 0x4, fixed_abs, tag = 'smem constant byte address 0x4 - core index']
  #allocation1 [shape = 'u32[144,128]{1,0:T(1,128)}', space=vmem, size = 0x12000, scoped, tag = 'internal scratch']
  %s0 = inlined_call_operand.hbm [shape: f32[32,64], index: 0, kind: input, shape index: {}]
  %s1 = inlined_call_operand.hbm [shape: f32[32,64], index: 1, kind: input, shape index: {}]
  %s2 = inlined_call_operand.vmem [shape: f32[1,64], index: 2, kind: input, shape index: {}]
  %s3 = inlined_call_operand.vmem [shape: f32[1,64], index: 3, kind: input, shape index: {}]
  %s4 = inlined_call_operand.hbm [shape: bf16[64,64], index: 4, kind: input, shape index: {}]
  %s5 = inlined_call_operand.vmem [shape: bf16[32,64], index: 5, kind: output, shape index: {}]
  %s6 = sld [smem:[#allocation0]]
  $region65: #{attentive_block_forward.3} parent=0
    _
  %s8 = ssub.s32 1, %s6
  %s9 = scalar_select 0, %s8, %s6
  $region1: #{attentive_block_forward.3} parent=0
    #allocation2 [shape = 'u8[8192]{0}', space=vmem, size = 0x2000, scoped, tag = 'input window, operand 0']
    #allocation3 [shape = 's32[2]{0}', space=sflag, size = 0x8, scoped, tag = 'scoped memory for attentive_block_forward.3']
    #allocation4 [shape = 'u8[8192]{0}', space=vmem, size = 0x2000, scoped, tag = 'input window, operand 1']
    #allocation5 [shape = 's32[2]{0}', space=sflag, size = 0x8, scoped, tag = 'scoped memory for attentive_block_forward.3']
    #allocation6 [shape = 'u8[16384]{0}', space=vmem, size = 0x4000, scoped, tag = 'input window, operand 4, single buffered']
    %10 = vsyncpa [#allocation3], 0
    %s11 = scalar_lea.sflag [#allocation3], 1
    %12 = vsyncpa %s11, 0
    %13 = vsyncpa [#allocation5], 0
    %s14 = scalar_lea.sflag [#allocation5], 1
    %15 = vsyncpa %s14, 0
    loop: start=0, step=1, limit=6
    $region2: #{attentive_block_forward.3} parent=1 // loop_pre_header
      _
    $region3: #{attentive_block_forward.3} parent=1 // loop_header
      %s17 = sphi 0, %s21
      %p18 = scmp.ge.s32.totalorder %s17, 6
      %s27 = sphi 0, %s29
      %s30 = sphi 0, %s27
      %s31 = sphi 0, %s30
      %s47 = sphi 0, %s31
      %s53 = sphi 0, %s55
      %s56 = sphi 0, %s53
      %s57 = sphi 0, %s56
      %s73 = sphi 0, %s57
      %s77 = sphi 0, %s77
      %s79 = sphi 0, %s77
      %s80 = sphi 0, %s79
      %s94 = sphi 0, %s80
      %s98 = sphi 0, %s98
      %s100 = sphi 0, %s98
      %s101 = sphi 0, %s100
      %s115 = sphi 0, %s101
      %s119 = sphi 0, %s119
      %s121 = sphi 0, %s119
      %s122 = sphi 0, %s121
      %s136 = sphi 0, %s122
      %s142 = sphi 0, %s144
      %s145 = sphi 0, %s142
      %s146 = sphi 0, %s145
      %s162 = sphi 0, %s146
    $region4: #{attentive_block_forward.3} parent=1 // loop_header_branch
      %20 = sbr.rel (%p18) target = $region8
    $region5: #{attentive_block_forward.3} parent=1 // loop_body
      %s22 = ssub.s32 %s17, 1
      %s23 = ssub.s32 %s17, 2
      %s24 = sadd.s32 %s17, 1
      %s25 = ssub.s32 %s17, %s24
      %p26 = scmp.eq.s32.totalorder %s25, 0
      %s28 = sadd.s32 %s27, 1
      %s29 = scalar_select %p26, %s27, %s28
      %p32 = pneg %p26
      %p33 = scmp.eq.s32.totalorder %s17, 3
      %p34 = por %p32, %p33
      %p35 = scmp.ne.s32.totalorder %s27, %s30
      %p36 = scmp.eq.s32.totalorder %s17, 0
      %p37 = por %p35, %p36
      %p38 = scmp.ne.s32.totalorder %s27, %s30
      %p39 = scmp.eq.s32.totalorder %s22, 3
      %p40 = por %p38, %p39
      %p41 = scmp.ne.s32.totalorder %s30, %s31
      %p42 = scmp.eq.s32.totalorder %s22, 0
      %p43 = por %p41, %p42
      %p44 = scmp.ne.s32.totalorder %s30, %s31
      %p45 = scmp.eq.s32.totalorder %s23, 3
      %p46 = por %p44, %p45
      %p48 = scmp.ne.s32.totalorder %s31, %s47
      %p49 = scmp.eq.s32.totalorder %s23, 0
      %p50 = por %p48, %p49
      %s51 = ssub.s32 %s17, %s24
      %p52 = scmp.eq.s32.totalorder %s51, 0
      %s54 = sadd.s32 %s53, 1
      %s55 = scalar_select %p52, %s53, %s54
      %p58 = pneg %p52
      %p59 = scmp.eq.s32.totalorder %s17, 3
      %p60 = por %p58, %p59
      %p61 = scmp.ne.s32.totalorder %s53, %s56
      %p62 = scmp.eq.s32.totalorder %s17, 0
      %p63 = por %p61, %p62
      %p64 = scmp.ne.s32.totalorder %s53, %s56
      %p65 = scmp.eq.s32.totalorder %s22, 3
      %p66 = por %p64, %p65
      %p67 = scmp.ne.s32.totalorder %s56, %s57
      %p68 = scmp.eq.s32.totalorder %s22, 0
      %p69 = por %p67, %p68
      %p70 = scmp.ne.s32.totalorder %s56, %s57
      %p71 = scmp.eq.s32.totalorder %s23, 3
      %p72 = por %p70, %p71
      %p74 = scmp.ne.s32.totalorder %s57, %s73
      %p75 = scmp.eq.s32.totalorder %s23, 0
      %p76 = por %p74, %p75
      %s78 = sadd.s32 %s77, 1
      %p81 = scmp.eq.s32.totalorder %s17, 3
      %p82 = scmp.ne.s32.totalorder %s77, %s79
      %p83 = scmp.eq.s32.totalorder %s17, 0
      %p84 = por %p82, %p83
      %p85 = scmp.ne.s32.totalorder %s77, %s79
      %p86 = scmp.eq.s32.totalorder %s22, 3
      %p87 = por %p85, %p86
      %p88 = scmp.ne.s32.totalorder %s79, %s80
      %p89 = scmp.eq.s32.totalorder %s22, 0
      %p90 = por %p88, %p89
      %p91 = scmp.ne.s32.totalorder %s79, %s80
      %p92 = scmp.eq.s32.totalorder %s23, 3
      %p93 = por %p91, %p92
      %p95 = scmp.ne.s32.totalorder %s80, %s94
      %p96 = scmp.eq.s32.totalorder %s23, 0
      %p97 = por %p95, %p96
      %s99 = sadd.s32 %s98, 1
      %p102 = scmp.eq.s32.totalorder %s17, 3
      %p103 = scmp.ne.s32.totalorder %s98, %s100
      %p104 = scmp.eq.s32.totalorder %s17, 0
      %p105 = por %p103, %p104
      %p106 = scmp.ne.s32.totalorder %s98, %s100
      %p107 = scmp.eq.s32.totalorder %s22, 3
      %p108 = por %p106, %p107
      %p109 = scmp.ne.s32.totalorder %s100, %s101
      %p110 = scmp.eq.s32.totalorder %s22, 0
      %p111 = por %p109, %p110
      %p112 = scmp.ne.s32.totalorder %s100, %s101
      %p113 = scmp.eq.s32.totalorder %s23, 3
      %p114 = por %p112, %p113
      %p116 = scmp.ne.s32.totalorder %s101, %s115
      %p117 = scmp.eq.s32.totalorder %s23, 0
      %p118 = por %p116, %p117
      %s120 = sadd.s32 %s119, 1
      %p123 = scmp.eq.s32.totalorder %s17, 3
      %p124 = scmp.ne.s32.totalorder %s119, %s121
      %p125 = scmp.eq.s32.totalorder %s17, 0
      %p126 = por %p124, %p125
      %p127 = scmp.ne.s32.totalorder %s119, %s121
      %p128 = scmp.eq.s32.totalorder %s22, 3
      %p129 = por %p127, %p128
      %p130 = scmp.ne.s32.totalorder %s121, %s122
      %p131 = scmp.eq.s32.totalorder %s22, 0
      %p132 = por %p130, %p131
      %p133 = scmp.ne.s32.totalorder %s121, %s122
      %p134 = scmp.eq.s32.totalorder %s23, 3
      %p135 = por %p133, %p134
      %p137 = scmp.ne.s32.totalorder %s122, %s136
      %p138 = scmp.eq.s32.totalorder %s23, 0
      %p139 = por %p137, %p138
      %s140 = ssub.s32 %s17, %s24
      %p141 = scmp.eq.s32.totalorder %s140, 0
      %s143 = sadd.s32 %s142, 1
      %s144 = scalar_select %p141, %s142, %s143
      %p147 = pneg %p141
      %p148 = scmp.eq.s32.totalorder %s17, 3
      %p149 = por %p147, %p148
      %p150 = scmp.ne.s32.totalorder %s142, %s145
      %p151 = scmp.eq.s32.totalorder %s17, 0
      %p152 = por %p150, %p151
      %p153 = scmp.ne.s32.totalorder %s142, %s145
      %p154 = scmp.eq.s32.totalorder %s22, 3
      %p155 = por %p153, %p154
      %p156 = scmp.ne.s32.totalorder %s145, %s146
      %p157 = scmp.eq.s32.totalorder %s22, 0
      %p158 = por %p156, %p157
      %p159 = scmp.ne.s32.totalorder %s145, %s146
      %p160 = scmp.eq.s32.totalorder %s23, 3
      %p161 = por %p159, %p160
      %p163 = scmp.ne.s32.totalorder %s146, %s162
      %p164 = scmp.eq.s32.totalorder %s23, 0
      %p165 = por %p163, %p164
      %p166 = scmp.le.s32.totalorder 1, %s17
      %p167 = scmp.lt.s32.totalorder %s17, 5
      %p168 = pnand %p166, %p167
      %p169 = pneg %p168
      // Predicated region
      $region9: #{attentive_block_forward.3} parent=5 // pred_check
        _
      $region10: #{attentive_block_forward.3} parent=5 // pred_check_branch
        %171 = sbr.rel (%p168) target = $region12
      $region11: #{attentive_block_forward.3} parent=5 // pred_region
        %s172 = ssub.s32 %s17, 1
        // Predicated region
        $region13: #{attentive_block_forward.3} parent=11 // pred_check
          %p173 = pneg %p90
        $region14: #{attentive_block_forward.3} parent=11 // pred_check_branch
          %175 = sbr.rel (%p173) target = $region16
        $region15: #{attentive_block_forward.3} parent=11 // pred_region
          _
        $region16: #{attentive_block_forward.3} parent=11 // pred_fallthru
          _
        // Predicated region
        $region17: #{attentive_block_forward.3} parent=11 // pred_check
          %p176 = pneg %p111
        $region18: #{attentive_block_forward.3} parent=11 // pred_check_branch
          %178 = sbr.rel (%p176) target = $region20
        $region19: #{attentive_block_forward.3} parent=11 // pred_region
          _
        $region20: #{attentive_block_forward.3} parent=11 // pred_fallthru
          _
        // Predicated region
        $region21: #{attentive_block_forward.3} parent=11 // pred_check
          %p179 = pneg %p132
        $region22: #{attentive_block_forward.3} parent=11 // pred_check_branch
          %181 = sbr.rel (%p179) target = $region24
        $region23: #{attentive_block_forward.3} parent=11 // pred_region
          %s183 = ssub.s32 512, 512
          %184 = vsyncadd [#allocation5], %s183
          %s185 = sshll.u32 [#allocation6], 4
          %s186 = int_to_ptr.vmem [resolvable:$true] %s185
          %191 = dma.hbm_to_vmem [thread:$0]  %s4, 512, %s186, [#allocation5], 64, 64, 4
        $region24: #{attentive_block_forward.3} parent=11 // pred_fallthru
          _
      $region12: #{attentive_block_forward.3} parent=5 // pred_fallthru
        _
      %p192 = scmp.lt.s32.totalorder %s17, 4
      // Predicated region
      $region25: #{attentive_block_forward.3} parent=5 // pred_check
        %p193 = pneg %p192
      $region26: #{attentive_block_forward.3} parent=5 // pred_check_branch
        %195 = sbr.rel (%p193) target = $region28
      $region27: #{attentive_block_forward.3} parent=5 // pred_region
        // Predicated region
        $region29: #{attentive_block_forward.3} parent=27 // pred_check
          %p196 = pneg %p37
        $region30: #{attentive_block_forward.3} parent=27 // pred_check_branch
          %198 = sbr.rel (%p196) target = $region32
        $region31: #{attentive_block_forward.3} parent=27 // pred_region
          %s199 = sand.u32 %s27, 1
          %s200 = scalar_lea.sflag [#allocation3], %s199
          %s201 = sand.u32 %s27, 1
          %s202 = smul.addr %s201, 8
          %s203 = scalar_lea.vmem [#allocation2], %s202
          %s205 = ssub.s32 128, 128
          %206 = vsyncadd %s200, %s205
          %s207 = smul.addr %s17, 128
          %s208 = scalar_lea.hbm %s0, %s207
          %s210 = sshll.u32 %s203, 4
          %s211 = int_to_ptr.vmem [resolvable:$true] %s210
          %213 = dma.hbm_to_vmem [thread:$0]  %s208, 128, %s211, %s200
        $region32: #{attentive_block_forward.3} parent=27 // pred_fallthru
          _
        // Predicated region
        $region33: #{attentive_block_forward.3} parent=27 // pred_check
          %p214 = pneg %p63
        $region34: #{attentive_block_forward.3} parent=27 // pred_check_branch
          %216 = sbr.rel (%p214) target = $region36
        $region35: #{attentive_block_forward.3} parent=27 // pred_region
          %s217 = sand.u32 %s17, 1
          %s218 = scalar_lea.sflag [#allocation5], %s217
          %s219 = sand.u32 %s53, 1
          %s220 = smul.addr %s219, 8
          %s221 = scalar_lea.vmem [#allocation4], %s220
          %s223 = ssub.s32 128, 128
          %224 = vsyncadd %s218, %s223
          %s225 = smul.addr %s17, 128
          %s226 = scalar_lea.hbm %s1, %s225
          %s228 = sshll.u32 %s221, 4
          %s229 = int_to_ptr.vmem [resolvable:$true] %s228
          %231 = dma.hbm_to_vmem [thread:$0]  %s226, 128, %s229, %s218
        $region36: #{attentive_block_forward.3} parent=27 // pred_fallthru
          _
      $region28: #{attentive_block_forward.3} parent=5 // pred_fallthru
        _
      %p232 = scmp.le.s32.totalorder 1, %s17
      %p233 = scmp.lt.s32.totalorder %s17, 5
      %p234 = pnand %p232, %p233
      %p235 = pneg %p234
      // Predicated region
      $region37: #{attentive_block_forward.3} parent=5 // pred_check
        _
      $region38: #{attentive_block_forward.3} parent=5 // pred_check_branch
        %237 = sbr.rel (%p234) target = $region40
      $region39: #{attentive_block_forward.3} parent=5 // pred_region
        %s238 = ssub.s32 %s17, 1
        %s239 = sand.u32 %s30, 1
        %s240 = scalar_lea.sflag [#allocation3], %s239
        %s241 = sand.u32 %s30, 1
        %s242 = smul.addr %s241, 8
        %s243 = scalar_lea.vmem [#allocation2], %s242
        // Predicated region
        $region41: #{attentive_block_forward.3} parent=39 // pred_check
          %p244 = pneg %p43
        $region42: #{attentive_block_forward.3} parent=39 // pred_check_branch
          %246 = sbr.rel (%p244) target = $region44
        $region43: #{attentive_block_forward.3} parent=39 // pred_region
          %247 = dma.done %s240, 128
        $region44: #{attentive_block_forward.3} parent=39 // pred_fallthru
          _
        %s248 = sand.u32 %s22, 1
        %s249 = scalar_lea.sflag [#allocation5], %s248
        %s250 = sand.u32 %s56, 1
        %s251 = smul.addr %s250, 8
        %s252 = scalar_lea.vmem [#allocation4], %s251
        // Predicated region
        $region45: #{attentive_block_forward.3} parent=39 // pred_check
          %p253 = pneg %p69
        $region46: #{attentive_block_forward.3} parent=39 // pred_check_branch
          %255 = sbr.rel (%p253) target = $region48
        $region47: #{attentive_block_forward.3} parent=39 // pred_region
          %256 = dma.done %s249, 128
        $region48: #{attentive_block_forward.3} parent=39 // pred_fallthru
          _
        // Predicated region
        $region49: #{attentive_block_forward.3} parent=39 // pred_check
          %p257 = pneg %p132
        $region50: #{attentive_block_forward.3} parent=39 // pred_check_branch
          %259 = sbr.rel (%p257) target = $region52
        $region51: #{attentive_block_forward.3} parent=39 // pred_region
          %260 = dma.done [#allocation5], 512
        $region52: #{attentive_block_forward.3} parent=39 // pred_fallthru
          _
        %s261 = sand.u32 %s30, 1
        %s262 = scalar_lea.sflag [#allocation3], %s261
        %s263 = sand.u32 %s30, 1
        %s264 = smul.addr %s263, 8
        %s265 = scalar_lea.vmem [#allocation2], %s264
        %p266 = pneg %p43
        %p267 = pneg %p40
        %s268 = sand.u32 %s22, 1
        %s269 = scalar_lea.sflag [#allocation5], %s268
        %s270 = sand.u32 %s56, 1
        %s271 = smul.addr %s270, 8
        %s272 = scalar_lea.vmem [#allocation4], %s271
        %p273 = pneg %p69
        %p274 = pneg %p66
        %p275 = pneg %p90
        %p276 = pneg %p87
        %p277 = pneg %p111
        %p278 = pneg %p108
        %p279 = pneg %p132
        %p280 = pneg %p129
        %p281 = pneg %p158
        %p282 = pneg %p155
        %p283 = scmp.lt.s32.totalorder %s22, 3
        %s284 = scalar_select %p283, %s22, 3
        %s285 = smul.addr %s284, 4
        %s286 = scalar_lea.vmem %s5, %s285
        %p287 = scmp.lt.s32.totalorder %s22, 3
        %s288 = scalar_select %p287, %s22, 3
        %s289 = smul.addr %s288, 4
        %s290 = scalar_lea.vmem %s5, %s289
        %v292 = vld [vmem:[%s243] sm:$0xff]
        %v293 = vld [vmem:[%s252] sm:$0xff]
        %v294 = vadd.f32 %v292, %v293
        %vm295 = vcmask 523264
        %v296 = vsel %vm295, %v294, 0.0
        %297 = vadd.xlane.f32.xlu0 %v296
        %v298 = vpop.xlane.xlu0 %297
        %v299 = vrcp.pop 64.0
        %v300 = vmul.f32 %v298, %v299
        %v301 = vsub.f32 %v294, %v300
        %v302 = vmul.f32 %v301, %v301
        %v303 = vsel %vm295, %v302, 0.0
        %304 = vadd.xlane.f32.xlu0 %v303
        %v305 = vpop.xlane.xlu0 %304
        %v306 = vmul.f32 %v305, %v299
        %v307 = vadd.f32 %v306, 1e-06
        %v308 = vrsqrt.pop %v307
        %v309 = vmul.f32 %v301, %v308
        %v310 = vld [vmem:[%s2] sm:$0x1]
        %v312 = vlaneseq
        %v313 = vshrl.u32 %v312, 7
        %v314 = vsub.s32 0, %v313
        %v315 = vrot.slane %v310, %v314
        %v317 = vmul.f32 %v309, %v315
        %v318 = vld [vmem:[%s3] sm:$0x1]
        %v320 = vlaneseq
        %v321 = vshrl.u32 %v320, 7
        %v322 = vsub.s32 0, %v321
        %v323 = vrot.slane %v318, %v322
        %v325 = vadd.f32 %v317, %v323
        %v326 = vmul.f32 %v325, 0.35355338
        %v327 = vpack.c.bf16 %v326, %v326
        %v328 = vld [vmem:[#allocation6] sm:$0xf]
        %v329 = vld [vmem:[#allocation6 + $0x4] sm:$0xf]
        %v330 = vld [vmem:[#allocation6 + $0x8] sm:$0xf]
        %v331 = vld [vmem:[#allocation6 + $0xc] sm:$0xf]
        %v332 = vld [vmem:[#allocation6 + $0x10] sm:$0xf]
        %v333 = vld [vmem:[#allocation6 + $0x14] sm:$0xf]
        %v334 = vld [vmem:[#allocation6 + $0x18] sm:$0xf]
        %v335 = vld [vmem:[#allocation6 + $0x1c] sm:$0xf]
        %v344 = vunpack.c.l.b16 %v328
        %v345 = vunpack.c.l.b16 %v329
        %v346 = vunpack.c.l.b16 %v330
        %v347 = vunpack.c.l.b16 %v331
        %v348 = vunpack.c.l.b16 %v332
        %v349 = vunpack.c.l.b16 %v333
        %v350 = vunpack.c.l.b16 %v334
        %v351 = vunpack.c.l.b16 %v335
        %v352 = vpack.c.b16 %v345, %v344
        %v353 = vpack.c.b16 %v347, %v346
        %v354 = vpack.c.b16 %v349, %v348
        %v355 = vpack.c.b16 %v351, %v350
        %v361 = vsel %vm295, %v327, 0
        %363 = vmatprep.subr.bf16.mxu0 0
        %364 = vmatpush1.bf16.msra.mxu0 0
        %365 = vmatprep.subr.bf16.mxu0 0
        %366 = vmatpush1.bf16.msra.mxu0 0
        %367 = vmatprep.subr.bf16.mxu0 0
        %368 = vmatpush1.bf16.msra.mxu0 0
        %369 = vmatprep.subr.bf16.mxu0 0
        %370 = vmatpush1.bf16.msra.mxu0 0
        %371 = vmatprep.subr.bf16.mxu0 0
        %372 = vmatpush1.bf16.msra.mxu0 %v355
        %373 = vmatprep.subr.bf16.mxu0 0
        %374 = vmatpush1.bf16.msra.mxu0 %v354
        %375 = vmatprep.subr.bf16.mxu0 0
        %376 = vmatpush1.bf16.msra.mxu0 %v353
        %377 = vmatprep.subr.bf16.mxu0 0
        %378 = vmatpush1.bf16.msra.mxu0 %v352
        %379 = vmatprep.subr.bf16.mxu0 0
        %380 = vmatpush2.bf16.msra.mxu0 0
        %381 = vmatprep.subr.bf16.mxu0 0
        %382 = vmatpush2.bf16.msra.mxu0 0
        %383 = vmatprep.subr.bf16.mxu0 0
        %384 = vmatpush2.bf16.msra.mxu0 0
        %385 = vmatprep.subr.bf16.mxu0 0
        %386 = vmatpush2.bf16.msra.mxu0 0
        %387 = vmatprep.subr.bf16.mxu0 0
        %388 = vmatpush2.bf16.msra.mxu0 0
        %389 = vmatprep.subr.bf16.mxu0 0
        %390 = vmatpush2.bf16.msra.mxu0 0
        %391 = vmatprep.subr.bf16.mxu0 0
        %392 = vmatpush2.bf16.msra.mxu0 0
        %393 = vmatprep.subr.bf16.mxu0 0
        %394 = vmatpush2.bf16.msra.mxu0 0
        %395 = vmatprep.mubr.bf16.mxu0 0
        %396 = vmatmul.mubr.bf16.gmra.mxu0 %v361
        %v397 = vpop.f32.mrf.mxu0
        %v398 = vadd.f32 0.0, %v397
        %v399 = vpop.f32.mrf.mxu0
        %v400 = vpop.f32.mrf.mxu0
        %v401 = vpop.f32.mrf.mxu0
        %402 = vdwg.mxu0
        %v403 = vpack.c.bf16 %v398, %v398
        %vm404 = vcmask 519168
        %405 = vst.msk [vmem:[%s290] sm:$0xf] %vm404, %v403
        %p406 = scmp.lt.s32.totalorder %s22, 3
        %s407 = scalar_select %p406, %s22, 3
        %s408 = smul.addr %s407, 4
        %s409 = scalar_lea.vmem %s5, %s408
        // Predicated region
        $region53: #{attentive_block_forward.3} parent=39 // pred_check
          %p410 = pneg %p155
        $region54: #{attentive_block_forward.3} parent=39 // pred_check_branch
          %412 = sbr.rel (%p410) target = $region56
        $region55: #{attentive_block_forward.3} parent=39 // pred_region
          _
        $region56: #{attentive_block_forward.3} parent=39 // pred_fallthru
          _
      $region40: #{attentive_block_forward.3} parent=5 // pred_fallthru
        _
      %p413 = scmp.le.s32.totalorder 2, %s17
      // Predicated region
      $region57: #{attentive_block_forward.3} parent=5 // pred_check
        %p414 = pneg %p413
      $region58: #{attentive_block_forward.3} parent=5 // pred_check_branch
        %416 = sbr.rel (%p414) target = $region60
      $region59: #{attentive_block_forward.3} parent=5 // pred_region
        %s417 = ssub.s32 %s17, 2
        // Predicated region
        $region61: #{attentive_block_forward.3} parent=59 // pred_check
          %p418 = pneg %p161
        $region62: #{attentive_block_forward.3} parent=59 // pred_check_branch
          %420 = sbr.rel (%p418) target = $region64
        $region63: #{attentive_block_forward.3} parent=59 // pred_region
          %p421 = scmp.lt.s32.totalorder %s23, 3
          %s422 = scalar_select %p421, %s23, 3
          %s423 = smul.addr %s422, 4
          %s424 = scalar_lea.vmem %s5, %s423
        $region64: #{attentive_block_forward.3} parent=59 // pred_fallthru
          _
      $region60: #{attentive_block_forward.3} parent=5 // pred_fallthru
        _
    $region6: #{attentive_block_forward.3} parent=1 // loop_footer
      %s21 = sadd.s32 1, %s17
    $region7: #{attentive_block_forward.3} parent=1 // loop_footer_branch
      %16 = sbr.rel target = $region3
    $region8: #{attentive_block_forward.3} parent=1 // loop_exit
      _
    %425 = vsyncpa [#allocation3], 1
    %s426 = scalar_lea.sflag [#allocation3], 1
    %427 = vsyncpa %s426, 1
    %428 = vsyncpa [#allocation5], 1
    %s429 = scalar_lea.sflag [#allocation5], 1
    %430 = vsyncpa %s429, 1

// kernel: attentive_block_forward.4
$region0: #{attentive_block_forward.4}
  #allocation0 [shape = 'u32[]', space=smem, size = 0x4, offset = 0x4, fixed_abs, tag = 'smem constant byte address 0x4 - core index']
  #allocation1 [shape = 'u32[144,128]{1,0:T(1,128)}', space=vmem, size = 0x12000, scoped, tag = 'internal scratch']
  %s0 = inlined_call_operand.vmem [shape: f32[64,64], index: 0, kind: input, shape index: {}]
  %s1 = inlined_call_operand.vmem [shape: f32[64,64], index: 1, kind: input, shape index: {}]
  %s2 = inlined_call_operand.vmem [shape: f32[1,64], index: 2, kind: input, shape index: {}]
  %s3 = inlined_call_operand.vmem [shape: f32[1,64], index: 3, kind: input, shape index: {}]
  %s4 = inlined_call_operand.vmem [shape: f32[1,64], index: 4, kind: input, shape index: {}]
  %s5 = inlined_call_operand.vmem [shape: f32[1,64], index: 5, kind: input, shape index: {}]
  %s6 = inlined_call_operand.hbm [shape: bf16[64,64], index: 6, kind: input, shape index: {}]
  %s7 = inlined_call_operand.hbm [shape: bf16[64,64], index: 7, kind: input, shape index: {}]
  %s8 = inlined_call_operand.vmem [shape: bf16[64,64], index: 8, kind: output, shape index: {0}]
  %s9 = inlined_call_operand.vmem [shape: bf16[64,64], index: 9, kind: output, shape index: {1}]
  %10 = xla_tuple %s8, %s9
  %s11 = sld [smem:[#allocation0]]
  $region81: #{attentive_block_forward.4} parent=0
    _
  %s13 = ssub.s32 1, %s11
  %s14 = scalar_select 0, %s13, %s11
  $region1: #{attentive_block_forward.4} parent=0
    #allocation2 [shape = 'u8[16384]{0}', space=vmem, size = 0x4000, scoped, tag = 'input window, operand 6, single buffered']
    #allocation3 [shape = 's32[2]{0}', space=sflag, size = 0x8, scoped, tag = 'scoped memory for attentive_block_forward.4']
    #allocation4 [shape = 'u8[16384]{0}', space=vmem, size = 0x4000, scoped, tag = 'input window, operand 7, single buffered']
    #allocation5 [shape = 's32[1]{0}', space=sflag, size = 0x4, scoped, tag = 'scoped memory for attentive_block_forward.4']
    %15 = vsyncpa [#allocation3], 0
    %16 = vsyncpa [#allocation5], 0
    loop: start=0, step=1, limit=6
    $region2: #{attentive_block_forward.4} parent=1 // loop_pre_header
      _
    $region3: #{attentive_block_forward.4} parent=1 // loop_header
      %s18 = sphi 0, %s22
      %p19 = scmp.ge.s32.totalorder %s18, 6
      %s28 = sphi 0, %s30
      %s31 = sphi 0, %s28
      %s32 = sphi 0, %s31
      %s48 = sphi 0, %s32
      %s54 = sphi 0, %s56
      %s57 = sphi 0, %s54
      %s58 = sphi 0, %s57
      %s74 = sphi 0, %s58
      %s78 = sphi 0, %s78
      %s80 = sphi 0, %s78
      %s81 = sphi 0, %s80
      %s95 = sphi 0, %s81
      %s99 = sphi 0, %s99
      %s101 = sphi 0, %s99
      %s102 = sphi 0, %s101
      %s116 = sphi 0, %s102
      %s120 = sphi 0, %s120
      %s122 = sphi 0, %s120
      %s123 = sphi 0, %s122
      %s137 = sphi 0, %s123
      %s141 = sphi 0, %s141
      %s143 = sphi 0, %s141
      %s144 = sphi 0, %s143
      %s158 = sphi 0, %s144
      %s162 = sphi 0, %s162
      %s164 = sphi 0, %s162
      %s165 = sphi 0, %s164
      %s179 = sphi 0, %s165
      %s183 = sphi 0, %s183
      %s185 = sphi 0, %s183
      %s186 = sphi 0, %s185
      %s200 = sphi 0, %s186
      %s206 = sphi 0, %s208
      %s209 = sphi 0, %s206
      %s210 = sphi 0, %s209
      %s226 = sphi 0, %s210
      %s232 = sphi 0, %s234
      %s235 = sphi 0, %s232
      %s236 = sphi 0, %s235
      %s252 = sphi 0, %s236
    $region4: #{attentive_block_forward.4} parent=1 // loop_header_branch
      %21 = sbr.rel (%p19) target = $region8
    $region5: #{attentive_block_forward.4} parent=1 // loop_body
      %s23 = ssub.s32 %s18, 1
      %s24 = ssub.s32 %s18, 2
      %s25 = sadd.s32 %s18, 1
      %s26 = ssub.s32 %s18, %s25
      %p27 = scmp.eq.s32.totalorder %s26, 0
      %s29 = sadd.s32 %s28, 1
      %s30 = scalar_select %p27, %s28, %s29
      %p33 = pneg %p27
      %p34 = scmp.eq.s32.totalorder %s18, 3
      %p35 = por %p33, %p34
      %p36 = scmp.ne.s32.totalorder %s28, %s31
      %p37 = scmp.eq.s32.totalorder %s18, 0
      %p38 = por %p36, %p37
      %p39 = scmp.ne.s32.totalorder %s28, %s31
      %p40 = scmp.eq.s32.totalorder %s23, 3
      %p41 = por %p39, %p40
      %p42 = scmp.ne.s32.totalorder %s31, %s32
      %p43 = scmp.eq.s32.totalorder %s23, 0
      %p44 = por %p42, %p43
      %p45 = scmp.ne.s32.totalorder %s31, %s32
      %p46 = scmp.eq.s32.totalorder %s24, 3
      %p47 = por %p45, %p46
      %p49 = scmp.ne.s32.totalorder %s32, %s48
      %p50 = scmp.eq.s32.totalorder %s24, 0
      %p51 = por %p49, %p50
      %s52 = ssub.s32 %s18, %s25
      %p53 = scmp.eq.s32.totalorder %s52, 0
      %s55 = sadd.s32 %s54, 1
      %s56 = scalar_select %p53, %s54, %s55
      %p59 = pneg %p53
      %p60 = scmp.eq.s32.totalorder %s18, 3
      %p61 = por %p59, %p60
      %p62 = scmp.ne.s32.totalorder %s54, %s57
      %p63 = scmp.eq.s32.totalorder %s18, 0
      %p64 = por %p62, %p63
      %p65 = scmp.ne.s32.totalorder %s54, %s57
      %p66 = scmp.eq.s32.totalorder %s23, 3
      %p67 = por %p65, %p66
      %p68 = scmp.ne.s32.totalorder %s57, %s58
      %p69 = scmp.eq.s32.totalorder %s23, 0
      %p70 = por %p68, %p69
      %p71 = scmp.ne.s32.totalorder %s57, %s58
      %p72 = scmp.eq.s32.totalorder %s24, 3
      %p73 = por %p71, %p72
      %p75 = scmp.ne.s32.totalorder %s58, %s74
      %p76 = scmp.eq.s32.totalorder %s24, 0
      %p77 = por %p75, %p76
      %s79 = sadd.s32 %s78, 1
      %p82 = scmp.eq.s32.totalorder %s18, 3
      %p83 = scmp.ne.s32.totalorder %s78, %s80
      %p84 = scmp.eq.s32.totalorder %s18, 0
      %p85 = por %p83, %p84
      %p86 = scmp.ne.s32.totalorder %s78, %s80
      %p87 = scmp.eq.s32.totalorder %s23, 3
      %p88 = por %p86, %p87
      %p89 = scmp.ne.s32.totalorder %s80, %s81
      %p90 = scmp.eq.s32.totalorder %s23, 0
      %p91 = por %p89, %p90
      %p92 = scmp.ne.s32.totalorder %s80, %s81
      %p93 = scmp.eq.s32.totalorder %s24, 3
      %p94 = por %p92, %p93
      %p96 = scmp.ne.s32.totalorder %s81, %s95
      %p97 = scmp.eq.s32.totalorder %s24, 0
      %p98 = por %p96, %p97
      %s100 = sadd.s32 %s99, 1
      %p103 = scmp.eq.s32.totalorder %s18, 3
      %p104 = scmp.ne.s32.totalorder %s99, %s101
      %p105 = scmp.eq.s32.totalorder %s18, 0
      %p106 = por %p104, %p105
      %p107 = scmp.ne.s32.totalorder %s99, %s101
      %p108 = scmp.eq.s32.totalorder %s23, 3
      %p109 = por %p107, %p108
      %p110 = scmp.ne.s32.totalorder %s101, %s102
      %p111 = scmp.eq.s32.totalorder %s23, 0
      %p112 = por %p110, %p111
      %p113 = scmp.ne.s32.totalorder %s101, %s102
      %p114 = scmp.eq.s32.totalorder %s24, 3
      %p115 = por %p113, %p114
      %p117 = scmp.ne.s32.totalorder %s102, %s116
      %p118 = scmp.eq.s32.totalorder %s24, 0
      %p119 = por %p117, %p118
      %s121 = sadd.s32 %s120, 1
      %p124 = scmp.eq.s32.totalorder %s18, 3
      %p125 = scmp.ne.s32.totalorder %s120, %s122
      %p126 = scmp.eq.s32.totalorder %s18, 0
      %p127 = por %p125, %p126
      %p128 = scmp.ne.s32.totalorder %s120, %s122
      %p129 = scmp.eq.s32.totalorder %s23, 3
      %p130 = por %p128, %p129
      %p131 = scmp.ne.s32.totalorder %s122, %s123
      %p132 = scmp.eq.s32.totalorder %s23, 0
      %p133 = por %p131, %p132
      %p134 = scmp.ne.s32.totalorder %s122, %s123
      %p135 = scmp.eq.s32.totalorder %s24, 3
      %p136 = por %p134, %p135
      %p138 = scmp.ne.s32.totalorder %s123, %s137
      %p139 = scmp.eq.s32.totalorder %s24, 0
      %p140 = por %p138, %p139
      %s142 = sadd.s32 %s141, 1
      %p145 = scmp.eq.s32.totalorder %s18, 3
      %p146 = scmp.ne.s32.totalorder %s141, %s143
      %p147 = scmp.eq.s32.totalorder %s18, 0
      %p148 = por %p146, %p147
      %p149 = scmp.ne.s32.totalorder %s141, %s143
      %p150 = scmp.eq.s32.totalorder %s23, 3
      %p151 = por %p149, %p150
      %p152 = scmp.ne.s32.totalorder %s143, %s144
      %p153 = scmp.eq.s32.totalorder %s23, 0
      %p154 = por %p152, %p153
      %p155 = scmp.ne.s32.totalorder %s143, %s144
      %p156 = scmp.eq.s32.totalorder %s24, 3
      %p157 = por %p155, %p156
      %p159 = scmp.ne.s32.totalorder %s144, %s158
      %p160 = scmp.eq.s32.totalorder %s24, 0
      %p161 = por %p159, %p160
      %s163 = sadd.s32 %s162, 1
      %p166 = scmp.eq.s32.totalorder %s18, 3
      %p167 = scmp.ne.s32.totalorder %s162, %s164
      %p168 = scmp.eq.s32.totalorder %s18, 0
      %p169 = por %p167, %p168
      %p170 = scmp.ne.s32.totalorder %s162, %s164
      %p171 = scmp.eq.s32.totalorder %s23, 3
      %p172 = por %p170, %p171
      %p173 = scmp.ne.s32.totalorder %s164, %s165
      %p174 = scmp.eq.s32.totalorder %s23, 0
      %p175 = por %p173, %p174
      %p176 = scmp.ne.s32.totalorder %s164, %s165
      %p177 = scmp.eq.s32.totalorder %s24, 3
      %p178 = por %p176, %p177
      %p180 = scmp.ne.s32.totalorder %s165, %s179
      %p181 = scmp.eq.s32.totalorder %s24, 0
      %p182 = por %p180, %p181
      %s184 = sadd.s32 %s183, 1
      %p187 = scmp.eq.s32.totalorder %s18, 3
      %p188 = scmp.ne.s32.totalorder %s183, %s185
      %p189 = scmp.eq.s32.totalorder %s18, 0
      %p190 = por %p188, %p189
      %p191 = scmp.ne.s32.totalorder %s183, %s185
      %p192 = scmp.eq.s32.totalorder %s23, 3
      %p193 = por %p191, %p192
      %p194 = scmp.ne.s32.totalorder %s185, %s186
      %p195 = scmp.eq.s32.totalorder %s23, 0
      %p196 = por %p194, %p195
      %p197 = scmp.ne.s32.totalorder %s185, %s186
      %p198 = scmp.eq.s32.totalorder %s24, 3
      %p199 = por %p197, %p198
      %p201 = scmp.ne.s32.totalorder %s186, %s200
      %p202 = scmp.eq.s32.totalorder %s24, 0
      %p203 = por %p201, %p202
      %s204 = ssub.s32 %s18, %s25
      %p205 = scmp.eq.s32.totalorder %s204, 0
      %s207 = sadd.s32 %s206, 1
      %s208 = scalar_select %p205, %s206, %s207
      %p211 = pneg %p205
      %p212 = scmp.eq.s32.totalorder %s18, 3
      %p213 = por %p211, %p212
      %p214 = scmp.ne.s32.totalorder %s206, %s209
      %p215 = scmp.eq.s32.totalorder %s18, 0
      %p216 = por %p214, %p215
      %p217 = scmp.ne.s32.totalorder %s206, %s209
      %p218 = scmp.eq.s32.totalorder %s23, 3
      %p219 = por %p217, %p218
      %p220 = scmp.ne.s32.totalorder %s209, %s210
      %p221 = scmp.eq.s32.totalorder %s23, 0
      %p222 = por %p220, %p221
      %p223 = scmp.ne.s32.totalorder %s209, %s210
      %p224 = scmp.eq.s32.totalorder %s24, 3
      %p225 = por %p223, %p224
      %p227 = scmp.ne.s32.totalorder %s210, %s226
      %p228 = scmp.eq.s32.totalorder %s24, 0
      %p229 = por %p227, %p228
      %s230 = ssub.s32 %s18, %s25
      %p231 = scmp.eq.s32.totalorder %s230, 0
      %s233 = sadd.s32 %s232, 1
      %s234 = scalar_select %p231, %s232, %s233
      %p237 = pneg %p231
      %p238 = scmp.eq.s32.totalorder %s18, 3
      %p239 = por %p237, %p238
      %p240 = scmp.ne.s32.totalorder %s232, %s235
      %p241 = scmp.eq.s32.totalorder %s18, 0
      %p242 = por %p240, %p241
      %p243 = scmp.ne.s32.totalorder %s232, %s235
      %p244 = scmp.eq.s32.totalorder %s23, 3
      %p245 = por %p243, %p244
      %p246 = scmp.ne.s32.totalorder %s235, %s236
      %p247 = scmp.eq.s32.totalorder %s23, 0
      %p248 = por %p246, %p247
      %p249 = scmp.ne.s32.totalorder %s235, %s236
      %p250 = scmp.eq.s32.totalorder %s24, 3
      %p251 = por %p249, %p250
      %p253 = scmp.ne.s32.totalorder %s236, %s252
      %p254 = scmp.eq.s32.totalorder %s24, 0
      %p255 = por %p253, %p254
      %p256 = scmp.le.s32.totalorder 1, %s18
      %p257 = scmp.lt.s32.totalorder %s18, 5
      %p258 = pnand %p256, %p257
      %p259 = pneg %p258
      // Predicated region
      $region9: #{attentive_block_forward.4} parent=5 // pred_check
        _
      $region10: #{attentive_block_forward.4} parent=5 // pred_check_branch
        %261 = sbr.rel (%p258) target = $region12
      $region11: #{attentive_block_forward.4} parent=5 // pred_region
        %s262 = ssub.s32 %s18, 1
        // Predicated region
        $region13: #{attentive_block_forward.4} parent=11 // pred_check
          %p263 = pneg %p91
        $region14: #{attentive_block_forward.4} parent=11 // pred_check_branch
          %265 = sbr.rel (%p263) target = $region16
        $region15: #{attentive_block_forward.4} parent=11 // pred_region
          _
        $region16: #{attentive_block_forward.4} parent=11 // pred_fallthru
          _
        // Predicated region
        $region17: #{attentive_block_forward.4} parent=11 // pred_check
          %p266 = pneg %p112
        $region18: #{attentive_block_forward.4} parent=11 // pred_check_branch
          %268 = sbr.rel (%p266) target = $region20
        $region19: #{attentive_block_forward.4} parent=11 // pred_region
          _
        $region20: #{attentive_block_forward.4} parent=11 // pred_fallthru
          _
        // Predicated region
        $region21: #{attentive_block_forward.4} parent=11 // pred_check
          %p269 = pneg %p133
        $region22: #{attentive_block_forward.4} parent=11 // pred_check_branch
          %271 = sbr.rel (%p269) target = $region24
        $region23: #{attentive_block_forward.4} parent=11 // pred_region
          _
        $region24: #{attentive_block_forward.4} parent=11 // pred_fallthru
          _
        // Predicated region
        $region25: #{attentive_block_forward.4} parent=11 // pred_check
          %p272 = pneg %p154
        $region26: #{attentive_block_forward.4} parent=11 // pred_check_branch
          %274 = sbr.rel (%p272) target = $region28
        $region27: #{attentive_block_forward.4} parent=11 // pred_region
          _
        $region28: #{attentive_block_forward.4} parent=11 // pred_fallthru
          _
        // Predicated region
        $region29: #{attentive_block_forward.4} parent=11 // pred_check
          %p275 = pneg %p175
        $region30: #{attentive_block_forward.4} parent=11 // pred_check_branch
          %277 = sbr.rel (%p275) target = $region32
        $region31: #{attentive_block_forward.4} parent=11 // pred_region
          %s279 = ssub.s32 512, 512
          %280 = vsyncadd [#allocation3], %s279
          %s281 = sshll.u32 [#allocation2], 4
          %s282 = int_to_ptr.vmem [resolvable:$true] %s281
          %287 = dma.hbm_to_vmem [thread:$0]  %s6, 512, %s282, [#allocation3], 64, 64, 4
        $region32: #{attentive_block_forward.4} parent=11 // pred_fallthru
          _
        // Predicated region
        $region33: #{attentive_block_forward.4} parent=11 // pred_check
          %p288 = pneg %p196
        $region34: #{attentive_block_forward.4} parent=11 // pred_check_branch
          %290 = sbr.rel (%p288) target = $region36
        $region35: #{attentive_block_forward.4} parent=11 // pred_region
          %s292 = ssub.s32 512, 512
          %293 = vsyncadd [#allocation5], %s292
          %s294 = sshll.u32 [#allocation4], 4
          %s295 = int_to_ptr.vmem [resolvable:$true] %s294
          %300 = dma.hbm_to_vmem [thread:$0]  %s7, 512, %s295, [#allocation5], 64, 64, 4
        $region36: #{attentive_block_forward.4} parent=11 // pred_fallthru
          _
      $region12: #{attentive_block_forward.4} parent=5 // pred_fallthru
        _
      %p301 = scmp.lt.s32.totalorder %s18, 4
      // Predicated region
      $region37: #{attentive_block_forward.4} parent=5 // pred_check
        %p302 = pneg %p301
      $region38: #{attentive_block_forward.4} parent=5 // pred_check_branch
        %304 = sbr.rel (%p302) target = $region40
      $region39: #{attentive_block_forward.4} parent=5 // pred_region
        // Predicated region
        $region41: #{attentive_block_forward.4} parent=39 // pred_check
          %p305 = pneg %p38
        $region42: #{attentive_block_forward.4} parent=39 // pred_check_branch
          %307 = sbr.rel (%p305) target = $region44
        $region43: #{attentive_block_forward.4} parent=39 // pred_region
          %s308 = smul.u32 2, %s18
          %p309 = scmp.lt.s32.totalorder %s308, 7
          %s310 = scalar_select %p309, %s308, 7
          %s311 = smul.addr %s310, 8
          %s312 = scalar_lea.vmem %s0, %s311
          %s313 = smul.u32 2, %s18
        $region44: #{attentive_block_forward.4} parent=39 // pred_fallthru
          _
        // Predicated region
        $region45: #{attentive_block_forward.4} parent=39 // pred_check
          %p314 = pneg %p64
        $region46: #{attentive_block_forward.4} parent=39 // pred_check_branch
          %316 = sbr.rel (%p314) target = $region48
        $region47: #{attentive_block_forward.4} parent=39 // pred_region
          %s317 = smul.u32 2, %s18
          %p318 = scmp.lt.s32.totalorder %s317, 7
          %s319 = scalar_select %p318, %s317, 7
          %s320 = smul.addr %s319, 8
          %s321 = scalar_lea.vmem %s1, %s320
          %s322 = smul.u32 2, %s18
        $region48: #{attentive_block_forward.4} parent=39 // pred_fallthru
          _
      $region40: #{attentive_block_forward.4} parent=5 // pred_fallthru
        _
      %p323 = scmp.le.s32.totalorder 1, %s18
      %p324 = scmp.lt.s32.totalorder %s18, 5
      %p325 = pnand %p323, %p324
      %p326 = pneg %p325
      // Predicated region
      $region49: #{attentive_block_forward.4} parent=5 // pred_check
        _
      $region50: #{attentive_block_forward.4} parent=5 // pred_check_branch
        %328 = sbr.rel (%p325) target = $region52
      $region51: #{attentive_block_forward.4} parent=5 // pred_region
        %s329 = ssub.s32 %s18, 1
        // Predicated region
        $region53: #{attentive_block_forward.4} parent=51 // pred_check
          %p330 = pneg %p175
        $region54: #{attentive_block_forward.4} parent=51 // pred_check_branch
          %332 = sbr.rel (%p330) target = $region56
        $region55: #{attentive_block_forward.4} parent=51 // pred_region
          %333 = dma.done [#allocation3], 512
        $region56: #{attentive_block_forward.4} parent=51 // pred_fallthru
          _
        // Predicated region
        $region57: #{attentive_block_forward.4} parent=51 // pred_check
          %p334 = pneg %p196
        $region58: #{attentive_block_forward.4} parent=51 // pred_check_branch
          %336 = sbr.rel (%p334) target = $region60
        $region59: #{attentive_block_forward.4} parent=51 // pred_region
          %337 = dma.done [#allocation5], 512
        $region60: #{attentive_block_forward.4} parent=51 // pred_fallthru
          _
        %s338 = smul.u32 2, %s23
        %p339 = scmp.lt.s32.totalorder %s338, 7
        %s340 = scalar_select %p339, %s338, 7
        %s341 = smul.addr %s340, 8
        %s342 = scalar_lea.vmem %s0, %s341
        %p343 = pneg %p44
        %p344 = pneg %p41
        %s345 = smul.u32 2, %s23
        %p346 = scmp.lt.s32.totalorder %s345, 7
        %s347 = scalar_select %p346, %s345, 7
        %s348 = smul.addr %s347, 8
        %s349 = scalar_lea.vmem %s1, %s348
        %p350 = pneg %p70
        %p351 = pneg %p67
        %p352 = pneg %p91
        %p353 = pneg %p88
        %p354 = pneg %p112
        %p355 = pneg %p109
        %p356 = pneg %p133
        %p357 = pneg %p130
        %p358 = pneg %p154
        %p359 = pneg %p151
        %p360 = pneg %p175
        %p361 = pneg %p172
        %p362 = pneg %p196
        %p363 = pneg %p193
        %p364 = pneg %p222
        %p365 = pneg %p219
        %s366 = smul.u32 2, %s23
        %p367 = scmp.lt.s32.totalorder %s366, 7
        %s368 = scalar_select %p367, %s366, 7
        %s369 = smul.addr %s368, 4
        %s370 = scalar_lea.vmem %s8, %s369
        %p371 = pneg %p248
        %p372 = pneg %p245
        %s373 = smul.u32 2, %s23
        %p374 = scmp.lt.s32.totalorder %s373, 7
        %s375 = scalar_select %p374, %s373, 7
        %s376 = smul.addr %s375, 4
        %s377 = scalar_lea.vmem %s9, %s376
        %s378 = smul.u32 2, %s23
        %p379 = scmp.lt.s32.totalorder %s378, 7
        %s380 = scalar_select %p379, %s378, 7
        %s381 = smul.addr %s380, 8
        %s382 = scalar_lea.vmem %s0, %s381
        %s383 = smul.u32 2, %s23
        %s384 = smul.u32 2, %s23
        %p385 = scmp.lt.s32.totalorder %s384, 7
        %s386 = scalar_select %p385, %s384, 7
        %s387 = smul.addr %s386, 8
        %s388 = scalar_lea.vmem %s1, %s387
        %s389 = smul.u32 2, %s23
        %s390 = smul.u32 2, %s23
        %p391 = scmp.lt.s32.totalorder %s390, 7
        %s392 = scalar_select %p391, %s390, 7
        %s393 = smul.addr %s392, 4
        %s394 = scalar_lea.vmem %s8, %s393
        %s395 = smul.u32 2, %s23
        %s396 = smul.u32 2, %s23
        %p397 = scmp.lt.s32.totalorder %s396, 7
        %s398 = scalar_select %p397, %s396, 7
        %s399 = smul.addr %s398, 4
        %s400 = scalar_lea.vmem %s9, %s399
        %s401 = smul.u32 2, %s23
        %v403 = vld [vmem:[%s382] sm:$0xff]
        %v404 = vld [vmem:[%s382 + $0x8] sm:$0xff]
        %vm405 = vcmask 523264
        %v406 = vsel %vm405, %v403, 0.0
        %407 = vadd.xlane.f32.xlu0 %v406
        %v408 = vpop.xlane.xlu0 %407
        %v409 = vsel %vm405, %v404, 0.0
        %410 = vadd.xlane.f32.xlu0 %v409
        %v411 = vpop.xlane.xlu0 %410
        %v412 = vrcp.pop 64.0
        %v413 = vmul.f32 %v408, %v412
        %v414 = vmul.f32 %v411, %v412
        %v415 = vsub.f32 %v403, %v413
        %v416 = vsub.f32 %v404, %v414
        %v417 = vmul.f32 %v415, %v415
        %v418 = vmul.f32 %v416, %v416
        %v419 = vsel %vm405, %v417, 0.0
        %420 = vadd.xlane.f32.xlu0 %v419
        %v421 = vpop.xlane.xlu0 %420
        %v422 = vsel %vm405, %v418, 0.0
        %423 = vadd.xlane.f32.xlu0 %v422
        %v424 = vpop.xlane.xlu0 %423
        %v425 = vmul.f32 %v421, %v412
        %v426 = vmul.f32 %v424, %v412
        %v427 = vadd.f32 %v425, 1e-06
        %v428 = vadd.f32 %v426, 1e-06
        %v429 = vrsqrt.pop %v427
        %v430 = vrsqrt.pop %v428
        %v431 = vmul.f32 %v415, %v429
        %v432 = vmul.f32 %v416, %v430
        %v433 = vld [vmem:[%s4] sm:$0x1]
        %v435 = vlaneseq
        %v436 = vshrl.u32 %v435, 7
        %v437 = vsub.s32 0, %v436
        %v438 = vrot.slane %v433, %v437
        %v440 = vmul.f32 %v431, %v438
        %v441 = vmul.f32 %v432, %v438
        %v442 = vld [vmem:[%s5] sm:$0x1]
        %v444 = vlaneseq
        %v445 = vshrl.u32 %v444, 7
        %v446 = vsub.s32 0, %v445
        %v447 = vrot.slane %v442, %v446
        %v449 = vadd.f32 %v440, %v447
        %v450 = vadd.f32 %v441, %v447
        %v451 = vld [vmem:[%s388] sm:$0xff]
        %v452 = vld [vmem:[%s388 + $0x8] sm:$0xff]
        %v453 = vadd.f32 %v403, %v451
        %v454 = vadd.f32 %v404, %v452
        %v455 = vsel %vm405, %v453, 0.0
        %456 = vadd.xlane.f32.xlu0 %v455
        %v457 = vpop.xlane.xlu0 %456
        %v458 = vsel %vm405, %v454, 0.0
        %459 = vadd.xlane.f32.xlu0 %v458
        %v460 = vpop.xlane.xlu0 %459
        %v461 = vmul.f32 %v457, %v412
        %v462 = vmul.f32 %v460, %v412
        %v463 = vsub.f32 %v453, %v461
        %v464 = vsub.f32 %v454, %v462
        %v465 = vmul.f32 %v463, %v463
        %v466 = vmul.f32 %v464, %v464
        %v467 = vsel %vm405, %v465, 0.0
        %468 = vadd.xlane.f32.xlu0 %v467
        %v469 = vpop.xlane.xlu0 %468
        %v470 = vsel %vm405, %v466, 0.0
        %471 = vadd.xlane.f32.xlu0 %v470
        %v472 = vpop.xlane.xlu0 %471
        %v473 = vmul.f32 %v469, %v412
        %v474 = vmul.f32 %v472, %v412
        %v475 = vadd.f32 %v473, 1e-06
        %v476 = vadd.f32 %v474, 1e-06
        %v477 = vrsqrt.pop %v475
        %v478 = vrsqrt.pop %v476
        %v479 = vmul.f32 %v463, %v477
        %v480 = vmul.f32 %v464, %v478
        %v481 = vld [vmem:[%s2] sm:$0x1]
        %v483 = vlaneseq
        %v484 = vshrl.u32 %v483, 7
        %v485 = vsub.s32 0, %v484
        %v486 = vrot.slane %v481, %v485
        %v488 = vmul.f32 %v479, %v486
        %v489 = vmul.f32 %v480, %v486
        %v490 = vld [vmem:[%s3] sm:$0x1]
        %v492 = vlaneseq
        %v493 = vshrl.u32 %v492, 7
        %v494 = vsub.s32 0, %v493
        %v495 = vrot.slane %v490, %v494
        %v497 = vadd.f32 %v488, %v495
        %v498 = vadd.f32 %v489, %v495
        %v499 = vpack.c.bf16 %v498, %v497
        %v500 = vld [vmem:[#allocation2] sm:$0xf]
        %v501 = vld [vmem:[#allocation2 + $0x4] sm:$0xf]
        %v502 = vld [vmem:[#allocation2 + $0x8] sm:$0xf]
        %v503 = vld [vmem:[#allocation2 + $0xc] sm:$0xf]
        %v504 = vld [vmem:[#allocation2 + $0x10] sm:$0xf]
        %v505 = vld [vmem:[#allocation2 + $0x14] sm:$0xf]
        %v506 = vld [vmem:[#allocation2 + $0x18] sm:$0xf]
        %v507 = vld [vmem:[#allocation2 + $0x1c] sm:$0xf]
        %v516 = vunpack.c.l.b16 %v500
        %v517 = vunpack.c.l.b16 %v501
        %v518 = vunpack.c.l.b16 %v502
        %v519 = vunpack.c.l.b16 %v503
        %v520 = vunpack.c.l.b16 %v504
        %v521 = vunpack.c.l.b16 %v505
        %v522 = vunpack.c.l.b16 %v506
        %v523 = vunpack.c.l.b16 %v507
        %v524 = vpack.c.b16 %v517, %v516
        %v525 = vpack.c.b16 %v519, %v518
        %v526 = vpack.c.b16 %v521, %v520
        %v527 = vpack.c.b16 %v523, %v522
        %v533 = vsel %vm405, %v499, 0
        %535 = vmatprep.subr.bf16.mxu0 0
        %536 = vmatpush1.bf16.msra.mxu0 0
        %537 = vmatprep.subr.bf16.mxu0 0
        %538 = vmatpush1.bf16.msra.mxu0 0
        %539 = vmatprep.subr.bf16.mxu0 0
        %540 = vmatpush1.bf16.msra.mxu0 0
        %541 = vmatprep.subr.bf16.mxu0 0
        %542 = vmatpush1.bf16.msra.mxu0 0
        %543 = vmatprep.subr.bf16.mxu0 0
        %544 = vmatpush1.bf16.msra.mxu0 %v527
        %545 = vmatprep.subr.bf16.mxu0 0
        %546 = vmatpush1.bf16.msra.mxu0 %v526
        %547 = vmatprep.subr.bf16.mxu0 0
        %548 = vmatpush1.bf16.msra.mxu0 %v525
        %549 = vmatprep.subr.bf16.mxu0 0
        %550 = vmatpush1.bf16.msra.mxu0 %v524
        %551 = vmatprep.subr.bf16.mxu0 0
        %552 = vmatpush2.bf16.msra.mxu0 0
        %553 = vmatprep.subr.bf16.mxu0 0
        %554 = vmatpush2.bf16.msra.mxu0 0
        %555 = vmatprep.subr.bf16.mxu0 0
        %556 = vmatpush2.bf16.msra.mxu0 0
        %557 = vmatprep.subr.bf16.mxu0 0
        %558 = vmatpush2.bf16.msra.mxu0 0
        %559 = vmatprep.subr.bf16.mxu0 0
        %560 = vmatpush2.bf16.msra.mxu0 0
        %561 = vmatprep.subr.bf16.mxu0 0
        %562 = vmatpush2.bf16.msra.mxu0 0
        %563 = vmatprep.subr.bf16.mxu0 0
        %564 = vmatpush2.bf16.msra.mxu0 0
        %565 = vmatprep.subr.bf16.mxu0 0
        %566 = vmatpush2.bf16.msra.mxu0 0
        %567 = vmatprep.mubr.bf16.mxu0 0
        %568 = vmatmul.mubr.bf16.gmra.mxu0 %v533
        %v569 = vpop.f32.mrf.mxu0
        %v570 = vadd.f32 0.0, %v569
        %v571 = vpop.f32.mrf.mxu0
        %v572 = vpop.f32.mrf.mxu0
        %v573 = vadd.f32 0.0, %v572
        %v574 = vpop.f32.mrf.mxu0
        %575 = vdwg.mxu0
        %v576 = vpack.c.bf16 %v450, %v449
        %v577 = vld [vmem:[#allocation4] sm:$0xf]
        %v578 = vld [vmem:[#allocation4 + $0x4] sm:$0xf]
        %v579 = vld [vmem:[#allocation4 + $0x8] sm:$0xf]
        %v580 = vld [vmem:[#allocation4 + $0xc] sm:$0xf]
        %v581 = vld [vmem:[#allocation4 + $0x10] sm:$0xf]
        %v582 = vld [vmem:[#allocation4 + $0x14] sm:$0xf]
        %v583 = vld [vmem:[#allocation4 + $0x18] sm:$0xf]
        %v584 = vld [vmem:[#allocation4 + $0x1c] sm:$0xf]
        %v593 = vunpack.c.l.b16 %v577
        %v594 = vunpack.c.l.b16 %v578
        %v595 = vunpack.c.l.b16 %v579
        %v596 = vunpack.c.l.b16 %v580
        %v597 = vunpack.c.l.b16 %v581
        %v598 = vunpack.c.l.b16 %v582
        %v599 = vunpack.c.l.b16 %v583
        %v600 = vunpack.c.l.b16 %v584
        %v601 = vpack.c.b16 %v594, %v593
        %v602 = vpack.c.b16 %v596, %v595
        %v603 = vpack.c.b16 %v598, %v597
        %v604 = vpack.c.b16 %v600, %v599
        %v610 = vsel %vm405, %v576, 0
        %612 = vmatprep.subr.bf16.mxu0 0
        %613 = vmatpush1.bf16.msra.mxu0 0
        %614 = vmatprep.subr.bf16.mxu0 0
        %615 = vmatpush1.bf16.msra.mxu0 0
        %616 = vmatprep.subr.bf16.mxu0 0
        %617 = vmatpush1.bf16.msra.mxu0 0
        %618 = vmatprep.subr.bf16.mxu0 0
        %619 = vmatpush1.bf16.msra.mxu0 0
        %620 = vmatprep.subr.bf16.mxu0 0
        %621 = vmatpush1.bf16.msra.mxu0 %v604
        %622 = vmatprep.subr.bf16.mxu0 0
        %623 = vmatpush1.bf16.msra.mxu0 %v603
        %624 = vmatprep.subr.bf16.mxu0 0
        %625 = vmatpush1.bf16.msra.mxu0 %v602
        %626 = vmatprep.subr.bf16.mxu0 0
        %627 = vmatpush1.bf16.msra.mxu0 %v601
        %628 = vmatprep.subr.bf16.mxu0 0
        %629 = vmatpush2.bf16.msra.mxu0 0
        %630 = vmatprep.subr.bf16.mxu0 0
        %631 = vmatpush2.bf16.msra.mxu0 0
        %632 = vmatprep.subr.bf16.mxu0 0
        %633 = vmatpush2.bf16.msra.mxu0 0
        %634 = vmatprep.subr.bf16.mxu0 0
        %635 = vmatpush2.bf16.msra.mxu0 0
        %636 = vmatprep.subr.bf16.mxu0 0
        %637 = vmatpush2.bf16.msra.mxu0 0
        %638 = vmatprep.subr.bf16.mxu0 0
        %639 = vmatpush2.bf16.msra.mxu0 0
        %640 = vmatprep.subr.bf16.mxu0 0
        %641 = vmatpush2.bf16.msra.mxu0 0
        %642 = vmatprep.subr.bf16.mxu0 0
        %643 = vmatpush2.bf16.msra.mxu0 0
        %644 = vmatprep.mubr.bf16.mxu0 0
        %645 = vmatmul.mubr.bf16.gmra.mxu0 %v610
        %v646 = vpop.f32.mrf.mxu0
        %v647 = vadd.f32 0.0, %v646
        %v648 = vpop.f32.mrf.mxu0
        %v649 = vpop.f32.mrf.mxu0
        %v650 = vadd.f32 0.0, %v649
        %v651 = vpop.f32.mrf.mxu0
        %652 = vdwg.mxu0
        %v653 = vpack.c.bf16 %v573, %v570
        %v655 = vunpack.c.l.b16 %v653
        %v656 = vunpack.c.h.b16 %v653
        %v657 = vpack.c.b16 %v655, %v655
        %v658 = vpack.c.b16 %v656, %v656
        %vm661 = vcmask 519168
        %662 = vst.msk [vmem:[%s394] sm:$0xf] %vm661, %v657
        %663 = vst.msk [vmem:[%s394 + $0x4] sm:$0xf] %vm661, %v658
        %v664 = vpack.c.bf16 %v650, %v647
        %v666 = vunpack.c.l.b16 %v664
        %v667 = vunpack.c.h.b16 %v664
        %v668 = vpack.c.b16 %v666, %v666
        %v669 = vpack.c.b16 %v667, %v667
        %672 = vst.msk [vmem:[%s400] sm:$0xf] %vm661, %v668
        %673 = vst.msk [vmem:[%s400 + $0x4] sm:$0xf] %vm661, %v669
        %s674 = smul.u32 2, %s23
        %p675 = scmp.lt.s32.totalorder %s674, 7
        %s676 = scalar_select %p675, %s674, 7
        %s677 = smul.addr %s676, 4
        %s678 = scalar_lea.vmem %s8, %s677
        %s679 = smul.u32 2, %s23
        %p680 = scmp.lt.s32.totalorder %s679, 7
        %s681 = scalar_select %p680, %s679, 7
        %s682 = smul.addr %s681, 4
        %s683 = scalar_lea.vmem %s9, %s682
        // Predicated region
        $region61: #{attentive_block_forward.4} parent=51 // pred_check
          %p684 = pneg %p219
        $region62: #{attentive_block_forward.4} parent=51 // pred_check_branch
          %686 = sbr.rel (%p684) target = $region64
        $region63: #{attentive_block_forward.4} parent=51 // pred_region
          %s687 = smul.u32 2, %s23
        $region64: #{attentive_block_forward.4} parent=51 // pred_fallthru
          _
        // Predicated region
        $region65: #{attentive_block_forward.4} parent=51 // pred_check
          %p688 = pneg %p245
        $region66: #{attentive_block_forward.4} parent=51 // pred_check_branch
          %690 = sbr.rel (%p688) target = $region68
        $region67: #{attentive_block_forward.4} parent=51 // pred_region
          %s691 = smul.u32 2, %s23
        $region68: #{attentive_block_forward.4} parent=51 // pred_fallthru
          _
      $region52: #{attentive_block_forward.4} parent=5 // pred_fallthru
        _
      %p692 = scmp.le.s32.totalorder 2, %s18
      // Predicated region
      $region69: #{attentive_block_forward.4} parent=5 // pred_check
        %p693 = pneg %p692
      $region70: #{attentive_block_forward.4} parent=5 // pred_check_branch
        %695 = sbr.rel (%p693) target = $region72
      $region71: #{attentive_block_forward.4} parent=5 // pred_region
        %s696 = ssub.s32 %s18, 2
        // Predicated region
        $region73: #{attentive_block_forward.4} parent=71 // pred_check
          %p697 = pneg %p225
        $region74: #{attentive_block_forward.4} parent=71 // pred_check_branch
          %699 = sbr.rel (%p697) target = $region76
        $region75: #{attentive_block_forward.4} parent=71 // pred_region
          %s700 = smul.u32 2, %s24
          %p701 = scmp.lt.s32.totalorder %s700, 7
          %s702 = scalar_select %p701, %s700, 7
          %s703 = smul.addr %s702, 4
          %s704 = scalar_lea.vmem %s8, %s703
        $region76: #{attentive_block_forward.4} parent=71 // pred_fallthru
          _
        // Predicated region
        $region77: #{attentive_block_forward.4} parent=71 // pred_check
          %p705 = pneg %p251
        $region78: #{attentive_block_forward.4} parent=71 // pred_check_branch
          %707 = sbr.rel (%p705) target = $region80
        $region79: #{attentive_block_forward.4} parent=71 // pred_region
          %s708 = smul.u32 2, %s24
          %p709 = scmp.lt.s32.totalorder %s708, 7
          %s710 = scalar_select %p709, %s708, 7
          %s711 = smul.addr %s710, 4
          %s712 = scalar_lea.vmem %s9, %s711
        $region80: #{attentive_block_forward.4} parent=71 // pred_fallthru
          _
      $region72: #{attentive_block_forward.4} parent=5 // pred_fallthru
        _
    $region6: #{attentive_block_forward.4} parent=1 // loop_footer
      %s22 = sadd.s32 1, %s18
    $region7: #{attentive_block_forward.4} parent=1 // loop_footer_branch
      %17 = sbr.rel target = $region3
    $region8: #{attentive_block_forward.4} parent=1 // loop_exit
      _
    %713 = vsyncpa [#allocation3], 1
    %s714 = scalar_lea.sflag [#allocation3], 1
    %715 = vsyncpa %s714, 1
    %716 = vsyncpa [#allocation5], 1

// kernel: attentive_block_forward.5
$region0: #{attentive_block_forward.5}
  #allocation0 [shape = 'u32[]', space=smem, size = 0x4, offset = 0x4, fixed_abs, tag = 'smem constant byte address 0x4 - core index']
  #allocation1 [shape = 'u32[144,128]{1,0:T(1,128)}', space=vmem, size = 0x12000, scoped, tag = 'internal scratch']
  #allocation2 [shape = 'f32[8,64]{1,0:T(8,128)}', space=vmem, size = 0x1000, scoped, tag = 'scratch operand']
  %s0 = inlined_call_operand.vmem [shape: bf16[2,16,64], index: 0, kind: input, shape index: {}]
  %s1 = inlined_call_operand.vmem [shape: bf16[2,32,64], index: 1, kind: input, shape index: {}]
  %s2 = inlined_call_operand.vmem [shape: bf16[2,32,64], index: 2, kind: input, shape index: {}]
  %s3 = inlined_call_operand.vmem [shape: bf16[64,64], index: 3, kind: input, shape index: {}]
  %s4 = inlined_call_operand.vmem [shape: f32[1,64], index: 4, kind: input, shape index: {}]
  %s5 = inlined_call_operand.hbm [shape: f32[2,16,64], index: 5, kind: output, shape index: {}]
  %s6 = sld [smem:[#allocation0]]
  $region53: #{attentive_block_forward.5} parent=0
    _
  %s8 = ssub.s32 1, %s6
  %s9 = scalar_select 0, %s8, %s6
  $region1: #{attentive_block_forward.5} parent=0
    #allocation3 [shape = 'u8[8192]{0}', space=vmem, size = 0x2000, scoped, tag = 'output window, operand 0']
    #allocation4 [shape = 's32[2]{0}', space=sflag, size = 0x8, scoped, tag = 'scoped memory for attentive_block_forward.5']
    %10 = vsyncpa [#allocation4], 0
    %s11 = scalar_lea.sflag [#allocation4], 1
    %12 = vsyncpa %s11, 0
    loop: start=0, step=1, limit=6
    $region2: #{attentive_block_forward.5} parent=1 // loop_pre_header
      _
    $region3: #{attentive_block_forward.5} parent=1 // loop_header
      %s14 = sphi 0, %s18
      %p15 = scmp.ge.s32.totalorder %s14, 6
      %s21 = sphi 0, %s33
      %s22 = sphi 0, %s29
      %s23 = sphi 0, %s21
      %s24 = sphi 0, %s22
      %s25 = sphi 0, %s23
      %s26 = sphi 0, %s24
      %s38 = sphi 0, %s40
      %s41 = sphi 0, %s38
      %s42 = sphi 0, %s41
      %s58 = sphi 0, %s42
      %s64 = sphi 0, %s66
      %s67 = sphi 0, %s64
      %s68 = sphi 0, %s67
      %s84 = sphi 0, %s68
      %s90 = sphi 0, %s92
      %s93 = sphi 0, %s90
      %s94 = sphi 0, %s93
      %s110 = sphi 0, %s94
      %s114 = sphi 0, %s114
      %s116 = sphi 0, %s114
      %s117 = sphi 0, %s116
      %s131 = sphi 0, %s117
      %s135 = sphi 0, %s135
      %s137 = sphi 0, %s135
      %s138 = sphi 0, %s137
      %s152 = sphi 0, %s138
      %s160 = sphi 0, %s162
      %s163 = sphi 0, %s160
      %s164 = sphi 0, %s163
      %s180 = sphi 0, %s164
    $region4: #{attentive_block_forward.5} parent=1 // loop_header_branch
      %17 = sbr.rel (%p15) target = $region8
    $region5: #{attentive_block_forward.5} parent=1 // loop_body
      %s19 = ssub.s32 %s14, 1
      %s20 = ssub.s32 %s14, 2
      %s27 = sadd.s32 1, %s22
      %p28 = scmp.ge.s32.totalorder %s27, 2
      %s29 = scalar_select %p28, 0, %s27
      %s30 = sadd.s32 1, %s21
      %s31 = scalar_select %p28, %s30, %s21
      %p32 = scmp.ge.s32.totalorder %s31, 2
      %s33 = scalar_select %p32, 0, %s31
      %s34 = ssub.s32 %s21, %s33
      %s35 = ssub.s32 %s22, %s29
      %s36 = sor.u32 %s34, %s35
      %p37 = scmp.eq.s32.totalorder %s36, 0
      %s39 = sadd.s32 %s38, 1
      %s40 = scalar_select %p37, %s38, %s39
      %p43 = pneg %p37
      %p44 = scmp.eq.s32.totalorder %s14, 3
      %p45 = por %p43, %p44
      %p46 = scmp.ne.s32.totalorder %s38, %s41
      %p47 = scmp.eq.s32.totalorder %s14, 0
      %p48 = por %p46, %p47
      %p49 = scmp.ne.s32.totalorder %s38, %s41
      %p50 = scmp.eq.s32.totalorder %s19, 3
      %p51 = por %p49, %p50
      %p52 = scmp.ne.s32.totalorder %s41, %s42
      %p53 = scmp.eq.s32.totalorder %s19, 0
      %p54 = por %p52, %p53
      %p55 = scmp.ne.s32.totalorder %s41, %s42
      %p56 = scmp.eq.s32.totalorder %s20, 3
      %p57 = por %p55, %p56
      %p59 = scmp.ne.s32.totalorder %s42, %s58
      %p60 = scmp.eq.s32.totalorder %s20, 0
      %p61 = por %p59, %p60
      %s62 = ssub.s32 %s21, %s33
      %p63 = scmp.eq.s32.totalorder %s62, 0
      %s65 = sadd.s32 %s64, 1
      %s66 = scalar_select %p63, %s64, %s65
      %p69 = pneg %p63
      %p70 = scmp.eq.s32.totalorder %s14, 3
      %p71 = por %p69, %p70
      %p72 = scmp.ne.s32.totalorder %s64, %s67
      %p73 = scmp.eq.s32.totalorder %s14, 0
      %p74 = por %p72, %p73
      %p75 = scmp.ne.s32.totalorder %s64, %s67
      %p76 = scmp.eq.s32.totalorder %s19, 3
      %p77 = por %p75, %p76
      %p78 = scmp.ne.s32.totalorder %s67, %s68
      %p79 = scmp.eq.s32.totalorder %s19, 0
      %p80 = por %p78, %p79
      %p81 = scmp.ne.s32.totalorder %s67, %s68
      %p82 = scmp.eq.s32.totalorder %s20, 3
      %p83 = por %p81, %p82
      %p85 = scmp.ne.s32.totalorder %s68, %s84
      %p86 = scmp.eq.s32.totalorder %s20, 0
      %p87 = por %p85, %p86
      %s88 = ssub.s32 %s21, %s33
      %p89 = scmp.eq.s32.totalorder %s88, 0
      %s91 = sadd.s32 %s90, 1
      %s92 = scalar_select %p89, %s90, %s91
      %p95 = pneg %p89
      %p96 = scmp.eq.s32.totalorder %s14, 3
      %p97 = por %p95, %p96
      %p98 = scmp.ne.s32.totalorder %s90, %s93
      %p99 = scmp.eq.s32.totalorder %s14, 0
      %p100 = por %p98, %p99
      %p101 = scmp.ne.s32.totalorder %s90, %s93
      %p102 = scmp.eq.s32.totalorder %s19, 3
      %p103 = por %p101, %p102
      %p104 = scmp.ne.s32.totalorder %s93, %s94
      %p105 = scmp.eq.s32.totalorder %s19, 0
      %p106 = por %p104, %p105
      %p107 = scmp.ne.s32.totalorder %s93, %s94
      %p108 = scmp.eq.s32.totalorder %s20, 3
      %p109 = por %p107, %p108
      %p111 = scmp.ne.s32.totalorder %s94, %s110
      %p112 = scmp.eq.s32.totalorder %s20, 0
      %p113 = por %p111, %p112
      %s115 = sadd.s32 %s114, 1
      %p118 = scmp.eq.s32.totalorder %s14, 3
      %p119 = scmp.ne.s32.totalorder %s114, %s116
      %p120 = scmp.eq.s32.totalorder %s14, 0
      %p121 = por %p119, %p120
      %p122 = scmp.ne.s32.totalorder %s114, %s116
      %p123 = scmp.eq.s32.totalorder %s19, 3
      %p124 = por %p122, %p123
      %p125 = scmp.ne.s32.totalorder %s116, %s117
      %p126 = scmp.eq.s32.totalorder %s19, 0
      %p127 = por %p125, %p126
      %p128 = scmp.ne.s32.totalorder %s116, %s117
      %p129 = scmp.eq.s32.totalorder %s20, 3
      %p130 = por %p128, %p129
      %p132 = scmp.ne.s32.totalorder %s117, %s131
      %p133 = scmp.eq.s32.totalorder %s20, 0
      %p134 = por %p132, %p133
      %s136 = sadd.s32 %s135, 1
      %p139 = scmp.eq.s32.totalorder %s14, 3
      %p140 = scmp.ne.s32.totalorder %s135, %s137
      %p141 = scmp.eq.s32.totalorder %s14, 0
      %p142 = por %p140, %p141
      %p143 = scmp.ne.s32.totalorder %s135, %s137
      %p144 = scmp.eq.s32.totalorder %s19, 3
      %p145 = por %p143, %p144
      %p146 = scmp.ne.s32.totalorder %s137, %s138
      %p147 = scmp.eq.s32.totalorder %s19, 0
      %p148 = por %p146, %p147
      %p149 = scmp.ne.s32.totalorder %s137, %s138
      %p150 = scmp.eq.s32.totalorder %s20, 3
      %p151 = por %p149, %p150
      %p153 = scmp.ne.s32.totalorder %s138, %s152
      %p154 = scmp.eq.s32.totalorder %s20, 0
      %p155 = por %p153, %p154
      %s156 = ssub.s32 %s21, %s33
      %s157 = ssub.s32 %s22, %s29
      %s158 = sor.u32 %s156, %s157
      %p159 = scmp.eq.s32.totalorder %s158, 0
      %s161 = sadd.s32 %s160, 1
      %s162 = scalar_select %p159, %s160, %s161
      %p165 = pneg %p159
      %p166 = scmp.eq.s32.totalorder %s14, 3
      %p167 = por %p165, %p166
      %p168 = scmp.ne.s32.totalorder %s160, %s163
      %p169 = scmp.eq.s32.totalorder %s14, 0
      %p170 = por %p168, %p169
      %p171 = scmp.ne.s32.totalorder %s160, %s163
      %p172 = scmp.eq.s32.totalorder %s19, 3
      %p173 = por %p171, %p172
      %p174 = scmp.ne.s32.totalorder %s163, %s164
      %p175 = scmp.eq.s32.totalorder %s19, 0
      %p176 = por %p174, %p175
      %p177 = scmp.ne.s32.totalorder %s163, %s164
      %p178 = scmp.eq.s32.totalorder %s20, 3
      %p179 = por %p177, %p178
      %p181 = scmp.ne.s32.totalorder %s164, %s180
      %p182 = scmp.eq.s32.totalorder %s20, 0
      %p183 = por %p181, %p182
      %p184 = scmp.le.s32.totalorder 1, %s14
      %p185 = scmp.lt.s32.totalorder %s14, 5
      %p186 = pnand %p184, %p185
      %p187 = pneg %p186
      // Predicated region
      $region9: #{attentive_block_forward.5} parent=5 // pred_check
        _
      $region10: #{attentive_block_forward.5} parent=5 // pred_check_branch
        %189 = sbr.rel (%p186) target = $region12
      $region11: #{attentive_block_forward.5} parent=5 // pred_region
        %s190 = ssub.s32 %s14, 1
        // Predicated region
        $region13: #{attentive_block_forward.5} parent=11 // pred_check
          %p191 = pneg %p127
        $region14: #{attentive_block_forward.5} parent=11 // pred_check_branch
          %193 = sbr.rel (%p191) target = $region16
        $region15: #{attentive_block_forward.5} parent=11 // pred_region
          _
        $region16: #{attentive_block_forward.5} parent=11 // pred_fallthru
          _
        // Predicated region
        $region17: #{attentive_block_forward.5} parent=11 // pred_check
          %p194 = pneg %p148
        $region18: #{attentive_block_forward.5} parent=11 // pred_check_branch
          %196 = sbr.rel (%p194) target = $region20
        $region19: #{attentive_block_forward.5} parent=11 // pred_region
          _
        $region20: #{attentive_block_forward.5} parent=11 // pred_fallthru
          _
      $region12: #{attentive_block_forward.5} parent=5 // pred_fallthru
        _
      %p197 = scmp.lt.s32.totalorder %s14, 4
      // Predicated region
      $region21: #{attentive_block_forward.5} parent=5 // pred_check
        %p198 = pneg %p197
      $region22: #{attentive_block_forward.5} parent=5 // pred_check_branch
        %200 = sbr.rel (%p198) target = $region24
      $region23: #{attentive_block_forward.5} parent=5 // pred_region
        // Predicated region
        $region25: #{attentive_block_forward.5} parent=23 // pred_check
          %p201 = pneg %p48
        $region26: #{attentive_block_forward.5} parent=23 // pred_check_branch
          %203 = sbr.rel (%p201) target = $region28
        $region27: #{attentive_block_forward.5} parent=23 // pred_region
          %p204 = scmp.lt.s32.totalorder %s21, 1
          %s205 = scalar_select %p204, %s21, 1
          %p206 = scmp.lt.s32.totalorder %s22, 1
          %s207 = scalar_select %p206, %s22, 1
          %s208 = smul.addr %s205, 2
          %s209 = sadd.s32 %s207, %s208
          %s210 = smul.addr %s209, 4
          %s211 = scalar_lea.vmem %s0, %s210
        $region28: #{attentive_block_forward.5} parent=23 // pred_fallthru
          _
        // Predicated region
        $region29: #{attentive_block_forward.5} parent=23 // pred_check
          %p212 = pneg %p74
        $region30: #{attentive_block_forward.5} parent=23 // pred_check_branch
          %214 = sbr.rel (%p212) target = $region32
        $region31: #{attentive_block_forward.5} parent=23 // pred_region
          %p215 = scmp.lt.s32.totalorder %s21, 1
          %s216 = scalar_select %p215, %s21, 1
          %s217 = smul.addr %s216, 4
          %s218 = smul.addr %s217, 4
          %s219 = scalar_lea.vmem %s1, %s218
        $region32: #{attentive_block_forward.5} parent=23 // pred_fallthru
          _
        // Predicated region
        $region33: #{attentive_block_forward.5} parent=23 // pred_check
          %p220 = pneg %p100
        $region34: #{attentive_block_forward.5} parent=23 // pred_check_branch
          %222 = sbr.rel (%p220) target = $region36
        $region35: #{attentive_block_forward.5} parent=23 // pred_region
          %p223 = scmp.lt.s32.totalorder %s21, 1
          %s224 = scalar_select %p223, %s21, 1
          %s225 = smul.addr %s224, 4
          %s226 = smul.addr %s225, 4
          %s227 = scalar_lea.vmem %s2, %s226
        $region36: #{attentive_block_forward.5} parent=23 // pred_fallthru
          _
      $region24: #{attentive_block_forward.5} parent=5 // pred_fallthru
        _
      %p228 = scmp.le.s32.totalorder 1, %s14
      %p229 = scmp.lt.s32.totalorder %s14, 5
      %p230 = pnand %p228, %p229
      %p231 = pneg %p230
      // Predicated region
      $region37: #{attentive_block_forward.5} parent=5 // pred_check
        _
      $region38: #{attentive_block_forward.5} parent=5 // pred_check_branch
        %233 = sbr.rel (%p230) target = $region40
      $region39: #{attentive_block_forward.5} parent=5 // pred_region
        %s234 = ssub.s32 %s14, 1
        %p235 = scmp.lt.s32.totalorder %s23, 1
        %s236 = scalar_select %p235, %s23, 1
        %p237 = scmp.lt.s32.totalorder %s24, 1
        %s238 = scalar_select %p237, %s24, 1
        %s239 = smul.addr %s236, 2
        %s240 = sadd.s32 %s238, %s239
        %s241 = smul.addr %s240, 4
        %s242 = scalar_lea.vmem %s0, %s241
        %p243 = pneg %p54
        %p244 = pneg %p51
        %p245 = scmp.lt.s32.totalorder %s23, 1
        %s246 = scalar_select %p245, %s23, 1
        %s247 = smul.addr %s246, 4
        %s248 = smul.addr %s247, 4
        %s249 = scalar_lea.vmem %s1, %s248
        %p250 = pneg %p80
        %p251 = pneg %p77
        %p252 = scmp.lt.s32.totalorder %s23, 1
        %s253 = scalar_select %p252, %s23, 1
        %s254 = smul.addr %s253, 4
        %s255 = smul.addr %s254, 4
        %s256 = scalar_lea.vmem %s2, %s255
        %p257 = pneg %p106
        %p258 = pneg %p103
        %p259 = pneg %p127
        %p260 = pneg %p124
        %p261 = pneg %p148
        %p262 = pneg %p145
        %p263 = pneg %p176
        %p264 = pneg %p173
        %s265 = sand.u32 %s163, 1
        %s266 = scalar_lea.sflag [#allocation4], %s265
        %s267 = sand.u32 %s163, 1
        %s268 = smul.addr %s267, 8
        %s269 = scalar_lea.vmem [#allocation3], %s268
        %p270 = scmp.lt.s32.totalorder %s23, 1
        %s271 = scalar_select %p270, %s23, 1
        %p272 = scmp.lt.s32.totalorder %s24, 1
        %s273 = scalar_select %p272, %s24, 1
        %s274 = smul.addr %s271, 2
        %s275 = sadd.s32 %s273, %s274
        %s276 = smul.addr %s275, 4
        %s277 = scalar_lea.vmem %s0, %s276
        %p278 = scmp.lt.s32.totalorder %s23, 1
        %s279 = scalar_select %p278, %s23, 1
        %s280 = smul.addr %s279, 4
        %s281 = smul.addr %s280, 4
        %s282 = scalar_lea.vmem %s1, %s281
        %p283 = scmp.lt.s32.totalorder %s23, 1
        %s284 = scalar_select %p283, %s23, 1
        %s285 = smul.addr %s284, 4
        %s286 = smul.addr %s285, 4
        %s287 = scalar_lea.vmem %s2, %s286
        %v289 = vld [vmem:[%s277] sm:$0xf]
        %v290 = vld [vmem:[%s282] sm:$0xf]
        %v291 = vld [vmem:[%s282 + $0x4] sm:$0xf]
        %v292 = vld [vmem:[%s282 + $0x8] sm:$0xf]
        %v293 = vld [vmem:[%s282 + $0xc] sm:$0xf]
        %v294 = vld [vmem:[%s287] sm:$0xf]
        %v295 = vld [vmem:[%s287 + $0x4] sm:$0xf]
        %v296 = vld [vmem:[%s287 + $0x8] sm:$0xf]
        %v297 = vld [vmem:[%s287 + $0xc] sm:$0xf]
        %v302 = vunpack.c.l.b16 %v290
        %v303 = vunpack.c.l.b16 %v291
        %v304 = vunpack.c.l.b16 %v292
        %v305 = vunpack.c.l.b16 %v293
        %v306 = vpack.c.b16 %v303, %v302
        %v307 = vpack.c.b16 %v305, %v304
        %vm308 = vcmask 64512
        %v310 = vsel %vm308, %v289, 0
        %v313 = vsel %vm308, %v306, 0
        %v316 = vsel %vm308, %v307, 0
        %318 = vmatprep.subr.bf16.mxu0 0
        %319 = vmatpush1.bf16.xpose.msra.mxu0 0
        %320 = vmatprep.subr.bf16.mxu0 0
        %321 = vmatpush1.bf16.xpose.msra.mxu0 0
        %322 = vmatprep.subr.bf16.mxu0 0
        %323 = vmatpush1.bf16.xpose.msra.mxu0 0
        %324 = vmatprep.subr.bf16.mxu0 0
        %325 = vmatpush1.bf16.xpose.msra.mxu0 0
        %326 = vmatprep.subr.bf16.mxu0 0
        %327 = vmatpush1.bf16.xpose.msra.mxu0 0
        %328 = vmatprep.subr.bf16.mxu0 0
        %329 = vmatpush1.bf16.xpose.msra.mxu0 0
        %330 = vmatprep.subr.bf16.mxu0 0
        %331 = vmatpush1.bf16.xpose.msra.mxu0 %v316
        %332 = vmatprep.subr.bf16.mxu0 0
        %333 = vmatpush1.bf16.xpose.msra.mxu0 %v313
        %334 = vmatprep.subr.bf16.mxu0 0
        %335 = vmatpush2.bf16.xpose.msra.mxu0 0
        %336 = vmatprep.subr.bf16.mxu0 0
        %337 = vmatpush2.bf16.xpose.msra.mxu0 0
        %338 = vmatprep.subr.bf16.mxu0 0
        %339 = vmatpush2.bf16.xpose.msra.mxu0 0
        %340 = vmatprep.subr.bf16.mxu0 0
        %341 = vmatpush2.bf16.xpose.msra.mxu0 0
        %342 = vmatprep.subr.bf16.mxu0 0
        %343 = vmatpush2.bf16.xpose.msra.mxu0 0
        %344 = vmatprep.subr.bf16.mxu0 0
        %345 = vmatpush2.bf16.xpose.msra.mxu0 0
        %346 = vmatprep.subr.bf16.mxu0 0
        %347 = vmatpush2.bf16.xpose.msra.mxu0 0
        %348 = vmatprep.subr.bf16.mxu0 0
        %349 = vmatpush2.bf16.xpose.msra.mxu0 0
        %350 = vmatprep.mubr.bf16.mxu0 0
        %351 = vmatmul.mubr.bf16.gmra.mxu0 %v310
        %v352 = vpop.f32.mrf.mxu0
        %v353 = vadd.f32 0.0, %v352
        %v354 = vpop.f32.mrf.mxu0
        %v355 = vpop.f32.mrf.mxu0
        %v356 = vpop.f32.mrf.mxu0
        %357 = vdwg.mxu0
        %vm358 = vcmask 261120
        %v359 = vsel %vm358, %v353, -inf
        %360 = vmax.xlane.f32.xlu0 %v359
        %v361 = vpop.xlane.xlu0 %360
        %v362 = vsub.f32 %v353, %v361
        %v363 = vpack.c.bf16 %v362, %v362
        %v365 = vmul.bf16 %v363, 1069105081
        %v366 = vpow.bf16.pop %v365
        %v367 = vunpack.c.l.bf16 %v366
        %v368 = vsel %vm358, %v367, 0.0
        %369 = vadd.xlane.f32.xlu0 %v368
        %v370 = vpop.xlane.xlu0 %369
        %v375 = vunpack.c.l.b16 %v294
        %v376 = vunpack.c.l.b16 %v295
        %v377 = vunpack.c.l.b16 %v296
        %v378 = vunpack.c.l.b16 %v297
        %v379 = vpack.c.b16 %v376, %v375
        %v380 = vpack.c.b16 %v378, %v377
        %v384 = vsel %vm358, %v366, 0
        %386 = vmatprep.subr.bf16.mxu0 0
        %387 = vmatpush1.bf16.msra.mxu0 0
        %388 = vmatprep.subr.bf16.mxu0 0
        %389 = vmatpush1.bf16.msra.mxu0 0
        %390 = vmatprep.subr.bf16.mxu0 0
        %391 = vmatpush1.bf16.msra.mxu0 0
        %392 = vmatprep.subr.bf16.mxu0 0
        %393 = vmatpush1.bf16.msra.mxu0 0
        %394 = vmatprep.subr.bf16.mxu0 0
        %395 = vmatpush1.bf16.msra.mxu0 0
        %396 = vmatprep.subr.bf16.mxu0 0
        %397 = vmatpush1.bf16.msra.mxu0 0
        %398 = vmatprep.subr.bf16.mxu0 0
        %399 = vmatpush1.bf16.msra.mxu0 %v380
        %400 = vmatprep.subr.bf16.mxu0 0
        %401 = vmatpush1.bf16.msra.mxu0 %v379
        %402 = vmatprep.subr.bf16.mxu0 0
        %403 = vmatpush2.bf16.msra.mxu0 0
        %404 = vmatprep.subr.bf16.mxu0 0
        %405 = vmatpush2.bf16.msra.mxu0 0
        %406 = vmatprep.subr.bf16.mxu0 0
        %407 = vmatpush2.bf16.msra.mxu0 0
        %408 = vmatprep.subr.bf16.mxu0 0
        %409 = vmatpush2.bf16.msra.mxu0 0
        %410 = vmatprep.subr.bf16.mxu0 0
        %411 = vmatpush2.bf16.msra.mxu0 0
        %412 = vmatprep.subr.bf16.mxu0 0
        %413 = vmatpush2.bf16.msra.mxu0 0
        %414 = vmatprep.subr.bf16.mxu0 0
        %415 = vmatpush2.bf16.msra.mxu0 0
        %416 = vmatprep.subr.bf16.mxu0 0
        %417 = vmatpush2.bf16.msra.mxu0 0
        %418 = vmatprep.mubr.bf16.mxu0 0
        %419 = vmatmul.mubr.bf16.gmra.mxu0 %v384
        %v420 = vpop.f32.mrf.mxu0
        %v421 = vadd.f32 0.0, %v420
        %v422 = vpop.f32.mrf.mxu0
        %v423 = vpop.f32.mrf.mxu0
        %v424 = vpop.f32.mrf.mxu0
        %425 = vdwg.mxu0
        %v426 = vrcp.pop %v370
        %v427 = vmul.f32 %v421, %v426
        %428 = vst.msk [vmem:[#allocation2] sm:$0xff] %vm308, %v427
        %v430 = vunpack.c.l.b16 %v289
        %v431 = vpack.c.b16 %v430, %v430
        %432 = vrot.lane.b32.xlu0 %v431, 120
        %v433 = vpop.permute.xlu0 %432
        %434 = vrot.lane.b32.xlu0 %v306, 120
        %v435 = vpop.permute.xlu0 %434
        %436 = vrot.lane.b32.xlu0 %v307, 120
        %v437 = vpop.permute.xlu0 %436
        %v439 = vsel %vm308, %v433, 0
        %v442 = vsel %vm308, %v435, 0
        %v445 = vsel %vm308, %v437, 0
        %447 = vmatprep.subr.bf16.mxu0 0
        %448 = vmatpush1.bf16.xpose.msra.mxu0 0
        %449 = vmatprep.subr.bf16.mxu0 0
        %450 = vmatpush1.bf16.xpose.msra.mxu0 0
        %451 = vmatprep.subr.bf16.mxu0 0
        %452 = vmatpush1.bf16.xpose.msra.mxu0 0
        %453 = vmatprep.subr.bf16.mxu0 0
        %454 = vmatpush1.bf16.xpose.msra.mxu0 0
        %455 = vmatprep.subr.bf16.mxu0 0
        %456 = vmatpush1.bf16.xpose.msra.mxu0 0
        %457 = vmatprep.subr.bf16.mxu0 0
        %458 = vmatpush1.bf16.xpose.msra.mxu0 0
        %459 = vmatprep.subr.bf16.mxu0 0
        %460 = vmatpush1.bf16.xpose.msra.mxu0 %v445
        %461 = vmatprep.subr.bf16.mxu0 0
        %462 = vmatpush1.bf16.xpose.msra.mxu0 %v442
        %463 = vmatprep.subr.bf16.mxu0 0
        %464 = vmatpush2.bf16.xpose.msra.mxu0 0
        %465 = vmatprep.subr.bf16.mxu0 0
        %466 = vmatpush2.bf16.xpose.msra.mxu0 0
        %467 = vmatprep.subr.bf16.mxu0 0
        %468 = vmatpush2.bf16.xpose.msra.mxu0 0
        %469 = vmatprep.subr.bf16.mxu0 0
        %470 = vmatpush2.bf16.xpose.msra.mxu0 0
        %471 = vmatprep.subr.bf16.mxu0 0
        %472 = vmatpush2.bf16.xpose.msra.mxu0 0
        %473 = vmatprep.subr.bf16.mxu0 0
        %474 = vmatpush2.bf16.xpose.msra.mxu0 0
        %475 = vmatprep.subr.bf16.mxu0 0
        %476 = vmatpush2.bf16.xpose.msra.mxu0 0
        %477 = vmatprep.subr.bf16.mxu0 0
        %478 = vmatpush2.bf16.xpose.msra.mxu0 0
        %479 = vmatprep.mubr.bf16.mxu0 0
        %480 = vmatmul.mubr.bf16.gmra.mxu0 %v439
        %v481 = vpop.f32.mrf.mxu0
        %v482 = vadd.f32 0.0, %v481
        %v483 = vpop.f32.mrf.mxu0
        %v484 = vpop.f32.mrf.mxu0
        %v485 = vpop.f32.mrf.mxu0
        %486 = vdwg.mxu0
        %v487 = vsel %vm358, %v482, -inf
        %488 = vmax.xlane.f32.xlu0 %v487
        %v489 = vpop.xlane.xlu0 %488
        %v490 = vsub.f32 %v482, %v489
        %v491 = vpack.c.bf16 %v490, %v490
        %v493 = vmul.bf16 %v491, 1069105081
        %v494 = vpow.bf16.pop %v493
        %v495 = vunpack.c.l.bf16 %v494
        %v496 = vsel %vm358, %v495, 0.0
        %497 = vadd.xlane.f32.xlu0 %v496
        %v498 = vpop.xlane.xlu0 %497
        %499 = vrot.lane.b32.xlu0 %v379, 120
        %v500 = vpop.permute.xlu0 %499
        %501 = vrot.lane.b32.xlu0 %v380, 120
        %v502 = vpop.permute.xlu0 %501
        %v506 = vsel %vm358, %v494, 0
        %508 = vmatprep.subr.bf16.mxu0 0
        %509 = vmatpush1.bf16.msra.mxu0 0
        %510 = vmatprep.subr.bf16.mxu0 0
        %511 = vmatpush1.bf16.msra.mxu0 0
        %512 = vmatprep.subr.bf16.mxu0 0
        %513 = vmatpush1.bf16.msra.mxu0 0
        %514 = vmatprep.subr.bf16.mxu0 0
        %515 = vmatpush1.bf16.msra.mxu0 0
        %516 = vmatprep.subr.bf16.mxu0 0
        %517 = vmatpush1.bf16.msra.mxu0 0
        %518 = vmatprep.subr.bf16.mxu0 0
        %519 = vmatpush1.bf16.msra.mxu0 0
        %520 = vmatprep.subr.bf16.mxu0 0
        %521 = vmatpush1.bf16.msra.mxu0 %v502
        %522 = vmatprep.subr.bf16.mxu0 0
        %523 = vmatpush1.bf16.msra.mxu0 %v500
        %524 = vmatprep.subr.bf16.mxu0 0
        %525 = vmatpush2.bf16.msra.mxu0 0
        %526 = vmatprep.subr.bf16.mxu0 0
        %527 = vmatpush2.bf16.msra.mxu0 0
        %528 = vmatprep.subr.bf16.mxu0 0
        %529 = vmatpush2.bf16.msra.mxu0 0
        %530 = vmatprep.subr.bf16.mxu0 0
        %531 = vmatpush2.bf16.msra.mxu0 0
        %532 = vmatprep.subr.bf16.mxu0 0
        %533 = vmatpush2.bf16.msra.mxu0 0
        %534 = vmatprep.subr.bf16.mxu0 0
        %535 = vmatpush2.bf16.msra.mxu0 0
        %536 = vmatprep.subr.bf16.mxu0 0
        %537 = vmatpush2.bf16.msra.mxu0 0
        %538 = vmatprep.subr.bf16.mxu0 0
        %539 = vmatpush2.bf16.msra.mxu0 0
        %540 = vmatprep.mubr.bf16.mxu0 0
        %541 = vmatmul.mubr.bf16.gmra.mxu0 %v506
        %v542 = vpop.f32.mrf.mxu0
        %v543 = vadd.f32 0.0, %v542
        %v544 = vpop.f32.mrf.mxu0
        %v545 = vpop.f32.mrf.mxu0
        %v546 = vpop.f32.mrf.mxu0
        %547 = vdwg.mxu0
        %v548 = vrcp.pop %v498
        %v549 = vmul.f32 %v543, %v548
        %551 = vrot.lane.b32.xlu0 %v549, 8
        %v552 = vpop.permute.xlu0 %551
        %vm554 = vcmask 130112
        %555 = vst.msk [vmem:[#allocation2] sm:$0xff] %vm554, %v552
        %556 = vrot.lane.b32.xlu0 %v431, 112
        %v557 = vpop.permute.xlu0 %556
        %558 = vrot.lane.b32.xlu0 %v306, 112
        %v559 = vpop.permute.xlu0 %558
        %560 = vrot.lane.b32.xlu0 %v307, 112
        %v561 = vpop.permute.xlu0 %560
        %v563 = vsel %vm308, %v557, 0
        %v566 = vsel %vm308, %v559, 0
        %v569 = vsel %vm308, %v561, 0
        %571 = vmatprep.subr.bf16.mxu0 0
        %572 = vmatpush1.bf16.xpose.msra.mxu0 0
        %573 = vmatprep.subr.bf16.mxu0 0
        %574 = vmatpush1.bf16.xpose.msra.mxu0 0
        %575 = vmatprep.subr.bf16.mxu0 0
        %576 = vmatpush1.bf16.xpose.msra.mxu0 0
        %577 = vmatprep.subr.bf16.mxu0 0
        %578 = vmatpush1.bf16.xpose.msra.mxu0 0
        %579 = vmatprep.subr.bf16.mxu0 0
        %580 = vmatpush1.bf16.xpose.msra.mxu0 0
        %581 = vmatprep.subr.bf16.mxu0 0
        %582 = vmatpush1.bf16.xpose.msra.mxu0 0
        %583 = vmatprep.subr.bf16.mxu0 0
        %584 = vmatpush1.bf16.xpose.msra.mxu0 %v569
        %585 = vmatprep.subr.bf16.mxu0 0
        %586 = vmatpush1.bf16.xpose.msra.mxu0 %v566
        %587 = vmatprep.subr.bf16.mxu0 0
        %588 = vmatpush2.bf16.xpose.msra.mxu0 0
        %589 = vmatprep.subr.bf16.mxu0 0
        %590 = vmatpush2.bf16.xpose.msra.mxu0 0
        %591 = vmatprep.subr.bf16.mxu0 0
        %592 = vmatpush2.bf16.xpose.msra.mxu0 0
        %593 = vmatprep.subr.bf16.mxu0 0
        %594 = vmatpush2.bf16.xpose.msra.mxu0 0
        %595 = vmatprep.subr.bf16.mxu0 0
        %596 = vmatpush2.bf16.xpose.msra.mxu0 0
        %597 = vmatprep.subr.bf16.mxu0 0
        %598 = vmatpush2.bf16.xpose.msra.mxu0 0
        %599 = vmatprep.subr.bf16.mxu0 0
        %600 = vmatpush2.bf16.xpose.msra.mxu0 0
        %601 = vmatprep.subr.bf16.mxu0 0
        %602 = vmatpush2.bf16.xpose.msra.mxu0 0
        %603 = vmatprep.mubr.bf16.mxu0 0
        %604 = vmatmul.mubr.bf16.gmra.mxu0 %v563
        %v605 = vpop.f32.mrf.mxu0
        %v606 = vadd.f32 0.0, %v605
        %v607 = vpop.f32.mrf.mxu0
        %v608 = vpop.f32.mrf.mxu0
        %v609 = vpop.f32.mrf.mxu0
        %610 = vdwg.mxu0
        %v611 = vsel %vm358, %v606, -inf
        %612 = vmax.xlane.f32.xlu0 %v611
        %v613 = vpop.xlane.xlu0 %612
        %v614 = vsub.f32 %v606, %v613
        %v615 = vpack.c.bf16 %v614, %v614
        %v617 = vmul.bf16 %v615, 1069105081
        %v618 = vpow.bf16.pop %v617
        %v619 = vunpack.c.l.bf16 %v618
        %v620 = vsel %vm358, %v619, 0.0
        %621 = vadd.xlane.f32.xlu0 %v620
        %v622 = vpop.xlane.xlu0 %621
        %623 = vrot.lane.b32.xlu0 %v379, 112
        %v624 = vpop.permute.xlu0 %623
        %625 = vrot.lane.b32.xlu0 %v380, 112
        %v626 = vpop.permute.xlu0 %625
        %v630 = vsel %vm358, %v618, 0
        %632 = vmatprep.subr.bf16.mxu0 0
        %633 = vmatpush1.bf16.msra.mxu0 0
        %634 = vmatprep.subr.bf16.mxu0 0
        %635 = vmatpush1.bf16.msra.mxu0 0
        %636 = vmatprep.subr.bf16.mxu0 0
        %637 = vmatpush1.bf16.msra.mxu0 0
        %638 = vmatprep.subr.bf16.mxu0 0
        %639 = vmatpush1.bf16.msra.mxu0 0
        %640 = vmatprep.subr.bf16.mxu0 0
        %641 = vmatpush1.bf16.msra.mxu0 0
        %642 = vmatprep.subr.bf16.mxu0 0
        %643 = vmatpush1.bf16.msra.mxu0 0
        %644 = vmatprep.subr.bf16.mxu0 0
        %645 = vmatpush1.bf16.msra.mxu0 %v626
        %646 = vmatprep.subr.bf16.mxu0 0
        %647 = vmatpush1.bf16.msra.mxu0 %v624
        %648 = vmatprep.subr.bf16.mxu0 0
        %649 = vmatpush2.bf16.msra.mxu0 0
        %650 = vmatprep.subr.bf16.mxu0 0
        %651 = vmatpush2.bf16.msra.mxu0 0
        %652 = vmatprep.subr.bf16.mxu0 0
        %653 = vmatpush2.bf16.msra.mxu0 0
        %654 = vmatprep.subr.bf16.mxu0 0
        %655 = vmatpush2.bf16.msra.mxu0 0
        %656 = vmatprep.subr.bf16.mxu0 0
        %657 = vmatpush2.bf16.msra.mxu0 0
        %658 = vmatprep.subr.bf16.mxu0 0
        %659 = vmatpush2.bf16.msra.mxu0 0
        %660 = vmatprep.subr.bf16.mxu0 0
        %661 = vmatpush2.bf16.msra.mxu0 0
        %662 = vmatprep.subr.bf16.mxu0 0
        %663 = vmatpush2.bf16.msra.mxu0 0
        %664 = vmatprep.mubr.bf16.mxu0 0
        %665 = vmatmul.mubr.bf16.gmra.mxu0 %v630
        %v666 = vpop.f32.mrf.mxu0
        %v667 = vadd.f32 0.0, %v666
        %v668 = vpop.f32.mrf.mxu0
        %v669 = vpop.f32.mrf.mxu0
        %v670 = vpop.f32.mrf.mxu0
        %671 = vdwg.mxu0
        %v672 = vrcp.pop %v622
        %v673 = vmul.f32 %v667, %v672
        %675 = vrot.lane.b32.xlu0 %v673, 16
        %v676 = vpop.permute.xlu0 %675
        %vm678 = vcmask 195712
        %679 = vst.msk [vmem:[#allocation2] sm:$0xff] %vm678, %v676
        %680 = vrot.lane.b32.xlu0 %v431, 104
        %v681 = vpop.permute.xlu0 %680
        %682 = vrot.lane.b32.xlu0 %v306, 104
        %v683 = vpop.permute.xlu0 %682
        %684 = vrot.lane.b32.xlu0 %v307, 104
        %v685 = vpop.permute.xlu0 %684
        %v687 = vsel %vm308, %v681, 0
        %v690 = vsel %vm308, %v683, 0
        %v693 = vsel %vm308, %v685, 0
        %695 = vmatprep.subr.bf16.mxu0 0
        %696 = vmatpush1.bf16.xpose.msra.mxu0 0
        %697 = vmatprep.subr.bf16.mxu0 0
        %698 = vmatpush1.bf16.xpose.msra.mxu0 0
        %699 = vmatprep.subr.bf16.mxu0 0
        %700 = vmatpush1.bf16.xpose.msra.mxu0 0
        %701 = vmatprep.subr.bf16.mxu0 0
        %702 = vmatpush1.bf16.xpose.msra.mxu0 0
        %703 = vmatprep.subr.bf16.mxu0 0
        %704 = vmatpush1.bf16.xpose.msra.mxu0 0
        %705 = vmatprep.subr.bf16.mxu0 0
        %706 = vmatpush1.bf16.xpose.msra.mxu0 0
        %707 = vmatprep.subr.bf16.mxu0 0
        %708 = vmatpush1.bf16.xpose.msra.mxu0 %v693
        %709 = vmatprep.subr.bf16.mxu0 0
        %710 = vmatpush1.bf16.xpose.msra.mxu0 %v690
        %711 = vmatprep.subr.bf16.mxu0 0
        %712 = vmatpush2.bf16.xpose.msra.mxu0 0
        %713 = vmatprep.subr.bf16.mxu0 0
        %714 = vmatpush2.bf16.xpose.msra.mxu0 0
        %715 = vmatprep.subr.bf16.mxu0 0
        %716 = vmatpush2.bf16.xpose.msra.mxu0 0
        %717 = vmatprep.subr.bf16.mxu0 0
        %718 = vmatpush2.bf16.xpose.msra.mxu0 0
        %719 = vmatprep.subr.bf16.mxu0 0
        %720 = vmatpush2.bf16.xpose.msra.mxu0 0
        %721 = vmatprep.subr.bf16.mxu0 0
        %722 = vmatpush2.bf16.xpose.msra.mxu0 0
        %723 = vmatprep.subr.bf16.mxu0 0
        %724 = vmatpush2.bf16.xpose.msra.mxu0 0
        %725 = vmatprep.subr.bf16.mxu0 0
        %726 = vmatpush2.bf16.xpose.msra.mxu0 0
        %727 = vmatprep.mubr.bf16.mxu0 0
        %728 = vmatmul.mubr.bf16.gmra.mxu0 %v687
        %v729 = vpop.f32.mrf.mxu0
        %v730 = vadd.f32 0.0, %v729
        %v731 = vpop.f32.mrf.mxu0
        %v732 = vpop.f32.mrf.mxu0
        %v733 = vpop.f32.mrf.mxu0
        %734 = vdwg.mxu0
        %v735 = vsel %vm358, %v730, -inf
        %736 = vmax.xlane.f32.xlu0 %v735
        %v737 = vpop.xlane.xlu0 %736
        %v738 = vsub.f32 %v730, %v737
        %v739 = vpack.c.bf16 %v738, %v738
        %v741 = vmul.bf16 %v739, 1069105081
        %v742 = vpow.bf16.pop %v741
        %v743 = vunpack.c.l.bf16 %v742
        %v744 = vsel %vm358, %v743, 0.0
        %745 = vadd.xlane.f32.xlu0 %v744
        %v746 = vpop.xlane.xlu0 %745
        %747 = vrot.lane.b32.xlu0 %v379, 104
        %v748 = vpop.permute.xlu0 %747
        %749 = vrot.lane.b32.xlu0 %v380, 104
        %v750 = vpop.permute.xlu0 %749
        %v754 = vsel %vm358, %v742, 0
        %756 = vmatprep.subr.bf16.mxu0 0
        %757 = vmatpush1.bf16.msra.mxu0 0
        %758 = vmatprep.subr.bf16.mxu0 0
        %759 = vmatpush1.bf16.msra.mxu0 0
        %760 = vmatprep.subr.bf16.mxu0 0
        %761 = vmatpush1.bf16.msra.mxu0 0
        %762 = vmatprep.subr.bf16.mxu0 0
        %763 = vmatpush1.bf16.msra.mxu0 0
        %764 = vmatprep.subr.bf16.mxu0 0
        %765 = vmatpush1.bf16.msra.mxu0 0
        %766 = vmatprep.subr.bf16.mxu0 0
        %767 = vmatpush1.bf16.msra.mxu0 0
        %768 = vmatprep.subr.bf16.mxu0 0
        %769 = vmatpush1.bf16.msra.mxu0 %v750
        %770 = vmatprep.subr.bf16.mxu0 0
        %771 = vmatpush1.bf16.msra.mxu0 %v748
        %772 = vmatprep.subr.bf16.mxu0 0
        %773 = vmatpush2.bf16.msra.mxu0 0
        %774 = vmatprep.subr.bf16.mxu0 0
        %775 = vmatpush2.bf16.msra.mxu0 0
        %776 = vmatprep.subr.bf16.mxu0 0
        %777 = vmatpush2.bf16.msra.mxu0 0
        %778 = vmatprep.subr.bf16.mxu0 0
        %779 = vmatpush2.bf16.msra.mxu0 0
        %780 = vmatprep.subr.bf16.mxu0 0
        %781 = vmatpush2.bf16.msra.mxu0 0
        %782 = vmatprep.subr.bf16.mxu0 0
        %783 = vmatpush2.bf16.msra.mxu0 0
        %784 = vmatprep.subr.bf16.mxu0 0
        %785 = vmatpush2.bf16.msra.mxu0 0
        %786 = vmatprep.subr.bf16.mxu0 0
        %787 = vmatpush2.bf16.msra.mxu0 0
        %788 = vmatprep.mubr.bf16.mxu0 0
        %789 = vmatmul.mubr.bf16.gmra.mxu0 %v754
        %v790 = vpop.f32.mrf.mxu0
        %v791 = vadd.f32 0.0, %v790
        %v792 = vpop.f32.mrf.mxu0
        %v793 = vpop.f32.mrf.mxu0
        %v794 = vpop.f32.mrf.mxu0
        %795 = vdwg.mxu0
        %v796 = vrcp.pop %v746
        %v797 = vmul.f32 %v791, %v796
        %799 = vrot.lane.b32.xlu0 %v797, 24
        %v800 = vpop.permute.xlu0 %799
        %vm802 = vcmask 261312
        %803 = vst.msk [vmem:[#allocation2] sm:$0xff] %vm802, %v800
        %804 = vrot.lane.b32.xlu0 %v431, 96
        %v805 = vpop.permute.xlu0 %804
        %806 = vrot.lane.b32.xlu0 %v306, 96
        %v807 = vpop.permute.xlu0 %806
        %808 = vrot.lane.b32.xlu0 %v307, 96
        %v809 = vpop.permute.xlu0 %808
        %v811 = vsel %vm308, %v805, 0
        %v814 = vsel %vm308, %v807, 0
        %v817 = vsel %vm308, %v809, 0
        %819 = vmatprep.subr.bf16.mxu0 0
        %820 = vmatpush1.bf16.xpose.msra.mxu0 0
        %821 = vmatprep.subr.bf16.mxu0 0
        %822 = vmatpush1.bf16.xpose.msra.mxu0 0
        %823 = vmatprep.subr.bf16.mxu0 0
        %824 = vmatpush1.bf16.xpose.msra.mxu0 0
        %825 = vmatprep.subr.bf16.mxu0 0
        %826 = vmatpush1.bf16.xpose.msra.mxu0 0
        %827 = vmatprep.subr.bf16.mxu0 0
        %828 = vmatpush1.bf16.xpose.msra.mxu0 0
        %829 = vmatprep.subr.bf16.mxu0 0
        %830 = vmatpush1.bf16.xpose.msra.mxu0 0
        %831 = vmatprep.subr.bf16.mxu0 0
        %832 = vmatpush1.bf16.xpose.msra.mxu0 %v817
        %833 = vmatprep.subr.bf16.mxu0 0
        %834 = vmatpush1.bf16.xpose.msra.mxu0 %v814
        %835 = vmatprep.subr.bf16.mxu0 0
        %836 = vmatpush2.bf16.xpose.msra.mxu0 0
        %837 = vmatprep.subr.bf16.mxu0 0
        %838 = vmatpush2.bf16.xpose.msra.mxu0 0
        %839 = vmatprep.subr.bf16.mxu0 0
        %840 = vmatpush2.bf16.xpose.msra.mxu0 0
        %841 = vmatprep.subr.bf16.mxu0 0
        %842 = vmatpush2.bf16.xpose.msra.mxu0 0
        %843 = vmatprep.subr.bf16.mxu0 0
        %844 = vmatpush2.bf16.xpose.msra.mxu0 0
        %845 = vmatprep.subr.bf16.mxu0 0
        %846 = vmatpush2.bf16.xpose.msra.mxu0 0
        %847 = vmatprep.subr.bf16.mxu0 0
        %848 = vmatpush2.bf16.xpose.msra.mxu0 0
        %849 = vmatprep.subr.bf16.mxu0 0
        %850 = vmatpush2.bf16.xpose.msra.mxu0 0
        %851 = vmatprep.mubr.bf16.mxu0 0
        %852 = vmatmul.mubr.bf16.gmra.mxu0 %v811
        %v853 = vpop.f32.mrf.mxu0
        %v854 = vadd.f32 0.0, %v853
        %v855 = vpop.f32.mrf.mxu0
        %v856 = vpop.f32.mrf.mxu0
        %v857 = vpop.f32.mrf.mxu0
        %858 = vdwg.mxu0
        %v859 = vsel %vm358, %v854, -inf
        %860 = vmax.xlane.f32.xlu0 %v859
        %v861 = vpop.xlane.xlu0 %860
        %v862 = vsub.f32 %v854, %v861
        %v863 = vpack.c.bf16 %v862, %v862
        %v865 = vmul.bf16 %v863, 1069105081
        %v866 = vpow.bf16.pop %v865
        %v867 = vunpack.c.l.bf16 %v866
        %v868 = vsel %vm358, %v867, 0.0
        %869 = vadd.xlane.f32.xlu0 %v868
        %v870 = vpop.xlane.xlu0 %869
        %871 = vrot.lane.b32.xlu0 %v379, 96
        %v872 = vpop.permute.xlu0 %871
        %873 = vrot.lane.b32.xlu0 %v380, 96
        %v874 = vpop.permute.xlu0 %873
        %v878 = vsel %vm358, %v866, 0
        %880 = vmatprep.subr.bf16.mxu0 0
        %881 = vmatpush1.bf16.msra.mxu0 0
        %882 = vmatprep.subr.bf16.mxu0 0
        %883 = vmatpush1.bf16.msra.mxu0 0
        %884 = vmatprep.subr.bf16.mxu0 0
        %885 = vmatpush1.bf16.msra.mxu0 0
        %886 = vmatprep.subr.bf16.mxu0 0
        %887 = vmatpush1.bf16.msra.mxu0 0
        %888 = vmatprep.subr.bf16.mxu0 0
        %889 = vmatpush1.bf16.msra.mxu0 0
        %890 = vmatprep.subr.bf16.mxu0 0
        %891 = vmatpush1.bf16.msra.mxu0 0
        %892 = vmatprep.subr.bf16.mxu0 0
        %893 = vmatpush1.bf16.msra.mxu0 %v874
        %894 = vmatprep.subr.bf16.mxu0 0
        %895 = vmatpush1.bf16.msra.mxu0 %v872
        %896 = vmatprep.subr.bf16.mxu0 0
        %897 = vmatpush2.bf16.msra.mxu0 0
        %898 = vmatprep.subr.bf16.mxu0 0
        %899 = vmatpush2.bf16.msra.mxu0 0
        %900 = vmatprep.subr.bf16.mxu0 0
        %901 = vmatpush2.bf16.msra.mxu0 0
        %902 = vmatprep.subr.bf16.mxu0 0
        %903 = vmatpush2.bf16.msra.mxu0 0
        %904 = vmatprep.subr.bf16.mxu0 0
        %905 = vmatpush2.bf16.msra.mxu0 0
        %906 = vmatprep.subr.bf16.mxu0 0
        %907 = vmatpush2.bf16.msra.mxu0 0
        %908 = vmatprep.subr.bf16.mxu0 0
        %909 = vmatpush2.bf16.msra.mxu0 0
        %910 = vmatprep.subr.bf16.mxu0 0
        %911 = vmatpush2.bf16.msra.mxu0 0
        %912 = vmatprep.mubr.bf16.mxu0 0
        %913 = vmatmul.mubr.bf16.gmra.mxu0 %v878
        %v914 = vpop.f32.mrf.mxu0
        %v915 = vadd.f32 0.0, %v914
        %v916 = vpop.f32.mrf.mxu0
        %v917 = vpop.f32.mrf.mxu0
        %v918 = vpop.f32.mrf.mxu0
        %919 = vdwg.mxu0
        %v920 = vrcp.pop %v870
        %v921 = vmul.f32 %v915, %v920
        %923 = vrot.lane.b32.xlu0 %v921, 32
        %v924 = vpop.permute.xlu0 %923
        %vm926 = vcmask 326912
        %927 = vst.msk [vmem:[#allocation2] sm:$0xff] %vm926, %v924
        %928 = vrot.lane.b32.xlu0 %v431, 88
        %v929 = vpop.permute.xlu0 %928
        %930 = vrot.lane.b32.xlu0 %v306, 88
        %v931 = vpop.permute.xlu0 %930
        %932 = vrot.lane.b32.xlu0 %v307, 88
        %v933 = vpop.permute.xlu0 %932
        %v935 = vsel %vm308, %v929, 0
        %v938 = vsel %vm308, %v931, 0
        %v941 = vsel %vm308, %v933, 0
        %943 = vmatprep.subr.bf16.mxu0 0
        %944 = vmatpush1.bf16.xpose.msra.mxu0 0
        %945 = vmatprep.subr.bf16.mxu0 0
        %946 = vmatpush1.bf16.xpose.msra.mxu0 0
        %947 = vmatprep.subr.bf16.mxu0 0
        %948 = vmatpush1.bf16.xpose.msra.mxu0 0
        %949 = vmatprep.subr.bf16.mxu0 0
        %950 = vmatpush1.bf16.xpose.msra.mxu0 0
        %951 = vmatprep.subr.bf16.mxu0 0
        %952 = vmatpush1.bf16.xpose.msra.mxu0 0
        %953 = vmatprep.subr.bf16.mxu0 0
        %954 = vmatpush1.bf16.xpose.msra.mxu0 0
        %955 = vmatprep.subr.bf16.mxu0 0
        %956 = vmatpush1.bf16.xpose.msra.mxu0 %v941
        %957 = vmatprep.subr.bf16.mxu0 0
        %958 = vmatpush1.bf16.xpose.msra.mxu0 %v938
        %959 = vmatprep.subr.bf16.mxu0 0
        %960 = vmatpush2.bf16.xpose.msra.mxu0 0
        %961 = vmatprep.subr.bf16.mxu0 0
        %962 = vmatpush2.bf16.xpose.msra.mxu0 0
        %963 = vmatprep.subr.bf16.mxu0 0
        %964 = vmatpush2.bf16.xpose.msra.mxu0 0
        %965 = vmatprep.subr.bf16.mxu0 0
        %966 = vmatpush2.bf16.xpose.msra.mxu0 0
        %967 = vmatprep.subr.bf16.mxu0 0
        %968 = vmatpush2.bf16.xpose.msra.mxu0 0
        %969 = vmatprep.subr.bf16.mxu0 0
        %970 = vmatpush2.bf16.xpose.msra.mxu0 0
        %971 = vmatprep.subr.bf16.mxu0 0
        %972 = vmatpush2.bf16.xpose.msra.mxu0 0
        %973 = vmatprep.subr.bf16.mxu0 0
        %974 = vmatpush2.bf16.xpose.msra.mxu0 0
        %975 = vmatprep.mubr.bf16.mxu0 0
        %976 = vmatmul.mubr.bf16.gmra.mxu0 %v935
        %v977 = vpop.f32.mrf.mxu0
        %v978 = vadd.f32 0.0, %v977
        %v979 = vpop.f32.mrf.mxu0
        %v980 = vpop.f32.mrf.mxu0
        %v981 = vpop.f32.mrf.mxu0
        %982 = vdwg.mxu0
        %v983 = vsel %vm358, %v978, -inf
        %984 = vmax.xlane.f32.xlu0 %v983
        %v985 = vpop.xlane.xlu0 %984
        %v986 = vsub.f32 %v978, %v985
        %v987 = vpack.c.bf16 %v986, %v986
        %v989 = vmul.bf16 %v987, 1069105081
        %v990 = vpow.bf16.pop %v989
        %v991 = vunpack.c.l.bf16 %v990
        %v992 = vsel %vm358, %v991, 0.0
        %993 = vadd.xlane.f32.xlu0 %v992
        %v994 = vpop.xlane.xlu0 %993
        %995 = vrot.lane.b32.xlu0 %v379, 88
        %v996 = vpop.permute.xlu0 %995
        %997 = vrot.lane.b32.xlu0 %v380, 88
        %v998 = vpop.permute.xlu0 %997
        %v1002 = vsel %vm358, %v990, 0
        %1004 = vmatprep.subr.bf16.mxu0 0
        %1005 = vmatpush1.bf16.msra.mxu0 0
        %1006 = vmatprep.subr.bf16.mxu0 0
        %1007 = vmatpush1.bf16.msra.mxu0 0
        %1008 = vmatprep.subr.bf16.mxu0 0
        %1009 = vmatpush1.bf16.msra.mxu0 0
        %1010 = vmatprep.subr.bf16.mxu0 0
        %1011 = vmatpush1.bf16.msra.mxu0 0
        %1012 = vmatprep.subr.bf16.mxu0 0
        %1013 = vmatpush1.bf16.msra.mxu0 0
        %1014 = vmatprep.subr.bf16.mxu0 0
        %1015 = vmatpush1.bf16.msra.mxu0 0
        %1016 = vmatprep.subr.bf16.mxu0 0
        %1017 = vmatpush1.bf16.msra.mxu0 %v998
        %1018 = vmatprep.subr.bf16.mxu0 0
        %1019 = vmatpush1.bf16.msra.mxu0 %v996
        %1020 = vmatprep.subr.bf16.mxu0 0
        %1021 = vmatpush2.bf16.msra.mxu0 0
        %1022 = vmatprep.subr.bf16.mxu0 0
        %1023 = vmatpush2.bf16.msra.mxu0 0
        %1024 = vmatprep.subr.bf16.mxu0 0
        %1025 = vmatpush2.bf16.msra.mxu0 0
        %1026 = vmatprep.subr.bf16.mxu0 0
        %1027 = vmatpush2.bf16.msra.mxu0 0
        %1028 = vmatprep.subr.bf16.mxu0 0
        %1029 = vmatpush2.bf16.msra.mxu0 0
        %1030 = vmatprep.subr.bf16.mxu0 0
        %1031 = vmatpush2.bf16.msra.mxu0 0
        %1032 = vmatprep.subr.bf16.mxu0 0
        %1033 = vmatpush2.bf16.msra.mxu0 0
        %1034 = vmatprep.subr.bf16.mxu0 0
        %1035 = vmatpush2.bf16.msra.mxu0 0
        %1036 = vmatprep.mubr.bf16.mxu0 0
        %1037 = vmatmul.mubr.bf16.gmra.mxu0 %v1002
        %v1038 = vpop.f32.mrf.mxu0
        %v1039 = vadd.f32 0.0, %v1038
        %v1040 = vpop.f32.mrf.mxu0
        %v1041 = vpop.f32.mrf.mxu0
        %v1042 = vpop.f32.mrf.mxu0
        %1043 = vdwg.mxu0
        %v1044 = vrcp.pop %v994
        %v1045 = vmul.f32 %v1039, %v1044
        %1047 = vrot.lane.b32.xlu0 %v1045, 40
        %v1048 = vpop.permute.xlu0 %1047
        %vm1050 = vcmask 392512
        %1051 = vst.msk [vmem:[#allocation2] sm:$0xff] %vm1050, %v1048
        %1052 = vrot.lane.b32.xlu0 %v431, 80
        %v1053 = vpop.permute.xlu0 %1052
        %1054 = vrot.lane.b32.xlu0 %v306, 80
        %v1055 = vpop.permute.xlu0 %1054
        %1056 = vrot.lane.b32.xlu0 %v307, 80
        %v1057 = vpop.permute.xlu0 %1056
        %v1059 = vsel %vm308, %v1053, 0
        %v1062 = vsel %vm308, %v1055, 0
        %v1065 = vsel %vm308, %v1057, 0
        %1067 = vmatprep.subr.bf16.mxu0 0
        %1068 = vmatpush1.bf16.xpose.msra.mxu0 0
        %1069 = vmatprep.subr.bf16.mxu0 0
        %1070 = vmatpush1.bf16.xpose.msra.mxu0 0
        %1071 = vmatprep.subr.bf16.mxu0 0
        %1072 = vmatpush1.bf16.xpose.msra.mxu0 0
        %1073 = vmatprep.subr.bf16.mxu0 0
        %1074 = vmatpush1.bf16.xpose.msra.mxu0 0
        %1075 = vmatprep.subr.bf16.mxu0 0
        %1076 = vmatpush1.bf16.xpose.msra.mxu0 0
        %1077 = vmatprep.subr.bf16.mxu0 0
        %1078 = vmatpush1.bf16.xpose.msra.mxu0 0
        %1079 = vmatprep.subr.bf16.mxu0 0
        %1080 = vmatpush1.bf16.xpose.msra.mxu0 %v1065
        %1081 = vmatprep.subr.bf16.mxu0 0
        %1082 = vmatpush1.bf16.xpose.msra.mxu0 %v1062
        %1083 = vmatprep.subr.bf16.mxu0 0
        %1084 = vmatpush2.bf16.xpose.msra.mxu0 0
        %1085 = vmatprep.subr.bf16.mxu0 0
        %1086 = vmatpush2.bf16.xpose.msra.mxu0 0
        %1087 = vmatprep.subr.bf16.mxu0 0
        %1088 = vmatpush2.bf16.xpose.msra.mxu0 0
        %1089 = vmatprep.subr.bf16.mxu0 0
        %1090 = vmatpush2.bf16.xpose.msra.mxu0 0
        %1091 = vmatprep.subr.bf16.mxu0 0
        %1092 = vmatpush2.bf16.xpose.msra.mxu0 0
        %1093 = vmatprep.subr.bf16.mxu0 0
        %1094 = vmatpush2.bf16.xpose.msra.mxu0 0
        %1095 = vmatprep.subr.bf16.mxu0 0
        %1096 = vmatpush2.bf16.xpose.msra.mxu0 0
        %1097 = vmatprep.subr.bf16.mxu0 0
        %1098 = vmatpush2.bf16.xpose.msra.mxu0 0
        %1099 = vmatprep.mubr.bf16.mxu0 0
        %1100 = vmatmul.mubr.bf16.gmra.mxu0 %v1059
        %v1101 = vpop.f32.mrf.mxu0
        %v1102 = vadd.f32 0.0, %v1101
        %v1103 = vpop.f32.mrf.mxu0
        %v1104 = vpop.f32.mrf.mxu0
        %v1105 = vpop.f32.mrf.mxu0
        %1106 = vdwg.mxu0
        %v1107 = vsel %vm358, %v1102, -inf
        %1108 = vmax.xlane.f32.xlu0 %v1107
        %v1109 = vpop.xlane.xlu0 %1108
        %v1110 = vsub.f32 %v1102, %v1109
        %v1111 = vpack.c.bf16 %v1110, %v1110
        %v1113 = vmul.bf16 %v1111, 1069105081
        %v1114 = vpow.bf16.pop %v1113
        %v1115 = vunpack.c.l.bf16 %v1114
        %v1116 = vsel %vm358, %v1115, 0.0
        %1117 = vadd.xlane.f32.xlu0 %v1116
        %v1118 = vpop.xlane.xlu0 %1117
        %1119 = vrot.lane.b32.xlu0 %v379, 80
        %v1120 = vpop.permute.xlu0 %1119
        %1121 = vrot.lane.b32.xlu0 %v380, 80
        %v1122 = vpop.permute.xlu0 %1121
        %v1126 = vsel %vm358, %v1114, 0
        %1128 = vmatprep.subr.bf16.mxu0 0
        %1129 = vmatpush1.bf16.msra.mxu0 0
        %1130 = vmatprep.subr.bf16.mxu0 0
        %1131 = vmatpush1.bf16.msra.mxu0 0
        %1132 = vmatprep.subr.bf16.mxu0 0
        %1133 = vmatpush1.bf16.msra.mxu0 0
        %1134 = vmatprep.subr.bf16.mxu0 0
        %1135 = vmatpush1.bf16.msra.mxu0 0
        %1136 = vmatprep.subr.bf16.mxu0 0
        %1137 = vmatpush1.bf16.msra.mxu0 0
        %1138 = vmatprep.subr.bf16.mxu0 0
        %1139 = vmatpush1.bf16.msra.mxu0 0
        %1140 = vmatprep.subr.bf16.mxu0 0
        %1141 = vmatpush1.bf16.msra.mxu0 %v1122
        %1142 = vmatprep.subr.bf16.mxu0 0
        %1143 = vmatpush1.bf16.msra.mxu0 %v1120
        %1144 = vmatprep.subr.bf16.mxu0 0
        %1145 = vmatpush2.bf16.msra.mxu0 0
        %1146 = vmatprep.subr.bf16.mxu0 0
        %1147 = vmatpush2.bf16.msra.mxu0 0
        %1148 = vmatprep.subr.bf16.mxu0 0
        %1149 = vmatpush2.bf16.msra.mxu0 0
        %1150 = vmatprep.subr.bf16.mxu0 0
        %1151 = vmatpush2.bf16.msra.mxu0 0
        %1152 = vmatprep.subr.bf16.mxu0 0
        %1153 = vmatpush2.bf16.msra.mxu0 0
        %1154 = vmatprep.subr.bf16.mxu0 0
        %1155 = vmatpush2.bf16.msra.mxu0 0
        %1156 = vmatprep.subr.bf16.mxu0 0
        %1157 = vmatpush2.bf16.msra.mxu0 0
        %1158 = vmatprep.subr.bf16.mxu0 0
        %1159 = vmatpush2.bf16.msra.mxu0 0
        %1160 = vmatprep.mubr.bf16.mxu0 0
        %1161 = vmatmul.mubr.bf16.gmra.mxu0 %v1126
        %v1162 = vpop.f32.mrf.mxu0
        %v1163 = vadd.f32 0.0, %v1162
        %v1164 = vpop.f32.mrf.mxu0
        %v1165 = vpop.f32.mrf.mxu0
        %v1166 = vpop.f32.mrf.mxu0
        %1167 = vdwg.mxu0
        %v1168 = vrcp.pop %v1118
        %v1169 = vmul.f32 %v1163, %v1168
        %1171 = vrot.lane.b32.xlu0 %v1169, 48
        %v1172 = vpop.permute.xlu0 %1171
        %vm1174 = vcmask 458112
        %1175 = vst.msk [vmem:[#allocation2] sm:$0xff] %vm1174, %v1172
        %1176 = vrot.lane.b32.xlu0 %v431, 72
        %v1177 = vpop.permute.xlu0 %1176
        %1178 = vrot.lane.b32.xlu0 %v306, 72
        %v1179 = vpop.permute.xlu0 %1178
        %1180 = vrot.lane.b32.xlu0 %v307, 72
        %v1181 = vpop.permute.xlu0 %1180
        %v1183 = vsel %vm308, %v1177, 0
        %v1186 = vsel %vm308, %v1179, 0
        %v1189 = vsel %vm308, %v1181, 0
        %1191 = vmatprep.subr.bf16.mxu0 0
        %1192 = vmatpush1.bf16.xpose.msra.mxu0 0
        %1193 = vmatprep.subr.bf16.mxu0 0
        %1194 = vmatpush1.bf16.xpose.msra.mxu0 0
        %1195 = vmatprep.subr.bf16.mxu0 0
        %1196 = vmatpush1.bf16.xpose.msra.mxu0 0
        %1197 = vmatprep.subr.bf16.mxu0 0
        %1198 = vmatpush1.bf16.xpose.msra.mxu0 0
        %1199 = vmatprep.subr.bf16.mxu0 0
        %1200 = vmatpush1.bf16.xpose.msra.mxu0 0
        %1201 = vmatprep.subr.bf16.mxu0 0
        %1202 = vmatpush1.bf16.xpose.msra.mxu0 0
        %1203 = vmatprep.subr.bf16.mxu0 0
        %1204 = vmatpush1.bf16.xpose.msra.mxu0 %v1189
        %1205 = vmatprep.subr.bf16.mxu0 0
        %1206 = vmatpush1.bf16.xpose.msra.mxu0 %v1186
        %1207 = vmatprep.subr.bf16.mxu0 0
        %1208 = vmatpush2.bf16.xpose.msra.mxu0 0
        %1209 = vmatprep.subr.bf16.mxu0 0
        %1210 = vmatpush2.bf16.xpose.msra.mxu0 0
        %1211 = vmatprep.subr.bf16.mxu0 0
        %1212 = vmatpush2.bf16.xpose.msra.mxu0 0
        %1213 = vmatprep.subr.bf16.mxu0 0
        %1214 = vmatpush2.bf16.xpose.msra.mxu0 0
        %1215 = vmatprep.subr.bf16.mxu0 0
        %1216 = vmatpush2.bf16.xpose.msra.mxu0 0
        %1217 = vmatprep.subr.bf16.mxu0 0
        %1218 = vmatpush2.bf16.xpose.msra.mxu0 0
        %1219 = vmatprep.subr.bf16.mxu0 0
        %1220 = vmatpush2.bf16.xpose.msra.mxu0 0
        %1221 = vmatprep.subr.bf16.mxu0 0
        %1222 = vmatpush2.bf16.xpose.msra.mxu0 0
        %1223 = vmatprep.mubr.bf16.mxu0 0
        %1224 = vmatmul.mubr.bf16.gmra.mxu0 %v1183
        %v1225 = vpop.f32.mrf.mxu0
        %v1226 = vadd.f32 0.0, %v1225
        %v1227 = vpop.f32.mrf.mxu0
        %v1228 = vpop.f32.mrf.mxu0
        %v1229 = vpop.f32.mrf.mxu0
        %1230 = vdwg.mxu0
        %v1231 = vsel %vm358, %v1226, -inf
        %1232 = vmax.xlane.f32.xlu0 %v1231
        %v1233 = vpop.xlane.xlu0 %1232
        %v1234 = vsub.f32 %v1226, %v1233
        %v1235 = vpack.c.bf16 %v1234, %v1234
        %v1237 = vmul.bf16 %v1235, 1069105081
        %v1238 = vpow.bf16.pop %v1237
        %v1239 = vunpack.c.l.bf16 %v1238
        %v1240 = vsel %vm358, %v1239, 0.0
        %1241 = vadd.xlane.f32.xlu0 %v1240
        %v1242 = vpop.xlane.xlu0 %1241
        %1243 = vrot.lane.b32.xlu0 %v379, 72
        %v1244 = vpop.permute.xlu0 %1243
        %1245 = vrot.lane.b32.xlu0 %v380, 72
        %v1246 = vpop.permute.xlu0 %1245
        %v1250 = vsel %vm358, %v1238, 0
        %1252 = vmatprep.subr.bf16.mxu0 0
        %1253 = vmatpush1.bf16.msra.mxu0 0
        %1254 = vmatprep.subr.bf16.mxu0 0
        %1255 = vmatpush1.bf16.msra.mxu0 0
        %1256 = vmatprep.subr.bf16.mxu0 0
        %1257 = vmatpush1.bf16.msra.mxu0 0
        %1258 = vmatprep.subr.bf16.mxu0 0
        %1259 = vmatpush1.bf16.msra.mxu0 0
        %1260 = vmatprep.subr.bf16.mxu0 0
        %1261 = vmatpush1.bf16.msra.mxu0 0
        %1262 = vmatprep.subr.bf16.mxu0 0
        %1263 = vmatpush1.bf16.msra.mxu0 0
        %1264 = vmatprep.subr.bf16.mxu0 0
        %1265 = vmatpush1.bf16.msra.mxu0 %v1246
        %1266 = vmatprep.subr.bf16.mxu0 0
        %1267 = vmatpush1.bf16.msra.mxu0 %v1244
        %1268 = vmatprep.subr.bf16.mxu0 0
        %1269 = vmatpush2.bf16.msra.mxu0 0
        %1270 = vmatprep.subr.bf16.mxu0 0
        %1271 = vmatpush2.bf16.msra.mxu0 0
        %1272 = vmatprep.subr.bf16.mxu0 0
        %1273 = vmatpush2.bf16.msra.mxu0 0
        %1274 = vmatprep.subr.bf16.mxu0 0
        %1275 = vmatpush2.bf16.msra.mxu0 0
        %1276 = vmatprep.subr.bf16.mxu0 0
        %1277 = vmatpush2.bf16.msra.mxu0 0
        %1278 = vmatprep.subr.bf16.mxu0 0
        %1279 = vmatpush2.bf16.msra.mxu0 0
        %1280 = vmatprep.subr.bf16.mxu0 0
        %1281 = vmatpush2.bf16.msra.mxu0 0
        %1282 = vmatprep.subr.bf16.mxu0 0
        %1283 = vmatpush2.bf16.msra.mxu0 0
        %1284 = vmatprep.mubr.bf16.mxu0 0
        %1285 = vmatmul.mubr.bf16.gmra.mxu0 %v1250
        %v1286 = vpop.f32.mrf.mxu0
        %v1287 = vadd.f32 0.0, %v1286
        %v1288 = vpop.f32.mrf.mxu0
        %v1289 = vpop.f32.mrf.mxu0
        %v1290 = vpop.f32.mrf.mxu0
        %1291 = vdwg.mxu0
        %v1292 = vrcp.pop %v1242
        %v1293 = vmul.f32 %v1287, %v1292
        %1295 = vrot.lane.b32.xlu0 %v1293, 56
        %v1296 = vpop.permute.xlu0 %1295
        %vm1298 = vcmask 523712
        %1299 = vst.msk [vmem:[#allocation2] sm:$0xff] %vm1298, %v1296
        %v1300 = vld [vmem:[#allocation2] sm:$0xff]
        %v1301 = vpack.c.bf16 %v1300, %v1300
        %v1302 = vld [vmem:[%s3] sm:$0xf]
        %v1303 = vld [vmem:[%s3 + $0x4] sm:$0xf]
        %v1304 = vld [vmem:[%s3 + $0x8] sm:$0xf]
        %v1305 = vld [vmem:[%s3 + $0xc] sm:$0xf]
        %v1306 = vld [vmem:[%s3 + $0x10] sm:$0xf]
        %v1307 = vld [vmem:[%s3 + $0x14] sm:$0xf]
        %v1308 = vld [vmem:[%s3 + $0x18] sm:$0xf]
        %v1309 = vld [vmem:[%s3 + $0x1c] sm:$0xf]
        %v1310 = vld [vmem:[%s4] sm:$0x1]
        %v1312 = vlaneseq
        %v1313 = vshrl.u32 %v1312, 7
        %v1314 = vsub.s32 0, %v1313
        %v1315 = vrot.slane %v1310, %v1314
        %v1325 = vunpack.c.l.b16 %v1302
        %v1326 = vunpack.c.l.b16 %v1303
        %v1327 = vunpack.c.l.b16 %v1304
        %v1328 = vunpack.c.l.b16 %v1305
        %v1329 = vunpack.c.l.b16 %v1306
        %v1330 = vunpack.c.l.b16 %v1307
        %v1331 = vunpack.c.l.b16 %v1308
        %v1332 = vunpack.c.l.b16 %v1309
        %v1333 = vpack.c.b16 %v1326, %v1325
        %v1334 = vpack.c.b16 %v1328, %v1327
        %v1335 = vpack.c.b16 %v1330, %v1329
        %v1336 = vpack.c.b16 %v1332, %v1331
        %vm1341 = vcmask 523264
        %v1343 = vsel %vm1341, %v1301, 0
        %1345 = vmatprep.subr.bf16.mxu0 0
        %1346 = vmatpush1.bf16.msra.mxu0 0
        %1347 = vmatprep.subr.bf16.mxu0 0
        %1348 = vmatpush1.bf16.msra.mxu0 0
        %1349 = vmatprep.subr.bf16.mxu0 0
        %1350 = vmatpush1.bf16.msra.mxu0 0
        %1351 = vmatprep.subr.bf16.mxu0 0
        %1352 = vmatpush1.bf16.msra.mxu0 0
        %1353 = vmatprep.subr.bf16.mxu0 0
        %1354 = vmatpush1.bf16.msra.mxu0 %v1336
        %1355 = vmatprep.subr.bf16.mxu0 0
        %1356 = vmatpush1.bf16.msra.mxu0 %v1335
        %1357 = vmatprep.subr.bf16.mxu0 0
        %1358 = vmatpush1.bf16.msra.mxu0 %v1334
        %1359 = vmatprep.subr.bf16.mxu0 0
        %1360 = vmatpush1.bf16.msra.mxu0 %v1333
        %1361 = vmatprep.subr.bf16.mxu0 0
        %1362 = vmatpush2.bf16.msra.mxu0 0
        %1363 = vmatprep.subr.bf16.mxu0 0
        %1364 = vmatpush2.bf16.msra.mxu0 0
        %1365 = vmatprep.subr.bf16.mxu0 0
        %1366 = vmatpush2.bf16.msra.mxu0 0
        %1367 = vmatprep.subr.bf16.mxu0 0
        %1368 = vmatpush2.bf16.msra.mxu0 0
        %1369 = vmatprep.subr.bf16.mxu0 0
        %1370 = vmatpush2.bf16.msra.mxu0 0
        %1371 = vmatprep.subr.bf16.mxu0 0
        %1372 = vmatpush2.bf16.msra.mxu0 0
        %1373 = vmatprep.subr.bf16.mxu0 0
        %1374 = vmatpush2.bf16.msra.mxu0 0
        %1375 = vmatprep.subr.bf16.mxu0 0
        %1376 = vmatpush2.bf16.msra.mxu0 0
        %1377 = vmatprep.mubr.bf16.mxu0 0
        %1378 = vmatmul.mubr.bf16.gmra.mxu0 %v1343
        %v1379 = vpop.f32.mrf.mxu0
        %v1380 = vadd.f32 %v1315, %v1379
        %v1381 = vpop.f32.mrf.mxu0
        %v1382 = vpop.f32.mrf.mxu0
        %v1383 = vpop.f32.mrf.mxu0
        %1384 = vdwg.mxu0
        %1385 = vst.msk [vmem:[%s269] sm:$0xff] %vm1341, %v1380
        %s1386 = sand.u32 %s163, 1
        %s1387 = scalar_lea.sflag [#allocation4], %s1386
        %s1388 = sand.u32 %s163, 1
        %s1389 = smul.addr %s1388, 8
        %s1390 = scalar_lea.vmem [#allocation3], %s1389
        // Predicated region
        $region41: #{attentive_block_forward.5} parent=39 // pred_check
          %p1391 = pneg %p173
        $region42: #{attentive_block_forward.5} parent=39 // pred_check_branch
          %1393 = sbr.rel (%p1391) target = $region44
        $region43: #{attentive_block_forward.5} parent=39 // pred_region
          %s1395 = ssub.s32 128, 128
          %1396 = vsyncadd %s1387, %s1395
          %s1397 = smul.addr %s23, 2
          %s1398 = sadd.s32 %s24, %s1397
          %s1399 = smul.addr %s1398, 128
          %s1400 = scalar_lea.hbm %s5, %s1399
          %s1402 = sshll.u32 %s1390, 4
          %s1403 = int_to_ptr.vmem [resolvable:$true] %s1402
          %1405 = dma.vmem_to_hbm [thread:$0]  %s1403, 128, %s1400, %s1387
        $region44: #{attentive_block_forward.5} parent=39 // pred_fallthru
          _
      $region40: #{attentive_block_forward.5} parent=5 // pred_fallthru
        _
      %p1406 = scmp.le.s32.totalorder 2, %s14
      // Predicated region
      $region45: #{attentive_block_forward.5} parent=5 // pred_check
        %p1407 = pneg %p1406
      $region46: #{attentive_block_forward.5} parent=5 // pred_check_branch
        %1409 = sbr.rel (%p1407) target = $region48
      $region47: #{attentive_block_forward.5} parent=5 // pred_region
        %s1410 = ssub.s32 %s14, 2
        // Predicated region
        $region49: #{attentive_block_forward.5} parent=47 // pred_check
          %p1411 = pneg %p179
        $region50: #{attentive_block_forward.5} parent=47 // pred_check_branch
          %1413 = sbr.rel (%p1411) target = $region52
        $region51: #{attentive_block_forward.5} parent=47 // pred_region
          %s1414 = sand.u32 %s164, 1
          %s1415 = scalar_lea.sflag [#allocation4], %s1414
          %s1416 = sand.u32 %s164, 1
          %s1417 = smul.addr %s1416, 8
          %s1418 = scalar_lea.vmem [#allocation3], %s1417
          %1419 = dma.done %s1415, 128
        $region52: #{attentive_block_forward.5} parent=47 // pred_fallthru
          _
      $region48: #{attentive_block_forward.5} parent=5 // pred_fallthru
        _
    $region6: #{attentive_block_forward.5} parent=1 // loop_footer
      %s18 = sadd.s32 1, %s14
    $region7: #{attentive_block_forward.5} parent=1 // loop_footer_branch
      %13 = sbr.rel target = $region3
    $region8: #{attentive_block_forward.5} parent=1 // loop_exit
      _
    %1420 = vsyncpa [#allocation4], 1
    %s1421 = scalar_lea.sflag [#allocation4], 1
    %1422 = vsyncpa %s1421, 1

</llo_original>
